<compile_context>
chip_gen: v6e
topology: v6e:2x2x1
jax: 0.10.0
libtpu: 0.0.40
codegen_flags: <defaults>
</compile_context>

<pallas_src>
import functools

import jax
import jax.numpy as jnp
from jax.experimental import pallas as pl
from jax.experimental.pallas import tpu as pltpu


def _round_up(x, m):
    return (x + m - 1) // m * m


# ----------------------------------------------------------------------------
# Pallas kernel: one ResidualAttentionBlock for a block of Nb batch elements.
# ----------------------------------------------------------------------------
def _resblock_kernel(x_ref,
                     ln1w_ref, ln1b_ref,
                     wqkv_ref, bqkv_ref,
                     wo_ref, bo_ref,
                     ln2w_ref, ln2b_ref,
                     w1_ref, b1_ref,
                     w2_ref, b2_ref,
                     out_ref,
                     attn_sc,
                     *, num_heads, valid_len, causal):
    nb, lp, d = x_ref.shape
    dh = d // num_heads
    cdt = wqkv_ref.dtype                       # matmul compute dtype (f32/bf16)

    # Pack (batch, seq) into the GEMM M dimension for all big matmuls.
    x = x_ref[...].reshape(nb * lp, d)

    def layer_norm(v, wr, br):                 # LayerNorm subclass: f32 math
        v32 = v.astype(jnp.float32)
        mu = jnp.mean(v32, axis=-1, keepdims=True)
        var = jnp.mean((v32 - mu) ** 2, axis=-1, keepdims=True)
        n = (v32 - mu) * jax.lax.rsqrt(var + 1e-5)
        return n * wr[...].astype(jnp.float32) + br[...].astype(jnp.float32)

    def mm(a, wr, br):                         # GEMM in cdt, f32 accumulation
        return (jnp.dot(a.astype(cdt), wr[...],
                        preferred_element_type=jnp.float32)
                + br[...].astype(jnp.float32))

    # ---- attention branch ---------------------------------------------------
    ln1 = layer_norm(x, ln1w_ref, ln1b_ref)
    qkv = mm(ln1, wqkv_ref, bqkv_ref)          # (M, 3D); q-scale pre-folded

    mask = None
    if causal or (valid_len < lp):
        qi = jax.lax.broadcasted_iota(jnp.int32, (lp, lp), 0)
        ki = jax.lax.broadcasted_iota(jnp.int32, (lp, lp), 1)
        m = ki < valid_len                     # mask padded key columns
        if causal:
            m = jnp.logical_and(m, ki <= qi)   # build_attention_mask
        mask = jnp.broadcast_to(m[None], (nb, lp, lp))

    for h in range(num_heads):                 # each head's result -> scratch
        qh = qkv[:, h * dh:(h + 1) * dh].astype(cdt).reshape(nb, lp, dh)
        kh = qkv[:, d + h * dh:d + (h + 1) * dh].astype(cdt).reshape(nb, lp, dh)
        vh = qkv[:, 2 * d + h * dh:2 * d + (h + 1) * dh].astype(cdt).reshape(nb, lp, dh)
        s = jnp.einsum('bqd,bkd->bqk', qh, kh,
                       preferred_element_type=jnp.float32)        # (nb, lp, lp)
        if mask is not None:
            s = jnp.where(mask, s, -1e30)
        s = s - jnp.max(s, axis=-1, keepdims=True)
        e = jnp.exp(s)
        p = e * pl.reciprocal(jnp.sum(e, axis=-1, keepdims=True), approx=True)
        oh = jnp.einsum('bqk,bkd->bqd', p.astype(cdt), vh,
                        preferred_element_type=jnp.float32)       # (nb, lp, dh)
        attn_sc[:, h * dh:(h + 1) * dh] = oh.reshape(nb * lp, dh)

    attn = mm(attn_sc[...], wo_ref, bo_ref)
    x = x + attn.astype(x.dtype)

    # ---- MLP branch (c_fc -> QuickGELU -> c_proj) ---------------------------
    ln2 = layer_norm(x, ln2w_ref, ln2b_ref)
    h1 = mm(ln2, w1_ref, b1_ref)                                  # (M, 4D)
    h1 = h1 * pl.reciprocal(1.0 + jnp.exp(-1.702 * h1), approx=True)  # QuickGELU
    h2 = mm(h1, w2_ref, b2_ref)
    x = x + h2.astype(x.dtype)

    out_ref[...] = x.reshape(nb, lp, d).astype(out_ref.dtype)


# ----------------------------------------------------------------------------
# One-time parameter preparation (hoisted out of the forward / layer loop).
# ----------------------------------------------------------------------------
def prepare_params(params, num_heads, param_dtype=None):
    """Transpose Linear weights (out,in)->(in,out), lift 1-D params to 2-D,
    fold 1/sqrt(dh) into the q slice of in_proj, optionally cast the big
    weight matrices to param_dtype (e.g. jnp.bfloat16 for MXU-native GEMMs)."""
    prepared = []
    for p in params:
        d = p["wqkv"].shape[1]
        assert d % num_heads == 0
        scale = (d // num_heads) ** -0.5
        cast = ((lambda a: a.astype(param_dtype)) if param_dtype is not None
                else (lambda a: a))
        r2 = lambda a: a.reshape(1, -1)
        wqkv_t = p["wqkv"].T                         # (D, 3D)
        wqkv_t = wqkv_t.at[:, :d].multiply(scale)    # fold q scale into weights
        bqkv = p["bqkv"].at[:d].multiply(scale)
        prepared.append(dict(
            ln1_w=r2(p["ln1_w"]), ln1_b=r2(p["ln1_b"]),
            wqkv_t=cast(wqkv_t), bqkv=r2(bqkv),
            wo_t=cast(p["wo"].T), bo=r2(p["bo"]),
            ln2_w=r2(p["ln2_w"]), ln2_b=r2(p["ln2_b"]),
            w1_t=cast(p["w1"].T), b1=r2(p["b1"]),
            w2_t=cast(p["w2"].T), b2=r2(p["b2"]),
        ))
    return prepared


def _resblock(xb, pp, num_heads, nb, valid_len, causal, vmem_limit):
    npad, lp, d = xb.shape
    args = (pp["ln1_w"], pp["ln1_b"], pp["wqkv_t"], pp["bqkv"], pp["wo_t"],
            pp["bo"], pp["ln2_w"], pp["ln2_b"], pp["w1_t"], pp["b1"],
            pp["w2_t"], pp["b2"])
    full = lambda a: pl.BlockSpec(a.shape, lambda *_: (0,) * a.ndim)
    return pl.pallas_call(
        functools.partial(_resblock_kernel, num_heads=num_heads,
                          valid_len=valid_len, causal=causal),
        out_shape=jax.ShapeDtypeStruct((npad, lp, d), xb.dtype),
        grid=(npad // nb,),
        in_specs=[pl.BlockSpec((nb, lp, d), lambda b: (b, 0, 0))]
                 + [full(a) for a in args],
        out_specs=pl.BlockSpec((nb, lp, d), lambda b: (b, 0, 0)),
        scratch_shapes=[pltpu.VMEM((nb * lp, d), jnp.float32)],
        compiler_params=pltpu.CompilerParams(
            dimension_semantics=("parallel",),   # batch-block axis, megacore-split
            vmem_limit_bytes=vmem_limit),
    )(xb, *args)


def transformer_forward(x, prepared_params, num_heads, *,
                        batch_block=None, causal=False):
    """x: (L, N, D).  prepared_params: output of prepare_params() (called once).
    Default Transformer forward (acquirer=False); causal=True applies
    ResidualAttentionBlock.build_attention_mask (CLIP text tower)."""
    # TODO(synk): Acquirer / mlp_zi branches (acquirer=True) are not implemented.
    # TODO(synk): cross-layer weight-DMA overlap (layer grid axis with manual
    # double-buffering or cross-call semaphore prefetch) not implemented; each
    # layer is its own pallas_call.
    l, n, d = x.shape
    xb = jnp.transpose(x, (1, 0, 2))                 # (N, L, D)

    lp = _round_up(l, 8)                             # sublane-friendly seq length
    if batch_block is None:
        # Pack enough rows into the GEMM M dim (~256) but keep >=2 grid steps
        # so the megacore 'parallel' axis has work for both v7x TensorCores.
        nb = max(1, min(pl.cdiv(256, lp), pl.cdiv(n, 2)))
    else:
        nb = batch_block
    npad = _round_up(n, nb)
    if (npad, lp) != (n, l):
        xb = jnp.pad(xb, ((0, npad - n), (0, lp - l), (0, 0)))

    # Explicit VMEM budget: resident weights + activations + double-buffered IO.
    pp0 = prepared_params[0]
    w_bytes = sum(int(a.size) * a.dtype.itemsize for a in pp0.values())
    m_rows = nb * lp
    act_bytes = 4 * m_rows * (9 * d) + 4 * 3 * nb * lp * lp
    io_bytes = 4 * nb * lp * d * xb.dtype.itemsize
    vmem_limit = int(min(max(1.5 * (w_bytes + act_bytes + io_bytes) + (2 << 20),
                             32 << 20), 100 << 20))

    for pp in prepared_params:
        xb = _resblock(xb, pp, num_heads, nb, valid_len=l, causal=causal,
                       vmem_limit=vmem_limit)
    return jnp.transpose(xb[:n, :l], (1, 0, 2))      # (L, N, D)


# ----------------------------------------------------------------------------
# Pure-JAX reference (mirrors the PyTorch module) for correctness checks.
# ----------------------------------------------------------------------------
def _ref_forward(x, params, heads, causal=False):
    l, n, d = x.shape
    dh = d // heads

    def ln(v, w, b):
        mu = v.mean(-1, keepdims=True)
        var = ((v - mu) ** 2).mean(-1, keepdims=True)
        return (v - mu) / jnp.sqrt(var + 1e-5) * w + b

    cm = jnp.tril(jnp.ones((l, l), bool))
    for p in params:
        h = ln(x, p["ln1_w"], p["ln1_b"])
        qkv = h @ p["wqkv"].T + p["bqkv"]
        q, k, v = jnp.split(qkv, 3, axis=-1)
        q = q * (dh ** -0.5)
        to_heads = lambda t: jnp.transpose(t.reshape(l, n, heads, dh), (1, 2, 0, 3))
        qh, kh, vh = to_heads(q), to_heads(k), to_heads(v)
        s = jnp.einsum("nhqd,nhkd->nhqk", qh, kh)
        if causal:
            s = jnp.where(cm, s, -jnp.inf)
        pa = jax.nn.softmax(s, axis=-1)
        o = jnp.einsum("nhqk,nhkd->nhqd", pa, vh)
        o = jnp.transpose(o, (2, 0, 1, 3)).reshape(l, n, d)
        x = x + (o @ p["wo"].T + p["bo"])
        h2 = ln(x, p["ln2_w"], p["ln2_b"])
        mlp = h2 @ p["w1"].T + p["b1"]
        mlp = mlp * jax.nn.sigmoid(1.702 * mlp)
        x = x + (mlp @ p["w2"].T + p["b2"])
    return x


def _init_params(key, layers, width):
    params = []
    for _ in range(layers):
        keys = jax.random.split(key, 9)
        key = keys[0]
        nrm = lambda k, shape: (jax.random.normal(k, shape, jnp.float32) * 0.02)
        params.append({
            "ln1_w": jnp.ones((width,), jnp.float32),
            "ln1_b": jnp.zeros((width,), jnp.float32),
            "wqkv": nrm(keys[1], (3 * width, width)),
            "bqkv": nrm(keys[2], (3 * width,)),
            "wo": nrm(keys[3], (width, width)),
            "bo": nrm(keys[4], (width,)),
            "ln2_w": jnp.ones((width,), jnp.float32),
            "ln2_b": jnp.zeros((width,), jnp.float32),
            "w1": nrm(keys[5], (4 * width, width)),
            "b1": nrm(keys[6], (4 * width,)),
            "w2": nrm(keys[7], (width, 4 * width)),
            "b2": nrm(keys[8], (width,)),
        })
    return params


if __name__ == "__main__":
    # seq, batch, width, heads, layers (seq/batch deliberately not tile-aligned
    # to exercise the padding + key-mask path)
    L, N, D, H, LAYERS = 10, 3, 32, 4, 2

    key = jax.random.PRNGKey(0)
    kx, kp = jax.random.split(key)
    x = jax.random.normal(kx, (L, N, D), jnp.float32)      # (seq, batch, width)
    params = _init_params(kp, LAYERS, D)

    prep = prepare_params(params, H)                        # one-time transposes

    # default path (attn_mask=None), f32
    out = jax.block_until_ready(transformer_forward(x, prep, H))
    ref = _ref_forward(x, params, H)
    assert out.shape == (L, N, D)
    assert jnp.allclose(out, ref, atol=5e-3, rtol=5e-3), "mismatch vs reference"

    # causal mask path (build_attention_mask, CLIP text tower)
    out_c = jax.block_until_ready(transformer_forward(x, prep, H, causal=True))
    ref_c = _ref_forward(x, params, H, causal=True)
    assert jnp.allclose(out_c, ref_c, atol=5e-3, rtol=5e-3), "mismatch (causal)"

    # bf16 weights + activations (MXU-native) smoke/accuracy check
    prep_bf = prepare_params(params, H, param_dtype=jnp.bfloat16)
    out_bf = jax.block_until_ready(
        transformer_forward(x.astype(jnp.bfloat16), prep_bf, H))
    assert jnp.max(jnp.abs(out_bf.astype(jnp.float32) - ref)) < 0.25

    print("KERNEL_OK")
</pallas_src>

<mosaic_0001>
module attributes {stable_mosaic.version = 11 : i64} {
  func.func @_resblock_kernel(%arg0: i32, %arg1: memref<2x16x32xf32, #tpu.memory_space<vmem>>, %arg2: memref<1x32xf32, #tpu.memory_space<vmem>>, %arg3: memref<1x32xf32, #tpu.memory_space<vmem>>, %arg4: memref<32x96xf32, #tpu.memory_space<vmem>>, %arg5: memref<1x96xf32, #tpu.memory_space<vmem>>, %arg6: memref<32x32xf32, #tpu.memory_space<vmem>>, %arg7: memref<1x32xf32, #tpu.memory_space<vmem>>, %arg8: memref<1x32xf32, #tpu.memory_space<vmem>>, %arg9: memref<1x32xf32, #tpu.memory_space<vmem>>, %arg10: memref<32x128xf32, #tpu.memory_space<vmem>>, %arg11: memref<1x128xf32, #tpu.memory_space<vmem>>, %arg12: memref<128x32xf32, #tpu.memory_space<vmem>>, %arg13: memref<1x32xf32, #tpu.memory_space<vmem>>, %arg14: memref<2x16x32xf32, #tpu.memory_space<vmem>>, %arg15: memref<32x32xf32, #tpu.memory_space<vmem>>) attributes {dimension_semantics = [#tpu.dimension_semantics<parallel>], iteration_bounds = array<i64: 2>, scalar_prefetch = 0 : i64, scratch_operands = 1 : i64, tpu.core_type = #tpu.core_type<tc>, window_params = [{transform_indices = @transform_0, window_bounds = array<i64: 2, 16, 32>}, {pipeline_mode = #tpu.pipeline_mode<synchronous>, transform_indices = @transform_1, window_bounds = array<i64: 1, 32>}, {pipeline_mode = #tpu.pipeline_mode<synchronous>, transform_indices = @transform_2, window_bounds = array<i64: 1, 32>}, {pipeline_mode = #tpu.pipeline_mode<synchronous>, transform_indices = @transform_3, window_bounds = array<i64: 32, 96>}, {pipeline_mode = #tpu.pipeline_mode<synchronous>, transform_indices = @transform_4, window_bounds = array<i64: 1, 96>}, {pipeline_mode = #tpu.pipeline_mode<synchronous>, transform_indices = @transform_5, window_bounds = array<i64: 32, 32>}, {pipeline_mode = #tpu.pipeline_mode<synchronous>, transform_indices = @transform_6, window_bounds = array<i64: 1, 32>}, {pipeline_mode = #tpu.pipeline_mode<synchronous>, transform_indices = @transform_7, window_bounds = array<i64: 1, 32>}, {pipeline_mode = #tpu.pipeline_mode<synchronous>, transform_indices = @transform_8, window_bounds = array<i64: 1, 32>}, {pipeline_mode = #tpu.pipeline_mode<synchronous>, transform_indices = @transform_9, window_bounds = array<i64: 32, 128>}, {pipeline_mode = #tpu.pipeline_mode<synchronous>, transform_indices = @transform_10, window_bounds = array<i64: 1, 128>}, {pipeline_mode = #tpu.pipeline_mode<synchronous>, transform_indices = @transform_11, window_bounds = array<i64: 128, 32>}, {pipeline_mode = #tpu.pipeline_mode<synchronous>, transform_indices = @transform_12, window_bounds = array<i64: 1, 32>}, {transform_indices = @transform_13, window_bounds = array<i64: 2, 16, 32>}]} {
    %c0 = arith.constant 0 : index
    %c0_0 = arith.constant 0 : index
    %c0_1 = arith.constant 0 : index
    %0 = vector.load %arg1[%c0, %c0_0, %c0_1] : memref<2x16x32xf32, #tpu.memory_space<vmem>>, vector<2x16x32xf32>
    %1 = vector.shape_cast %0 : vector<2x16x32xf32> to vector<32x32xf32>
    %cst = arith.constant dense<0.000000e+00> : vector<32xf32>
    %2 = vector.multi_reduction <add>, %1, %cst [1] : vector<32x32xf32> to vector<32xf32>
    %3 = vector.shape_cast %2 : vector<32xf32> to vector<32x1xf32>
    %cst_2 = arith.constant 3.200000e+01 : f32
    %4 = vector.broadcast %cst_2 : f32 to vector<32x1xf32>
    %5 = arith.divf %3, %4 : vector<32x1xf32>
    %6 = vector.broadcast %5 : vector<32x1xf32> to vector<32x32xf32>
    %7 = arith.subf %1, %6 : vector<32x32xf32>
    %8 = arith.mulf %7, %7 : vector<32x32xf32>
    %cst_3 = arith.constant dense<0.000000e+00> : vector<32xf32>
    %9 = vector.multi_reduction <add>, %8, %cst_3 [1] : vector<32x32xf32> to vector<32xf32>
    %10 = vector.shape_cast %9 : vector<32xf32> to vector<32x1xf32>
    %cst_4 = arith.constant 3.200000e+01 : f32
    %11 = vector.broadcast %cst_4 : f32 to vector<32x1xf32>
    %12 = arith.divf %10, %11 : vector<32x1xf32>
    %13 = vector.broadcast %5 : vector<32x1xf32> to vector<32x32xf32>
    %14 = arith.subf %1, %13 : vector<32x32xf32>
    %cst_5 = arith.constant 9.99999974E-6 : f32
    %15 = vector.broadcast %cst_5 : f32 to vector<32x1xf32>
    %16 = arith.addf %12, %15 : vector<32x1xf32>
    %17 = math.rsqrt %16 : vector<32x1xf32>
    %18 = vector.broadcast %17 : vector<32x1xf32> to vector<32x32xf32>
    %19 = arith.mulf %14, %18 : vector<32x32xf32>
    %c0_6 = arith.constant 0 : index
    %c0_7 = arith.constant 0 : index
    %20 = vector.load %arg2[%c0_6, %c0_7] : memref<1x32xf32, #tpu.memory_space<vmem>>, vector<1x32xf32>
    %21 = vector.broadcast %20 : vector<1x32xf32> to vector<32x32xf32>
    %22 = arith.mulf %19, %21 : vector<32x32xf32>
    %c0_8 = arith.constant 0 : index
    %c0_9 = arith.constant 0 : index
    %23 = vector.load %arg3[%c0_8, %c0_9] : memref<1x32xf32, #tpu.memory_space<vmem>>, vector<1x32xf32>
    %24 = vector.broadcast %23 : vector<1x32xf32> to vector<32x32xf32>
    %25 = arith.addf %22, %24 : vector<32x32xf32>
    %c0_10 = arith.constant 0 : index
    %c0_11 = arith.constant 0 : index
    %26 = vector.load %arg4[%c0_10, %c0_11] : memref<32x96xf32, #tpu.memory_space<vmem>>, vector<32x96xf32>
    %cst_12 = arith.constant dense<0.000000e+00> : vector<32x96xf32>
    %27 = tpu.matmul %25, %26, %cst_12 {dimension_numbers = #tpu.dot_dimension_numbers<[1], [0], [0], [1], [0, 0, 1, 1], [], []>} : vector<32x32xf32>, vector<32x96xf32>, vector<32x96xf32> -> vector<32x96xf32>
    %c0_13 = arith.constant 0 : index
    %c0_14 = arith.constant 0 : index
    %28 = vector.load %arg5[%c0_13, %c0_14] : memref<1x96xf32, #tpu.memory_space<vmem>>, vector<1x96xf32>
    %29 = vector.broadcast %28 : vector<1x96xf32> to vector<32x96xf32>
    %30 = arith.addf %27, %29 : vector<32x96xf32>
    %31 = tpu.iota {dimensions = array<i32: 1>} : vector<16x16xi32>
    %c10_i32 = arith.constant 10 : i32
    %32 = vector.broadcast %c10_i32 : i32 to vector<16x16xi32>
    %33 = arith.cmpi slt, %31, %32 : vector<16x16xi32>
    %34 = vector.shape_cast %33 : vector<16x16xi1> to vector<1x16x16xi1>
    %35 = vector.shape_cast %34 : vector<1x16x16xi1> to vector<1x16x16xi1>
    %36 = vector.broadcast %35 : vector<1x16x16xi1> to vector<2x16x16xi1>
    %37 = vector.extract_strided_slice %30 {offsets = [0, 0], sizes = [32, 8], strides = [1, 1]} : vector<32x96xf32> to vector<32x8xf32>
    %38 = vector.shape_cast %37 : vector<32x8xf32> to vector<2x16x8xf32>
    %39 = vector.extract_strided_slice %30 {offsets = [0, 32], sizes = [32, 8], strides = [1, 1]} : vector<32x96xf32> to vector<32x8xf32>
    %40 = vector.shape_cast %39 : vector<32x8xf32> to vector<2x16x8xf32>
    %41 = vector.extract_strided_slice %30 {offsets = [0, 64], sizes = [32, 8], strides = [1, 1]} : vector<32x96xf32> to vector<32x8xf32>
    %42 = vector.shape_cast %41 : vector<32x8xf32> to vector<2x16x8xf32>
    "tpu.trace_start"() <{level = 10 : i32, message = "bqd,bkd->bqk"}> : () -> ()
    %cst_15 = arith.constant dense<0.000000e+00> : vector<2x16x16xf32>
    %43 = tpu.matmul %38, %40, %cst_15 {dimension_numbers = #tpu.dot_dimension_numbers<[2], [2], [1], [1], [0, 0, 0, 1, 1, 1], [0], [0]>} : vector<2x16x8xf32>, vector<2x16x8xf32>, vector<2x16x16xf32> -> vector<2x16x16xf32>
    %cst_16 = arith.constant -1.000000e+30 : f32
    "tpu.trace_stop"() : () -> ()
    %44 = vector.broadcast %cst_16 : f32 to vector<2x16x16xf32>
    %45 = arith.select %36, %43, %44 : vector<2x16x16xi1>, vector<2x16x16xf32>
    %cst_17 = arith.constant dense<0xFF800000> : vector<2x16xf32>
    %46 = vector.multi_reduction <maximumf>, %45, %cst_17 [2] : vector<2x16x16xf32> to vector<2x16xf32>
    %47 = vector.shape_cast %46 : vector<2x16xf32> to vector<2x16x1xf32>
    %48 = vector.broadcast %47 : vector<2x16x1xf32> to vector<2x16x16xf32>
    %49 = arith.subf %45, %48 : vector<2x16x16xf32>
    %50 = math.exp %49 : vector<2x16x16xf32>
    %cst_18 = arith.constant dense<0.000000e+00> : vector<2x16xf32>
    %51 = vector.multi_reduction <add>, %50, %cst_18 [2] : vector<2x16x16xf32> to vector<2x16xf32>
    %52 = vector.shape_cast %51 : vector<2x16xf32> to vector<2x16x1xf32>
    %53 = tpu.reciprocal %52 {approx = true} : vector<2x16x1xf32> -> vector<2x16x1xf32>
    %54 = vector.broadcast %53 : vector<2x16x1xf32> to vector<2x16x16xf32>
    %55 = arith.mulf %50, %54 : vector<2x16x16xf32>
    "tpu.trace_start"() <{level = 10 : i32, message = "bqk,bkd->bqd"}> : () -> ()
    %cst_19 = arith.constant dense<0.000000e+00> : vector<2x16x8xf32>
    %56 = tpu.matmul %55, %42, %cst_19 {dimension_numbers = #tpu.dot_dimension_numbers<[2], [1], [1], [2], [0, 0, 0, 1, 1, 2], [0], [0]>} : vector<2x16x16xf32>, vector<2x16x8xf32>, vector<2x16x8xf32> -> vector<2x16x8xf32>
    "tpu.trace_stop"() : () -> ()
    %57 = vector.shape_cast %56 : vector<2x16x8xf32> to vector<32x8xf32>
    %c0_20 = arith.constant 0 : index
    %c0_21 = arith.constant 0 : index
    %58 = vector.load %arg15[%c0_20, %c0_21] : memref<32x32xf32, #tpu.memory_space<vmem>>, vector<32x8xf32>
    tpu.vector_store %arg15[%c0_20, %c0_21], %57 {strides = array<i32>} : memref<32x32xf32, #tpu.memory_space<vmem>>, vector<32x8xf32>,
    %59 = vector.extract_strided_slice %30 {offsets = [0, 8], sizes = [32, 8], strides = [1, 1]} : vector<32x96xf32> to vector<32x8xf32>
    %60 = vector.shape_cast %59 : vector<32x8xf32> to vector<2x16x8xf32>
    %61 = vector.extract_strided_slice %30 {offsets = [0, 40], sizes = [32, 8], strides = [1, 1]} : vector<32x96xf32> to vector<32x8xf32>
    %62 = vector.shape_cast %61 : vector<32x8xf32> to vector<2x16x8xf32>
    %63 = vector.extract_strided_slice %30 {offsets = [0, 72], sizes = [32, 8], strides = [1, 1]} : vector<32x96xf32> to vector<32x8xf32>
    %64 = vector.shape_cast %63 : vector<32x8xf32> to vector<2x16x8xf32>
    "tpu.trace_start"() <{level = 10 : i32, message = "bqd,bkd->bqk"}> : () -> ()
    %cst_22 = arith.constant dense<0.000000e+00> : vector<2x16x16xf32>
    %65 = tpu.matmul %60, %62, %cst_22 {dimension_numbers = #tpu.dot_dimension_numbers<[2], [2], [1], [1], [0, 0, 0, 1, 1, 1], [0], [0]>} : vector<2x16x8xf32>, vector<2x16x8xf32>, vector<2x16x16xf32> -> vector<2x16x16xf32>
    %cst_23 = arith.constant -1.000000e+30 : f32
    "tpu.trace_stop"() : () -> ()
    %66 = vector.broadcast %cst_23 : f32 to vector<2x16x16xf32>
    %67 = arith.select %36, %65, %66 : vector<2x16x16xi1>, vector<2x16x16xf32>
    %cst_24 = arith.constant dense<0xFF800000> : vector<2x16xf32>
    %68 = vector.multi_reduction <maximumf>, %67, %cst_24 [2] : vector<2x16x16xf32> to vector<2x16xf32>
    %69 = vector.shape_cast %68 : vector<2x16xf32> to vector<2x16x1xf32>
    %70 = vector.broadcast %69 : vector<2x16x1xf32> to vector<2x16x16xf32>
    %71 = arith.subf %67, %70 : vector<2x16x16xf32>
    %72 = math.exp %71 : vector<2x16x16xf32>
    %cst_25 = arith.constant dense<0.000000e+00> : vector<2x16xf32>
    %73 = vector.multi_reduction <add>, %72, %cst_25 [2] : vector<2x16x16xf32> to vector<2x16xf32>
    %74 = vector.shape_cast %73 : vector<2x16xf32> to vector<2x16x1xf32>
    %75 = tpu.reciprocal %74 {approx = true} : vector<2x16x1xf32> -> vector<2x16x1xf32>
    %76 = vector.broadcast %75 : vector<2x16x1xf32> to vector<2x16x16xf32>
    %77 = arith.mulf %72, %76 : vector<2x16x16xf32>
    "tpu.trace_start"() <{level = 10 : i32, message = "bqk,bkd->bqd"}> : () -> ()
    %cst_26 = arith.constant dense<0.000000e+00> : vector<2x16x8xf32>
    %78 = tpu.matmul %77, %64, %cst_26 {dimension_numbers = #tpu.dot_dimension_numbers<[2], [1], [1], [2], [0, 0, 0, 1, 1, 2], [0], [0]>} : vector<2x16x16xf32>, vector<2x16x8xf32>, vector<2x16x8xf32> -> vector<2x16x8xf32>
    "tpu.trace_stop"() : () -> ()
    %79 = vector.shape_cast %78 : vector<2x16x8xf32> to vector<32x8xf32>
    %c0_27 = arith.constant 0 : index
    %c8 = arith.constant 8 : index
    %80 = vector.load %arg15[%c0_27, %c8] : memref<32x32xf32, #tpu.memory_space<vmem>>, vector<32x8xf32>
    tpu.vector_store %arg15[%c0_27, %c8], %79 {strides = array<i32>} : memref<32x32xf32, #tpu.memory_space<vmem>>, vector<32x8xf32>,
    %81 = vector.extract_strided_slice %30 {offsets = [0, 16], sizes = [32, 8], strides = [1, 1]} : vector<32x96xf32> to vector<32x8xf32>
    %82 = vector.shape_cast %81 : vector<32x8xf32> to vector<2x16x8xf32>
    %83 = vector.extract_strided_slice %30 {offsets = [0, 48], sizes = [32, 8], strides = [1, 1]} : vector<32x96xf32> to vector<32x8xf32>
    %84 = vector.shape_cast %83 : vector<32x8xf32> to vector<2x16x8xf32>
    %85 = vector.extract_strided_slice %30 {offsets = [0, 80], sizes = [32, 8], strides = [1, 1]} : vector<32x96xf32> to vector<32x8xf32>
    %86 = vector.shape_cast %85 : vector<32x8xf32> to vector<2x16x8xf32>
    "tpu.trace_start"() <{level = 10 : i32, message = "bqd,bkd->bqk"}> : () -> ()
    %cst_28 = arith.constant dense<0.000000e+00> : vector<2x16x16xf32>
    %87 = tpu.matmul %82, %84, %cst_28 {dimension_numbers = #tpu.dot_dimension_numbers<[2], [2], [1], [1], [0, 0, 0, 1, 1, 1], [0], [0]>} : vector<2x16x8xf32>, vector<2x16x8xf32>, vector<2x16x16xf32> -> vector<2x16x16xf32>
    %cst_29 = arith.constant -1.000000e+30 : f32
    "tpu.trace_stop"() : () -> ()
    %88 = vector.broadcast %cst_29 : f32 to vector<2x16x16xf32>
    %89 = arith.select %36, %87, %88 : vector<2x16x16xi1>, vector<2x16x16xf32>
    %cst_30 = arith.constant dense<0xFF800000> : vector<2x16xf32>
    %90 = vector.multi_reduction <maximumf>, %89, %cst_30 [2] : vector<2x16x16xf32> to vector<2x16xf32>
    %91 = vector.shape_cast %90 : vector<2x16xf32> to vector<2x16x1xf32>
    %92 = vector.broadcast %91 : vector<2x16x1xf32> to vector<2x16x16xf32>
    %93 = arith.subf %89, %92 : vector<2x16x16xf32>
    %94 = math.exp %93 : vector<2x16x16xf32>
    %cst_31 = arith.constant dense<0.000000e+00> : vector<2x16xf32>
    %95 = vector.multi_reduction <add>, %94, %cst_31 [2] : vector<2x16x16xf32> to vector<2x16xf32>
    %96 = vector.shape_cast %95 : vector<2x16xf32> to vector<2x16x1xf32>
    %97 = tpu.reciprocal %96 {approx = true} : vector<2x16x1xf32> -> vector<2x16x1xf32>
    %98 = vector.broadcast %97 : vector<2x16x1xf32> to vector<2x16x16xf32>
    %99 = arith.mulf %94, %98 : vector<2x16x16xf32>
    "tpu.trace_start"() <{level = 10 : i32, message = "bqk,bkd->bqd"}> : () -> ()
    %cst_32 = arith.constant dense<0.000000e+00> : vector<2x16x8xf32>
    %100 = tpu.matmul %99, %86, %cst_32 {dimension_numbers = #tpu.dot_dimension_numbers<[2], [1], [1], [2], [0, 0, 0, 1, 1, 2], [0], [0]>} : vector<2x16x16xf32>, vector<2x16x8xf32>, vector<2x16x8xf32> -> vector<2x16x8xf32>
    "tpu.trace_stop"() : () -> ()
    %101 = vector.shape_cast %100 : vector<2x16x8xf32> to vector<32x8xf32>
    %c0_33 = arith.constant 0 : index
    %c16 = arith.constant 16 : index
    %102 = vector.load %arg15[%c0_33, %c16] : memref<32x32xf32, #tpu.memory_space<vmem>>, vector<32x8xf32>
    tpu.vector_store %arg15[%c0_33, %c16], %101 {strides = array<i32>} : memref<32x32xf32, #tpu.memory_space<vmem>>, vector<32x8xf32>,
    %103 = vector.extract_strided_slice %30 {offsets = [0, 24], sizes = [32, 8], strides = [1, 1]} : vector<32x96xf32> to vector<32x8xf32>
    %104 = vector.shape_cast %103 : vector<32x8xf32> to vector<2x16x8xf32>
    %105 = vector.extract_strided_slice %30 {offsets = [0, 56], sizes = [32, 8], strides = [1, 1]} : vector<32x96xf32> to vector<32x8xf32>
    %106 = vector.shape_cast %105 : vector<32x8xf32> to vector<2x16x8xf32>
    %107 = vector.extract_strided_slice %30 {offsets = [0, 88], sizes = [32, 8], strides = [1, 1]} : vector<32x96xf32> to vector<32x8xf32>
    %108 = vector.shape_cast %107 : vector<32x8xf32> to vector<2x16x8xf32>
    "tpu.trace_start"() <{level = 10 : i32, message = "bqd,bkd->bqk"}> : () -> ()
    %cst_34 = arith.constant dense<0.000000e+00> : vector<2x16x16xf32>
    %109 = tpu.matmul %104, %106, %cst_34 {dimension_numbers = #tpu.dot_dimension_numbers<[2], [2], [1], [1], [0, 0, 0, 1, 1, 1], [0], [0]>} : vector<2x16x8xf32>, vector<2x16x8xf32>, vector<2x16x16xf32> -> vector<2x16x16xf32>
    %cst_35 = arith.constant -1.000000e+30 : f32
    "tpu.trace_stop"() : () -> ()
    %110 = vector.broadcast %cst_35 : f32 to vector<2x16x16xf32>
    %111 = arith.select %36, %109, %110 : vector<2x16x16xi1>, vector<2x16x16xf32>
    %cst_36 = arith.constant dense<0xFF800000> : vector<2x16xf32>
    %112 = vector.multi_reduction <maximumf>, %111, %cst_36 [2] : vector<2x16x16xf32> to vector<2x16xf32>
    %113 = vector.shape_cast %112 : vector<2x16xf32> to vector<2x16x1xf32>
    %114 = vector.broadcast %113 : vector<2x16x1xf32> to vector<2x16x16xf32>
    %115 = arith.subf %111, %114 : vector<2x16x16xf32>
    %116 = math.exp %115 : vector<2x16x16xf32>
    %cst_37 = arith.constant dense<0.000000e+00> : vector<2x16xf32>
    %117 = vector.multi_reduction <add>, %116, %cst_37 [2] : vector<2x16x16xf32> to vector<2x16xf32>
    %118 = vector.shape_cast %117 : vector<2x16xf32> to vector<2x16x1xf32>
    %119 = tpu.reciprocal %118 {approx = true} : vector<2x16x1xf32> -> vector<2x16x1xf32>
    %120 = vector.broadcast %119 : vector<2x16x1xf32> to vector<2x16x16xf32>
    %121 = arith.mulf %116, %120 : vector<2x16x16xf32>
    "tpu.trace_start"() <{level = 10 : i32, message = "bqk,bkd->bqd"}> : () -> ()
    %cst_38 = arith.constant dense<0.000000e+00> : vector<2x16x8xf32>
    %122 = tpu.matmul %121, %108, %cst_38 {dimension_numbers = #tpu.dot_dimension_numbers<[2], [1], [1], [2], [0, 0, 0, 1, 1, 2], [0], [0]>} : vector<2x16x16xf32>, vector<2x16x8xf32>, vector<2x16x8xf32> -> vector<2x16x8xf32>
    "tpu.trace_stop"() : () -> ()
    %123 = vector.shape_cast %122 : vector<2x16x8xf32> to vector<32x8xf32>
    %c0_39 = arith.constant 0 : index
    %c24 = arith.constant 24 : index
    %124 = vector.load %arg15[%c0_39, %c24] : memref<32x32xf32, #tpu.memory_space<vmem>>, vector<32x8xf32>
    tpu.vector_store %arg15[%c0_39, %c24], %123 {strides = array<i32>} : memref<32x32xf32, #tpu.memory_space<vmem>>, vector<32x8xf32>,
    %c0_40 = arith.constant 0 : index
    %c0_41 = arith.constant 0 : index
    %125 = vector.load %arg15[%c0_40, %c0_41] : memref<32x32xf32, #tpu.memory_space<vmem>>, vector<32x32xf32>
    %c0_42 = arith.constant 0 : index
    %c0_43 = arith.constant 0 : index
    %126 = vector.load %arg6[%c0_42, %c0_43] : memref<32x32xf32, #tpu.memory_space<vmem>>, vector<32x32xf32>
    %cst_44 = arith.constant dense<0.000000e+00> : vector<32x32xf32>
    %127 = tpu.matmul %125, %126, %cst_44 {dimension_numbers = #tpu.dot_dimension_numbers<[1], [0], [0], [1], [0, 0, 1, 1], [], []>} : vector<32x32xf32>, vector<32x32xf32>, vector<32x32xf32> -> vector<32x32xf32>
    %c0_45 = arith.constant 0 : index
    %c0_46 = arith.constant 0 : index
    %128 = vector.load %arg7[%c0_45, %c0_46] : memref<1x32xf32, #tpu.memory_space<vmem>>, vector<1x32xf32>
    %129 = vector.broadcast %128 : vector<1x32xf32> to vector<32x32xf32>
    %130 = arith.addf %127, %129 : vector<32x32xf32>
    %131 = arith.addf %1, %130 : vector<32x32xf32>
    %cst_47 = arith.constant dense<0.000000e+00> : vector<32xf32>
    %132 = vector.multi_reduction <add>, %131, %cst_47 [1] : vector<32x32xf32> to vector<32xf32>
    %133 = vector.shape_cast %132 : vector<32xf32> to vector<32x1xf32>
    %cst_48 = arith.constant 3.200000e+01 : f32
    %134 = vector.broadcast %cst_48 : f32 to vector<32x1xf32>
    %135 = arith.divf %133, %134 : vector<32x1xf32>
    %136 = vector.broadcast %135 : vector<32x1xf32> to vector<32x32xf32>
    %137 = arith.subf %131, %136 : vector<32x32xf32>
    %138 = arith.mulf %137, %137 : vector<32x32xf32>
    %cst_49 = arith.constant dense<0.000000e+00> : vector<32xf32>
    %139 = vector.multi_reduction <add>, %138, %cst_49 [1] : vector<32x32xf32> to vector<32xf32>
    %140 = vector.shape_cast %139 : vector<32xf32> to vector<32x1xf32>
    %cst_50 = arith.constant 3.200000e+01 : f32
    %141 = vector.broadcast %cst_50 : f32 to vector<32x1xf32>
    %142 = arith.divf %140, %141 : vector<32x1xf32>
    %143 = vector.broadcast %135 : vector<32x1xf32> to vector<32x32xf32>
    %144 = arith.subf %131, %143 : vector<32x32xf32>
    %cst_51 = arith.constant 9.99999974E-6 : f32
    %145 = vector.broadcast %cst_51 : f32 to vector<32x1xf32>
    %146 = arith.addf %142, %145 : vector<32x1xf32>
    %147 = math.rsqrt %146 : vector<32x1xf32>
    %148 = vector.broadcast %147 : vector<32x1xf32> to vector<32x32xf32>
    %149 = arith.mulf %144, %148 : vector<32x32xf32>
    %c0_52 = arith.constant 0 : index
    %c0_53 = arith.constant 0 : index
    %150 = vector.load %arg8[%c0_52, %c0_53] : memref<1x32xf32, #tpu.memory_space<vmem>>, vector<1x32xf32>
    %151 = vector.broadcast %150 : vector<1x32xf32> to vector<32x32xf32>
    %152 = arith.mulf %149, %151 : vector<32x32xf32>
    %c0_54 = arith.constant 0 : index
    %c0_55 = arith.constant 0 : index
    %153 = vector.load %arg9[%c0_54, %c0_55] : memref<1x32xf32, #tpu.memory_space<vmem>>, vector<1x32xf32>
    %154 = vector.broadcast %153 : vector<1x32xf32> to vector<32x32xf32>
    %155 = arith.addf %152, %154 : vector<32x32xf32>
    %c0_56 = arith.constant 0 : index
    %c0_57 = arith.constant 0 : index
    %156 = vector.load %arg10[%c0_56, %c0_57] : memref<32x128xf32, #tpu.memory_space<vmem>>, vector<32x128xf32>
    %cst_58 = arith.constant dense<0.000000e+00> : vector<32x128xf32>
    %157 = tpu.matmul %155, %156, %cst_58 {dimension_numbers = #tpu.dot_dimension_numbers<[1], [0], [0], [1], [0, 0, 1, 1], [], []>} : vector<32x32xf32>, vector<32x128xf32>, vector<32x128xf32> -> vector<32x128xf32>
    %c0_59 = arith.constant 0 : index
    %c0_60 = arith.constant 0 : index
    %158 = vector.load %arg11[%c0_59, %c0_60] : memref<1x128xf32, #tpu.memory_space<vmem>>, vector<1x128xf32>
    %159 = vector.broadcast %158 : vector<1x128xf32> to vector<32x128xf32>
    %160 = arith.addf %157, %159 : vector<32x128xf32>
    %cst_61 = arith.constant -1.702000e+00 : f32
    %161 = vector.broadcast %cst_61 : f32 to vector<32x128xf32>
    %162 = arith.mulf %161, %160 : vector<32x128xf32>
    %163 = math.exp %162 : vector<32x128xf32>
    %cst_62 = arith.constant 1.000000e+00 : f32
    %164 = vector.broadcast %cst_62 : f32 to vector<32x128xf32>
    %165 = arith.addf %164, %163 : vector<32x128xf32>
    %166 = tpu.reciprocal %165 {approx = true} : vector<32x128xf32> -> vector<32x128xf32>
    %167 = arith.mulf %160, %166 : vector<32x128xf32>
    %c0_63 = arith.constant 0 : index
    %c0_64 = arith.constant 0 : index
    %168 = vector.load %arg12[%c0_63, %c0_64] : memref<128x32xf32, #tpu.memory_space<vmem>>, vector<128x32xf32>
    %cst_65 = arith.constant dense<0.000000e+00> : vector<32x32xf32>
    %169 = tpu.matmul %167, %168, %cst_65 {dimension_numbers = #tpu.dot_dimension_numbers<[1], [0], [0], [1], [0, 0, 1, 1], [], []>} : vector<32x128xf32>, vector<128x32xf32>, vector<32x32xf32> -> vector<32x32xf32>
    %c0_66 = arith.constant 0 : index
    %c0_67 = arith.constant 0 : index
    %170 = vector.load %arg13[%c0_66, %c0_67] : memref<1x32xf32, #tpu.memory_space<vmem>>, vector<1x32xf32>
    %171 = vector.broadcast %170 : vector<1x32xf32> to vector<32x32xf32>
    %172 = arith.addf %169, %171 : vector<32x32xf32>
    %173 = arith.addf %131, %172 : vector<32x32xf32>
    %174 = vector.shape_cast %173 : vector<32x32xf32> to vector<2x16x32xf32>
    %c0_68 = arith.constant 0 : index
    %c0_69 = arith.constant 0 : index
    %c0_70 = arith.constant 0 : index
    %175 = vector.load %arg14[%c0_68, %c0_69, %c0_70] : memref<2x16x32xf32, #tpu.memory_space<vmem>>, vector<2x16x32xf32>
    tpu.vector_store %arg14[%c0_68, %c0_69, %c0_70], %174 {strides = array<i32>} : memref<2x16x32xf32, #tpu.memory_space<vmem>>, vector<2x16x32xf32>,
    return
  }
  func.func @transform_0(%arg0: i32) -> (i32, i32, i32) {
    %c0_i32 = arith.constant 0 : i32
    %c0_i32_0 = arith.constant 0 : i32
    %c0_i32_1 = arith.constant 0 : i32
    return %arg0, %c0_i32, %c0_i32_0 : i32, i32, i32
  }
  func.func @transform_1(%arg0: i32) -> (i32, i32) {
    %c0_i32 = arith.constant 0 : i32
    %c0_i32_0 = arith.constant 0 : i32
    %c0_i32_1 = arith.constant 0 : i32
    return %c0_i32, %c0_i32_0 : i32, i32
  }
  func.func @transform_2(%arg0: i32) -> (i32, i32) {
    %c0_i32 = arith.constant 0 : i32
    %c0_i32_0 = arith.constant 0 : i32
    %c0_i32_1 = arith.constant 0 : i32
    return %c0_i32, %c0_i32_0 : i32, i32
  }
  func.func @transform_3(%arg0: i32) -> (i32, i32) {
    %c0_i32 = arith.constant 0 : i32
    %c0_i32_0 = arith.constant 0 : i32
    %c0_i32_1 = arith.constant 0 : i32
    return %c0_i32, %c0_i32_0 : i32, i32
  }
  func.func @transform_4(%arg0: i32) -> (i32, i32) {
    %c0_i32 = arith.constant 0 : i32
    %c0_i32_0 = arith.constant 0 : i32
    %c0_i32_1 = arith.constant 0 : i32
    return %c0_i32, %c0_i32_0 : i32, i32
  }
  func.func @transform_5(%arg0: i32) -> (i32, i32) {
    %c0_i32 = arith.constant 0 : i32
    %c0_i32_0 = arith.constant 0 : i32
    %c0_i32_1 = arith.constant 0 : i32
    return %c0_i32, %c0_i32_0 : i32, i32
  }
  func.func @transform_6(%arg0: i32) -> (i32, i32) {
    %c0_i32 = arith.constant 0 : i32
    %c0_i32_0 = arith.constant 0 : i32
    %c0_i32_1 = arith.constant 0 : i32
    return %c0_i32, %c0_i32_0 : i32, i32
  }
  func.func @transform_7(%arg0: i32) -> (i32, i32) {
    %c0_i32 = arith.constant 0 : i32
    %c0_i32_0 = arith.constant 0 : i32
    %c0_i32_1 = arith.constant 0 : i32
    return %c0_i32, %c0_i32_0 : i32, i32
  }
  func.func @transform_8(%arg0: i32) -> (i32, i32) {
    %c0_i32 = arith.constant 0 : i32
    %c0_i32_0 = arith.constant 0 : i32
    %c0_i32_1 = arith.constant 0 : i32
    return %c0_i32, %c0_i32_0 : i32, i32
  }
  func.func @transform_9(%arg0: i32) -> (i32, i32) {
    %c0_i32 = arith.constant 0 : i32
    %c0_i32_0 = arith.constant 0 : i32
    %c0_i32_1 = arith.constant 0 : i32
    return %c0_i32, %c0_i32_0 : i32, i32
  }
  func.func @transform_10(%arg0: i32) -> (i32, i32) {
    %c0_i32 = arith.constant 0 : i32
    %c0_i32_0 = arith.constant 0 : i32
    %c0_i32_1 = arith.constant 0 : i32
    return %c0_i32, %c0_i32_0 : i32, i32
  }
  func.func @transform_11(%arg0: i32) -> (i32, i32) {
    %c0_i32 = arith.constant 0 : i32
    %c0_i32_0 = arith.constant 0 : i32
    %c0_i32_1 = arith.constant 0 : i32
    return %c0_i32, %c0_i32_0 : i32, i32
  }
  func.func @transform_12(%arg0: i32) -> (i32, i32) {
    %c0_i32 = arith.constant 0 : i32
    %c0_i32_0 = arith.constant 0 : i32
    %c0_i32_1 = arith.constant 0 : i32
    return %c0_i32, %c0_i32_0 : i32, i32
  }
  func.func @transform_13(%arg0: i32) -> (i32, i32, i32) {
    %c0_i32 = arith.constant 0 : i32
    %c0_i32_0 = arith.constant 0 : i32
    %c0_i32_1 = arith.constant 0 : i32
    return %arg0, %c0_i32, %c0_i32_0 : i32, i32, i32
  }
}

</mosaic_0001>

<llo_original>
// kernel: tpu_custom_call.1
$region0: #{tpu_custom_call.1}
  #allocation0 [shape = 'u32[]', space=smem, size = 0x4, offset = 0x4, fixed_abs, tag = 'smem constant byte address 0x4 - core index']
  #allocation1 [shape = 'u32[144,128]{1,0:T(1,128)}', space=vmem, size = 0x12000, scoped, tag = 'internal scratch']
  #allocation2 [shape = 'f32[32,32]{1,0:T(8,128)}', space=vmem, size = 0x4000, scoped, tag = 'scratch operand']
  %s0 = inlined_call_operand.vmem [shape: f32[4,16,32], index: 0, kind: input, shape index: {}]
  %s1 = inlined_call_operand.vmem [shape: f32[1,32], index: 1, kind: input, shape index: {}]
  %s2 = inlined_call_operand.vmem [shape: f32[1,32], index: 2, kind: input, shape index: {}]
  %s3 = inlined_call_operand.vmem [shape: f32[32,96], index: 3, kind: input, shape index: {}]
  %s4 = inlined_call_operand.vmem [shape: f32[1,96], index: 4, kind: input, shape index: {}]
  %s5 = inlined_call_operand.vmem [shape: f32[32,32], index: 5, kind: input, shape index: {}]
  %s6 = inlined_call_operand.vmem [shape: f32[1,32], index: 6, kind: input, shape index: {}]
  %s7 = inlined_call_operand.vmem [shape: f32[1,32], index: 7, kind: input, shape index: {}]
  %s8 = inlined_call_operand.vmem [shape: f32[1,32], index: 8, kind: input, shape index: {}]
  %s9 = inlined_call_operand.vmem [shape: f32[32,128], index: 9, kind: input, shape index: {}]
  %s10 = inlined_call_operand.vmem [shape: f32[1,128], index: 10, kind: input, shape index: {}]
  %s11 = inlined_call_operand.vmem [shape: f32[128,32], index: 11, kind: input, shape index: {}]
  %s12 = inlined_call_operand.vmem [shape: f32[1,32], index: 12, kind: input, shape index: {}]
  %s13 = inlined_call_operand.hbm [shape: f32[4,16,32], index: 13, kind: output, shape index: {}]
  %s14 = sld [smem:[#allocation0]]
  $region85: #{tpu_custom_call.1} parent=0
    _
  %s16 = ssub.s32 1, %s14
  %s17 = scalar_select 0, %s16, %s14
  $region1: #{tpu_custom_call.1} parent=0
    #allocation3 [shape = 'u8[32768]{0}', space=vmem, size = 0x8000, scoped, tag = 'output window, operand 0']
    #allocation4 [shape = 's32[2]{0}', space=sflag, size = 0x8, scoped, tag = 'scoped memory for tpu_custom_call.1']
    %18 = vsyncpa [#allocation4], 0
    %s19 = scalar_lea.sflag [#allocation4], 1
    %20 = vsyncpa %s19, 0
    loop: start=0, step=1, limit=4
    $region2: #{tpu_custom_call.1} parent=1 // loop_pre_header
      _
    $region3: #{tpu_custom_call.1} parent=1 // loop_header
      %s22 = sphi 0, %s26
      %p23 = scmp.ge.s32.totalorder %s22, 4
      %s32 = sphi 0, %s34
      %s35 = sphi 0, %s32
      %s36 = sphi 0, %s35
      %s52 = sphi 0, %s36
      %s56 = sphi 0, %s56
      %s58 = sphi 0, %s56
      %s59 = sphi 0, %s58
      %s73 = sphi 0, %s59
      %s77 = sphi 0, %s77
      %s79 = sphi 0, %s77
      %s80 = sphi 0, %s79
      %s94 = sphi 0, %s80
      %s98 = sphi 0, %s98
      %s100 = sphi 0, %s98
      %s101 = sphi 0, %s100
      %s115 = sphi 0, %s101
      %s119 = sphi 0, %s119
      %s121 = sphi 0, %s119
      %s122 = sphi 0, %s121
      %s136 = sphi 0, %s122
      %s140 = sphi 0, %s140
      %s142 = sphi 0, %s140
      %s143 = sphi 0, %s142
      %s157 = sphi 0, %s143
      %s161 = sphi 0, %s161
      %s163 = sphi 0, %s161
      %s164 = sphi 0, %s163
      %s178 = sphi 0, %s164
      %s182 = sphi 0, %s182
      %s184 = sphi 0, %s182
      %s185 = sphi 0, %s184
      %s199 = sphi 0, %s185
      %s203 = sphi 0, %s203
      %s205 = sphi 0, %s203
      %s206 = sphi 0, %s205
      %s220 = sphi 0, %s206
      %s224 = sphi 0, %s224
      %s226 = sphi 0, %s224
      %s227 = sphi 0, %s226
      %s241 = sphi 0, %s227
      %s245 = sphi 0, %s245
      %s247 = sphi 0, %s245
      %s248 = sphi 0, %s247
      %s262 = sphi 0, %s248
      %s266 = sphi 0, %s266
      %s268 = sphi 0, %s266
      %s269 = sphi 0, %s268
      %s283 = sphi 0, %s269
      %s287 = sphi 0, %s287
      %s289 = sphi 0, %s287
      %s290 = sphi 0, %s289
      %s304 = sphi 0, %s290
      %s310 = sphi 0, %s312
      %s313 = sphi 0, %s310
      %s314 = sphi 0, %s313
      %s330 = sphi 0, %s314
    $region4: #{tpu_custom_call.1} parent=1 // loop_header_branch
      %25 = sbr.rel (%p23) target = $region8
    $region5: #{tpu_custom_call.1} parent=1 // loop_body
      %s27 = ssub.s32 %s22, 1
      %s28 = ssub.s32 %s22, 2
      %s29 = sadd.s32 %s22, 1
      %s30 = ssub.s32 %s22, %s29
      %p31 = scmp.eq.s32.totalorder %s30, 0
      %s33 = sadd.s32 %s32, 1
      %s34 = scalar_select %p31, %s32, %s33
      %p37 = pneg %p31
      %p38 = scmp.eq.s32.totalorder %s22, 1
      %p39 = por %p37, %p38
      %p40 = scmp.ne.s32.totalorder %s32, %s35
      %p41 = scmp.eq.s32.totalorder %s22, 0
      %p42 = por %p40, %p41
      %p43 = scmp.ne.s32.totalorder %s32, %s35
      %p44 = scmp.eq.s32.totalorder %s27, 1
      %p45 = por %p43, %p44
      %p46 = scmp.ne.s32.totalorder %s35, %s36
      %p47 = scmp.eq.s32.totalorder %s27, 0
      %p48 = por %p46, %p47
      %p49 = scmp.ne.s32.totalorder %s35, %s36
      %p50 = scmp.eq.s32.totalorder %s28, 1
      %p51 = por %p49, %p50
      %p53 = scmp.ne.s32.totalorder %s36, %s52
      %p54 = scmp.eq.s32.totalorder %s28, 0
      %p55 = por %p53, %p54
      %s57 = sadd.s32 %s56, 1
      %p60 = scmp.eq.s32.totalorder %s22, 1
      %p61 = scmp.ne.s32.totalorder %s56, %s58
      %p62 = scmp.eq.s32.totalorder %s22, 0
      %p63 = por %p61, %p62
      %p64 = scmp.ne.s32.totalorder %s56, %s58
      %p65 = scmp.eq.s32.totalorder %s27, 1
      %p66 = por %p64, %p65
      %p67 = scmp.ne.s32.totalorder %s58, %s59
      %p68 = scmp.eq.s32.totalorder %s27, 0
      %p69 = por %p67, %p68
      %p70 = scmp.ne.s32.totalorder %s58, %s59
      %p71 = scmp.eq.s32.totalorder %s28, 1
      %p72 = por %p70, %p71
      %p74 = scmp.ne.s32.totalorder %s59, %s73
      %p75 = scmp.eq.s32.totalorder %s28, 0
      %p76 = por %p74, %p75
      %s78 = sadd.s32 %s77, 1
      %p81 = scmp.eq.s32.totalorder %s22, 1
      %p82 = scmp.ne.s32.totalorder %s77, %s79
      %p83 = scmp.eq.s32.totalorder %s22, 0
      %p84 = por %p82, %p83
      %p85 = scmp.ne.s32.totalorder %s77, %s79
      %p86 = scmp.eq.s32.totalorder %s27, 1
      %p87 = por %p85, %p86
      %p88 = scmp.ne.s32.totalorder %s79, %s80
      %p89 = scmp.eq.s32.totalorder %s27, 0
      %p90 = por %p88, %p89
      %p91 = scmp.ne.s32.totalorder %s79, %s80
      %p92 = scmp.eq.s32.totalorder %s28, 1
      %p93 = por %p91, %p92
      %p95 = scmp.ne.s32.totalorder %s80, %s94
      %p96 = scmp.eq.s32.totalorder %s28, 0
      %p97 = por %p95, %p96
      %s99 = sadd.s32 %s98, 1
      %p102 = scmp.eq.s32.totalorder %s22, 1
      %p103 = scmp.ne.s32.totalorder %s98, %s100
      %p104 = scmp.eq.s32.totalorder %s22, 0
      %p105 = por %p103, %p104
      %p106 = scmp.ne.s32.totalorder %s98, %s100
      %p107 = scmp.eq.s32.totalorder %s27, 1
      %p108 = por %p106, %p107
      %p109 = scmp.ne.s32.totalorder %s100, %s101
      %p110 = scmp.eq.s32.totalorder %s27, 0
      %p111 = por %p109, %p110
      %p112 = scmp.ne.s32.totalorder %s100, %s101
      %p113 = scmp.eq.s32.totalorder %s28, 1
      %p114 = por %p112, %p113
      %p116 = scmp.ne.s32.totalorder %s101, %s115
      %p117 = scmp.eq.s32.totalorder %s28, 0
      %p118 = por %p116, %p117
      %s120 = sadd.s32 %s119, 1
      %p123 = scmp.eq.s32.totalorder %s22, 1
      %p124 = scmp.ne.s32.totalorder %s119, %s121
      %p125 = scmp.eq.s32.totalorder %s22, 0
      %p126 = por %p124, %p125
      %p127 = scmp.ne.s32.totalorder %s119, %s121
      %p128 = scmp.eq.s32.totalorder %s27, 1
      %p129 = por %p127, %p128
      %p130 = scmp.ne.s32.totalorder %s121, %s122
      %p131 = scmp.eq.s32.totalorder %s27, 0
      %p132 = por %p130, %p131
      %p133 = scmp.ne.s32.totalorder %s121, %s122
      %p134 = scmp.eq.s32.totalorder %s28, 1
      %p135 = por %p133, %p134
      %p137 = scmp.ne.s32.totalorder %s122, %s136
      %p138 = scmp.eq.s32.totalorder %s28, 0
      %p139 = por %p137, %p138
      %s141 = sadd.s32 %s140, 1
      %p144 = scmp.eq.s32.totalorder %s22, 1
      %p145 = scmp.ne.s32.totalorder %s140, %s142
      %p146 = scmp.eq.s32.totalorder %s22, 0
      %p147 = por %p145, %p146
      %p148 = scmp.ne.s32.totalorder %s140, %s142
      %p149 = scmp.eq.s32.totalorder %s27, 1
      %p150 = por %p148, %p149
      %p151 = scmp.ne.s32.totalorder %s142, %s143
      %p152 = scmp.eq.s32.totalorder %s27, 0
      %p153 = por %p151, %p152
      %p154 = scmp.ne.s32.totalorder %s142, %s143
      %p155 = scmp.eq.s32.totalorder %s28, 1
      %p156 = por %p154, %p155
      %p158 = scmp.ne.s32.totalorder %s143, %s157
      %p159 = scmp.eq.s32.totalorder %s28, 0
      %p160 = por %p158, %p159
      %s162 = sadd.s32 %s161, 1
      %p165 = scmp.eq.s32.totalorder %s22, 1
      %p166 = scmp.ne.s32.totalorder %s161, %s163
      %p167 = scmp.eq.s32.totalorder %s22, 0
      %p168 = por %p166, %p167
      %p169 = scmp.ne.s32.totalorder %s161, %s163
      %p170 = scmp.eq.s32.totalorder %s27, 1
      %p171 = por %p169, %p170
      %p172 = scmp.ne.s32.totalorder %s163, %s164
      %p173 = scmp.eq.s32.totalorder %s27, 0
      %p174 = por %p172, %p173
      %p175 = scmp.ne.s32.totalorder %s163, %s164
      %p176 = scmp.eq.s32.totalorder %s28, 1
      %p177 = por %p175, %p176
      %p179 = scmp.ne.s32.totalorder %s164, %s178
      %p180 = scmp.eq.s32.totalorder %s28, 0
      %p181 = por %p179, %p180
      %s183 = sadd.s32 %s182, 1
      %p186 = scmp.eq.s32.totalorder %s22, 1
      %p187 = scmp.ne.s32.totalorder %s182, %s184
      %p188 = scmp.eq.s32.totalorder %s22, 0
      %p189 = por %p187, %p188
      %p190 = scmp.ne.s32.totalorder %s182, %s184
      %p191 = scmp.eq.s32.totalorder %s27, 1
      %p192 = por %p190, %p191
      %p193 = scmp.ne.s32.totalorder %s184, %s185
      %p194 = scmp.eq.s32.totalorder %s27, 0
      %p195 = por %p193, %p194
      %p196 = scmp.ne.s32.totalorder %s184, %s185
      %p197 = scmp.eq.s32.totalorder %s28, 1
      %p198 = por %p196, %p197
      %p200 = scmp.ne.s32.totalorder %s185, %s199
      %p201 = scmp.eq.s32.totalorder %s28, 0
      %p202 = por %p200, %p201
      %s204 = sadd.s32 %s203, 1
      %p207 = scmp.eq.s32.totalorder %s22, 1
      %p208 = scmp.ne.s32.totalorder %s203, %s205
      %p209 = scmp.eq.s32.totalorder %s22, 0
      %p210 = por %p208, %p209
      %p211 = scmp.ne.s32.totalorder %s203, %s205
      %p212 = scmp.eq.s32.totalorder %s27, 1
      %p213 = por %p211, %p212
      %p214 = scmp.ne.s32.totalorder %s205, %s206
      %p215 = scmp.eq.s32.totalorder %s27, 0
      %p216 = por %p214, %p215
      %p217 = scmp.ne.s32.totalorder %s205, %s206
      %p218 = scmp.eq.s32.totalorder %s28, 1
      %p219 = por %p217, %p218
      %p221 = scmp.ne.s32.totalorder %s206, %s220
      %p222 = scmp.eq.s32.totalorder %s28, 0
      %p223 = por %p221, %p222
      %s225 = sadd.s32 %s224, 1
      %p228 = scmp.eq.s32.totalorder %s22, 1
      %p229 = scmp.ne.s32.totalorder %s224, %s226
      %p230 = scmp.eq.s32.totalorder %s22, 0
      %p231 = por %p229, %p230
      %p232 = scmp.ne.s32.totalorder %s224, %s226
      %p233 = scmp.eq.s32.totalorder %s27, 1
      %p234 = por %p232, %p233
      %p235 = scmp.ne.s32.totalorder %s226, %s227
      %p236 = scmp.eq.s32.totalorder %s27, 0
      %p237 = por %p235, %p236
      %p238 = scmp.ne.s32.totalorder %s226, %s227
      %p239 = scmp.eq.s32.totalorder %s28, 1
      %p240 = por %p238, %p239
      %p242 = scmp.ne.s32.totalorder %s227, %s241
      %p243 = scmp.eq.s32.totalorder %s28, 0
      %p244 = por %p242, %p243
      %s246 = sadd.s32 %s245, 1
      %p249 = scmp.eq.s32.totalorder %s22, 1
      %p250 = scmp.ne.s32.totalorder %s245, %s247
      %p251 = scmp.eq.s32.totalorder %s22, 0
      %p252 = por %p250, %p251
      %p253 = scmp.ne.s32.totalorder %s245, %s247
      %p254 = scmp.eq.s32.totalorder %s27, 1
      %p255 = por %p253, %p254
      %p256 = scmp.ne.s32.totalorder %s247, %s248
      %p257 = scmp.eq.s32.totalorder %s27, 0
      %p258 = por %p256, %p257
      %p259 = scmp.ne.s32.totalorder %s247, %s248
      %p260 = scmp.eq.s32.totalorder %s28, 1
      %p261 = por %p259, %p260
      %p263 = scmp.ne.s32.totalorder %s248, %s262
      %p264 = scmp.eq.s32.totalorder %s28, 0
      %p265 = por %p263, %p264
      %s267 = sadd.s32 %s266, 1
      %p270 = scmp.eq.s32.totalorder %s22, 1
      %p271 = scmp.ne.s32.totalorder %s266, %s268
      %p272 = scmp.eq.s32.totalorder %s22, 0
      %p273 = por %p271, %p272
      %p274 = scmp.ne.s32.totalorder %s266, %s268
      %p275 = scmp.eq.s32.totalorder %s27, 1
      %p276 = por %p274, %p275
      %p277 = scmp.ne.s32.totalorder %s268, %s269
      %p278 = scmp.eq.s32.totalorder %s27, 0
      %p279 = por %p277, %p278
      %p280 = scmp.ne.s32.totalorder %s268, %s269
      %p281 = scmp.eq.s32.totalorder %s28, 1
      %p282 = por %p280, %p281
      %p284 = scmp.ne.s32.totalorder %s269, %s283
      %p285 = scmp.eq.s32.totalorder %s28, 0
      %p286 = por %p284, %p285
      %s288 = sadd.s32 %s287, 1
      %p291 = scmp.eq.s32.totalorder %s22, 1
      %p292 = scmp.ne.s32.totalorder %s287, %s289
      %p293 = scmp.eq.s32.totalorder %s22, 0
      %p294 = por %p292, %p293
      %p295 = scmp.ne.s32.totalorder %s287, %s289
      %p296 = scmp.eq.s32.totalorder %s27, 1
      %p297 = por %p295, %p296
      %p298 = scmp.ne.s32.totalorder %s289, %s290
      %p299 = scmp.eq.s32.totalorder %s27, 0
      %p300 = por %p298, %p299
      %p301 = scmp.ne.s32.totalorder %s289, %s290
      %p302 = scmp.eq.s32.totalorder %s28, 1
      %p303 = por %p301, %p302
      %p305 = scmp.ne.s32.totalorder %s290, %s304
      %p306 = scmp.eq.s32.totalorder %s28, 0
      %p307 = por %p305, %p306
      %s308 = ssub.s32 %s22, %s29
      %p309 = scmp.eq.s32.totalorder %s308, 0
      %s311 = sadd.s32 %s310, 1
      %s312 = scalar_select %p309, %s310, %s311
      %p315 = pneg %p309
      %p316 = scmp.eq.s32.totalorder %s22, 1
      %p317 = por %p315, %p316
      %p318 = scmp.ne.s32.totalorder %s310, %s313
      %p319 = scmp.eq.s32.totalorder %s22, 0
      %p320 = por %p318, %p319
      %p321 = scmp.ne.s32.totalorder %s310, %s313
      %p322 = scmp.eq.s32.totalorder %s27, 1
      %p323 = por %p321, %p322
      %p324 = scmp.ne.s32.totalorder %s313, %s314
      %p325 = scmp.eq.s32.totalorder %s27, 0
      %p326 = por %p324, %p325
      %p327 = scmp.ne.s32.totalorder %s313, %s314
      %p328 = scmp.eq.s32.totalorder %s28, 1
      %p329 = por %p327, %p328
      %p331 = scmp.ne.s32.totalorder %s314, %s330
      %p332 = scmp.eq.s32.totalorder %s28, 0
      %p333 = por %p331, %p332
      %p334 = scmp.le.s32.totalorder 1, %s22
      %p335 = scmp.lt.s32.totalorder %s22, 3
      %p336 = pnand %p334, %p335
      %p337 = pneg %p336
      // Predicated region
      $region9: #{tpu_custom_call.1} parent=5 // pred_check
        _
      $region10: #{tpu_custom_call.1} parent=5 // pred_check_branch
        %339 = sbr.rel (%p336) target = $region12
      $region11: #{tpu_custom_call.1} parent=5 // pred_region
        %s340 = ssub.s32 %s22, 1
        // Predicated region
        $region13: #{tpu_custom_call.1} parent=11 // pred_check
          %p341 = pneg %p69
        $region14: #{tpu_custom_call.1} parent=11 // pred_check_branch
          %343 = sbr.rel (%p341) target = $region16
        $region15: #{tpu_custom_call.1} parent=11 // pred_region
          _
        $region16: #{tpu_custom_call.1} parent=11 // pred_fallthru
          _
        // Predicated region
        $region17: #{tpu_custom_call.1} parent=11 // pred_check
          %p344 = pneg %p90
        $region18: #{tpu_custom_call.1} parent=11 // pred_check_branch
          %346 = sbr.rel (%p344) target = $region20
        $region19: #{tpu_custom_call.1} parent=11 // pred_region
          _
        $region20: #{tpu_custom_call.1} parent=11 // pred_fallthru
          _
        // Predicated region
        $region21: #{tpu_custom_call.1} parent=11 // pred_check
          %p347 = pneg %p111
        $region22: #{tpu_custom_call.1} parent=11 // pred_check_branch
          %349 = sbr.rel (%p347) target = $region24
        $region23: #{tpu_custom_call.1} parent=11 // pred_region
          _
        $region24: #{tpu_custom_call.1} parent=11 // pred_fallthru
          _
        // Predicated region
        $region25: #{tpu_custom_call.1} parent=11 // pred_check
          %p350 = pneg %p132
        $region26: #{tpu_custom_call.1} parent=11 // pred_check_branch
          %352 = sbr.rel (%p350) target = $region28
        $region27: #{tpu_custom_call.1} parent=11 // pred_region
          _
        $region28: #{tpu_custom_call.1} parent=11 // pred_fallthru
          _
        // Predicated region
        $region29: #{tpu_custom_call.1} parent=11 // pred_check
          %p353 = pneg %p153
        $region30: #{tpu_custom_call.1} parent=11 // pred_check_branch
          %355 = sbr.rel (%p353) target = $region32
        $region31: #{tpu_custom_call.1} parent=11 // pred_region
          _
        $region32: #{tpu_custom_call.1} parent=11 // pred_fallthru
          _
        // Predicated region
        $region33: #{tpu_custom_call.1} parent=11 // pred_check
          %p356 = pneg %p174
        $region34: #{tpu_custom_call.1} parent=11 // pred_check_branch
          %358 = sbr.rel (%p356) target = $region36
        $region35: #{tpu_custom_call.1} parent=11 // pred_region
          _
        $region36: #{tpu_custom_call.1} parent=11 // pred_fallthru
          _
        // Predicated region
        $region37: #{tpu_custom_call.1} parent=11 // pred_check
          %p359 = pneg %p195
        $region38: #{tpu_custom_call.1} parent=11 // pred_check_branch
          %361 = sbr.rel (%p359) target = $region40
        $region39: #{tpu_custom_call.1} parent=11 // pred_region
          _
        $region40: #{tpu_custom_call.1} parent=11 // pred_fallthru
          _
        // Predicated region
        $region41: #{tpu_custom_call.1} parent=11 // pred_check
          %p362 = pneg %p216
        $region42: #{tpu_custom_call.1} parent=11 // pred_check_branch
          %364 = sbr.rel (%p362) target = $region44
        $region43: #{tpu_custom_call.1} parent=11 // pred_region
          _
        $region44: #{tpu_custom_call.1} parent=11 // pred_fallthru
          _
        // Predicated region
        $region45: #{tpu_custom_call.1} parent=11 // pred_check
          %p365 = pneg %p237
        $region46: #{tpu_custom_call.1} parent=11 // pred_check_branch
          %367 = sbr.rel (%p365) target = $region48
        $region47: #{tpu_custom_call.1} parent=11 // pred_region
          _
        $region48: #{tpu_custom_call.1} parent=11 // pred_fallthru
          _
        // Predicated region
        $region49: #{tpu_custom_call.1} parent=11 // pred_check
          %p368 = pneg %p258
        $region50: #{tpu_custom_call.1} parent=11 // pred_check_branch
          %370 = sbr.rel (%p368) target = $region52
        $region51: #{tpu_custom_call.1} parent=11 // pred_region
          _
        $region52: #{tpu_custom_call.1} parent=11 // pred_fallthru
          _
        // Predicated region
        $region53: #{tpu_custom_call.1} parent=11 // pred_check
          %p371 = pneg %p279
        $region54: #{tpu_custom_call.1} parent=11 // pred_check_branch
          %373 = sbr.rel (%p371) target = $region56
        $region55: #{tpu_custom_call.1} parent=11 // pred_region
          _
        $region56: #{tpu_custom_call.1} parent=11 // pred_fallthru
          _
        // Predicated region
        $region57: #{tpu_custom_call.1} parent=11 // pred_check
          %p374 = pneg %p300
        $region58: #{tpu_custom_call.1} parent=11 // pred_check_branch
          %376 = sbr.rel (%p374) target = $region60
        $region59: #{tpu_custom_call.1} parent=11 // pred_region
          _
        $region60: #{tpu_custom_call.1} parent=11 // pred_fallthru
          _
      $region12: #{tpu_custom_call.1} parent=5 // pred_fallthru
        _
      %p377 = scmp.lt.s32.totalorder %s22, 2
      // Predicated region
      $region61: #{tpu_custom_call.1} parent=5 // pred_check
        %p378 = pneg %p377
      $region62: #{tpu_custom_call.1} parent=5 // pred_check_branch
        %380 = sbr.rel (%p378) target = $region64
      $region63: #{tpu_custom_call.1} parent=5 // pred_region
        // Predicated region
        $region65: #{tpu_custom_call.1} parent=63 // pred_check
          %p381 = pneg %p42
        $region66: #{tpu_custom_call.1} parent=63 // pred_check_branch
          %383 = sbr.rel (%p381) target = $region68
        $region67: #{tpu_custom_call.1} parent=63 // pred_region
          %s384 = smul.u32 2, %s22
          %p385 = scmp.lt.s32.totalorder %s384, 3
          %s386 = scalar_select %p385, %s384, 3
          %s387 = smul.addr %s386, 2
          %s388 = smul.addr %s387, 8
          %s389 = scalar_lea.vmem %s0, %s388
          %s390 = smul.u32 2, %s22
        $region68: #{tpu_custom_call.1} parent=63 // pred_fallthru
          _
      $region64: #{tpu_custom_call.1} parent=5 // pred_fallthru
        _
      %p391 = scmp.le.s32.totalorder 1, %s22
      %p392 = scmp.lt.s32.totalorder %s22, 3
      %p393 = pnand %p391, %p392
      %p394 = pneg %p393
      // Predicated region
      $region69: #{tpu_custom_call.1} parent=5 // pred_check
        _
      $region70: #{tpu_custom_call.1} parent=5 // pred_check_branch
        %396 = sbr.rel (%p393) target = $region72
      $region71: #{tpu_custom_call.1} parent=5 // pred_region
        %s397 = ssub.s32 %s22, 1
        %s398 = smul.u32 2, %s27
        %p399 = scmp.lt.s32.totalorder %s398, 3
        %s400 = scalar_select %p399, %s398, 3
        %s401 = smul.addr %s400, 2
        %s402 = smul.addr %s401, 8
        %s403 = scalar_lea.vmem %s0, %s402
        %p404 = pneg %p48
        %p405 = pneg %p45
        %p406 = pneg %p69
        %p407 = pneg %p66
        %p408 = pneg %p90
        %p409 = pneg %p87
        %p410 = pneg %p111
        %p411 = pneg %p108
        %p412 = pneg %p132
        %p413 = pneg %p129
        %p414 = pneg %p153
        %p415 = pneg %p150
        %p416 = pneg %p174
        %p417 = pneg %p171
        %p418 = pneg %p195
        %p419 = pneg %p192
        %p420 = pneg %p216
        %p421 = pneg %p213
        %p422 = pneg %p237
        %p423 = pneg %p234
        %p424 = pneg %p258
        %p425 = pneg %p255
        %p426 = pneg %p279
        %p427 = pneg %p276
        %p428 = pneg %p300
        %p429 = pneg %p297
        %p430 = pneg %p326
        %p431 = pneg %p323
        %s432 = sand.u32 %s313, 1
        %s433 = scalar_lea.sflag [#allocation4], %s432
        %s434 = sand.u32 %s313, 1
        %s435 = smul.addr %s434, 32
        %s436 = scalar_lea.vmem [#allocation3], %s435
        %s437 = smul.u32 2, %s27
        %p438 = scmp.lt.s32.totalorder %s437, 3
        %s439 = scalar_select %p438, %s437, 3
        %s440 = smul.addr %s439, 2
        %s441 = smul.addr %s440, 8
        %s442 = scalar_lea.vmem %s0, %s441
        %s443 = smul.u32 2, %s27
        %s444 = smul.u32 2, %s27
        %v445 = vld [vmem:[%s442] sm:$0xff]
        %v446 = vld [vmem:[%s442 + $0x8] sm:$0xff]
        %v447 = vld [vmem:[%s442 + $0x10] sm:$0xff]
        %v448 = vld [vmem:[%s442 + $0x18] sm:$0xff]
        %vm449 = vcmask 261120
        %v450 = vsel %vm449, %v445, 0.0
        %451 = vadd.xlane.f32.xlu0 %v450
        %v452 = vpop.xlane.xlu0 %451
        %v453 = vsel %vm449, %v446, 0.0
        %454 = vadd.xlane.f32.xlu0 %v453
        %v455 = vpop.xlane.xlu0 %454
        %v456 = vsel %vm449, %v447, 0.0
        %457 = vadd.xlane.f32.xlu0 %v456
        %v458 = vpop.xlane.xlu0 %457
        %v459 = vsel %vm449, %v448, 0.0
        %460 = vadd.xlane.f32.xlu0 %v459
        %v461 = vpop.xlane.xlu0 %460
        %v462 = vrcp.pop 32.0
        %v463 = vmul.f32 %v452, %v462
        %v464 = vmul.f32 %v455, %v462
        %v465 = vmul.f32 %v458, %v462
        %v466 = vmul.f32 %v461, %v462
        %v467 = vsub.f32 %v445, %v463
        %v468 = vsub.f32 %v446, %v464
        %v469 = vsub.f32 %v447, %v465
        %v470 = vsub.f32 %v448, %v466
        %v471 = vmul.f32 %v467, %v467
        %v472 = vmul.f32 %v468, %v468
        %v473 = vmul.f32 %v469, %v469
        %v474 = vmul.f32 %v470, %v470
        %v475 = vsel %vm449, %v471, 0.0
        %476 = vadd.xlane.f32.xlu0 %v475
        %v477 = vpop.xlane.xlu0 %476
        %v478 = vsel %vm449, %v472, 0.0
        %479 = vadd.xlane.f32.xlu0 %v478
        %v480 = vpop.xlane.xlu0 %479
        %v481 = vsel %vm449, %v473, 0.0
        %482 = vadd.xlane.f32.xlu0 %v481
        %v483 = vpop.xlane.xlu0 %482
        %v484 = vsel %vm449, %v474, 0.0
        %485 = vadd.xlane.f32.xlu0 %v484
        %v486 = vpop.xlane.xlu0 %485
        %v487 = vmul.f32 %v477, %v462
        %v488 = vmul.f32 %v480, %v462
        %v489 = vmul.f32 %v483, %v462
        %v490 = vmul.f32 %v486, %v462
        %v491 = vadd.f32 %v487, 1e-05
        %v492 = vadd.f32 %v488, 1e-05
        %v493 = vadd.f32 %v489, 1e-05
        %v494 = vadd.f32 %v490, 1e-05
        %v495 = vrsqrt.pop %v491
        %v496 = vrsqrt.pop %v492
        %v497 = vrsqrt.pop %v493
        %v498 = vrsqrt.pop %v494
        %v499 = vmul.f32 %v467, %v495
        %v500 = vmul.f32 %v468, %v496
        %v501 = vmul.f32 %v469, %v497
        %v502 = vmul.f32 %v470, %v498
        %v503 = vld [vmem:[%s1] sm:$0x1]
        %v505 = vlaneseq
        %v506 = vshrl.u32 %v505, 7
        %v507 = vsub.s32 0, %v506
        %v508 = vrot.slane %v503, %v507
        %v510 = vmul.f32 %v499, %v508
        %v511 = vmul.f32 %v500, %v508
        %v512 = vmul.f32 %v501, %v508
        %v513 = vmul.f32 %v502, %v508
        %v514 = vld [vmem:[%s2] sm:$0x1]
        %v516 = vlaneseq
        %v517 = vshrl.u32 %v516, 7
        %v518 = vsub.s32 0, %v517
        %v519 = vrot.slane %v514, %v518
        %v521 = vadd.f32 %v510, %v519
        %v522 = vadd.f32 %v511, %v519
        %v523 = vadd.f32 %v512, %v519
        %v524 = vadd.f32 %v513, %v519
        %v525 = vld [vmem:[%s3] sm:$0xff]
        %v526 = vld [vmem:[%s3 + $0x8] sm:$0xff]
        %v527 = vld [vmem:[%s3 + $0x10] sm:$0xff]
        %v528 = vld [vmem:[%s3 + $0x18] sm:$0xff]
        %v529 = vld [vmem:[%s4] sm:$0x1]
        %v531 = vlaneseq
        %v532 = vshrl.u32 %v531, 7
        %v533 = vsub.s32 0, %v532
        %v534 = vrot.slane %v529, %v533
        %v537 = vsel %vm449, %v521, 0
        %v540 = vsel %vm449, %v522, 0
        %v543 = vsel %vm449, %v523, 0
        %v546 = vsel %vm449, %v524, 0
        %548 = vmatprep.subr.mxu0 0.0
        %549 = vmatpush1.msra.mxu0 0.0
        %550 = vmatprep.subr.mxu0 0.0
        %551 = vmatpush1.msra.mxu0 0.0
        %552 = vmatprep.subr.mxu0 0.0
        %553 = vmatpush1.msra.mxu0 0.0
        %554 = vmatprep.subr.mxu0 0.0
        %555 = vmatpush1.msra.mxu0 0.0
        %556 = vmatprep.subr.mxu0 0.0
        %557 = vmatpush1.msra.mxu0 0.0
        %558 = vmatprep.subr.mxu0 0.0
        %559 = vmatpush1.msra.mxu0 0.0
        %560 = vmatprep.subr.mxu0 0.0
        %561 = vmatpush1.msra.mxu0 0.0
        %562 = vmatprep.subr.mxu0 0.0
        %563 = vmatpush1.msra.mxu0 0.0
        %564 = vmatprep.subr.mxu0 0.0
        %565 = vmatpush1.msra.mxu0 0.0
        %566 = vmatprep.subr.mxu0 0.0
        %567 = vmatpush1.msra.mxu0 0.0
        %568 = vmatprep.subr.mxu0 0.0
        %569 = vmatpush1.msra.mxu0 0.0
        %570 = vmatprep.subr.mxu0 0.0
        %571 = vmatpush1.msra.mxu0 0.0
        %572 = vmatprep.subr.mxu0 0.0
        %573 = vmatpush1.msra.mxu0 %v528
        %574 = vmatprep.subr.mxu0 0.0
        %575 = vmatpush1.msra.mxu0 %v527
        %576 = vmatprep.subr.mxu0 0.0
        %577 = vmatpush1.msra.mxu0 %v526
        %578 = vmatprep.subr.mxu0 0.0
        %579 = vmatpush1.msra.mxu0 %v525
        %580 = vmatprep.subr.mxu0 0.0
        %581 = vmatpush2.msra.mxu0 0.0
        %582 = vmatprep.subr.mxu0 0.0
        %583 = vmatpush2.msra.mxu0 0.0
        %584 = vmatprep.subr.mxu0 0.0
        %585 = vmatpush2.msra.mxu0 0.0
        %586 = vmatprep.subr.mxu0 0.0
        %587 = vmatpush2.msra.mxu0 0.0
        %588 = vmatprep.subr.mxu0 0.0
        %589 = vmatpush2.msra.mxu0 0.0
        %590 = vmatprep.subr.mxu0 0.0
        %591 = vmatpush2.msra.mxu0 0.0
        %592 = vmatprep.subr.mxu0 0.0
        %593 = vmatpush2.msra.mxu0 0.0
        %594 = vmatprep.subr.mxu0 0.0
        %595 = vmatpush2.msra.mxu0 0.0
        %596 = vmatprep.subr.mxu0 0.0
        %597 = vmatpush2.msra.mxu0 0.0
        %598 = vmatprep.subr.mxu0 0.0
        %599 = vmatpush2.msra.mxu0 0.0
        %600 = vmatprep.subr.mxu0 0.0
        %601 = vmatpush2.msra.mxu0 0.0
        %602 = vmatprep.subr.mxu0 0.0
        %603 = vmatpush2.msra.mxu0 0.0
        %604 = vmatprep.subr.mxu0 0.0
        %605 = vmatpush2.msra.mxu0 0.0
        %606 = vmatprep.subr.mxu0 0.0
        %607 = vmatpush2.msra.mxu0 0.0
        %608 = vmatprep.subr.mxu0 0.0
        %609 = vmatpush2.msra.mxu0 0.0
        %610 = vmatprep.subr.mxu0 0.0
        %611 = vmatpush2.msra.mxu0 0.0
        %612 = vmatprep.mubr.f32.mxu0 0.0
        %613 = vmatmul.mubr.f32.gmra.mxu0 %v537
        %v614 = vpop.f32.mrf.mxu0
        %v615 = vadd.f32 %v534, %v614
        %v616 = vpop.f32.mrf.mxu0
        %617 = vmatprep.mubr.f32.mxu0 0.0
        %618 = vmatmul.mubr.f32.gmra.mxu0 %v540
        %v619 = vpop.f32.mrf.mxu0
        %v620 = vadd.f32 %v534, %v619
        %v621 = vpop.f32.mrf.mxu0
        %622 = vmatprep.mubr.f32.mxu0 0.0
        %623 = vmatmul.mubr.f32.gmra.mxu0 %v543
        %v624 = vpop.f32.mrf.mxu0
        %v625 = vadd.f32 %v534, %v624
        %v626 = vpop.f32.mrf.mxu0
        %627 = vmatprep.mubr.f32.mxu0 0.0
        %628 = vmatmul.mubr.f32.gmra.mxu0 %v546
        %v629 = vpop.f32.mrf.mxu0
        %v630 = vadd.f32 %v534, %v629
        %v631 = vpop.f32.mrf.mxu0
        %632 = vdwg.mxu0
        %v633 = vlaneseq
        %v634 = vand.u32 %v633, 127
        %vm635 = vcmp.lt.s32.totalorder %v634, 10
        %v636 = vsel %vm635, 1, 0
        %vm637 = vcmp.eq.s32.totalorder %v636, 1
        %640 = vrot.lane.b32.xlu0 %v615, 96
        %v641 = vpop.permute.xlu0 %640
        %642 = vrot.lane.b32.xlu0 %v620, 96
        %v643 = vpop.permute.xlu0 %642
        %vm644 = vcmask 64512
        %v645 = vsel %vm644, %v615, 0
        %v647 = vsel %vm644, %v620, 0
        %v649 = vsel %vm644, %v641, 0
        %v651 = vsel %vm644, %v643, 0
        %653 = vmatprep.subr.mxu0 0.0
        %654 = vmatpush1.xpose.msra.mxu0 0.0
        %655 = vmatprep.subr.mxu0 0.0
        %656 = vmatpush1.xpose.msra.mxu0 0.0
        %657 = vmatprep.subr.mxu0 0.0
        %658 = vmatpush1.xpose.msra.mxu0 0.0
        %659 = vmatprep.subr.mxu0 0.0
        %660 = vmatpush1.xpose.msra.mxu0 0.0
        %661 = vmatprep.subr.mxu0 0.0
        %662 = vmatpush1.xpose.msra.mxu0 0.0
        %663 = vmatprep.subr.mxu0 0.0
        %664 = vmatpush1.xpose.msra.mxu0 0.0
        %665 = vmatprep.subr.mxu0 0.0
        %666 = vmatpush1.xpose.msra.mxu0 0.0
        %667 = vmatprep.subr.mxu0 0.0
        %668 = vmatpush1.xpose.msra.mxu0 0.0
        %669 = vmatprep.subr.mxu0 0.0
        %670 = vmatpush1.xpose.msra.mxu0 0.0
        %671 = vmatprep.subr.mxu0 0.0
        %672 = vmatpush1.xpose.msra.mxu0 0.0
        %673 = vmatprep.subr.mxu0 0.0
        %674 = vmatpush1.xpose.msra.mxu0 0.0
        %675 = vmatprep.subr.mxu0 0.0
        %676 = vmatpush1.xpose.msra.mxu0 0.0
        %677 = vmatprep.subr.mxu0 0.0
        %678 = vmatpush1.xpose.msra.mxu0 0.0
        %679 = vmatprep.subr.mxu0 0.0
        %680 = vmatpush1.xpose.msra.mxu0 0.0
        %681 = vmatprep.subr.mxu0 0.0
        %682 = vmatpush1.xpose.msra.mxu0 %v651
        %683 = vmatprep.subr.mxu0 0.0
        %684 = vmatpush1.xpose.msra.mxu0 %v649
        %685 = vmatprep.subr.mxu0 0.0
        %686 = vmatpush2.xpose.msra.mxu0 0.0
        %687 = vmatprep.subr.mxu0 0.0
        %688 = vmatpush2.xpose.msra.mxu0 0.0
        %689 = vmatprep.subr.mxu0 0.0
        %690 = vmatpush2.xpose.msra.mxu0 0.0
        %691 = vmatprep.subr.mxu0 0.0
        %692 = vmatpush2.xpose.msra.mxu0 0.0
        %693 = vmatprep.subr.mxu0 0.0
        %694 = vmatpush2.xpose.msra.mxu0 0.0
        %695 = vmatprep.subr.mxu0 0.0
        %696 = vmatpush2.xpose.msra.mxu0 0.0
        %697 = vmatprep.subr.mxu0 0.0
        %698 = vmatpush2.xpose.msra.mxu0 0.0
        %699 = vmatprep.subr.mxu0 0.0
        %700 = vmatpush2.xpose.msra.mxu0 0.0
        %701 = vmatprep.subr.mxu0 0.0
        %702 = vmatpush2.xpose.msra.mxu0 0.0
        %703 = vmatprep.subr.mxu0 0.0
        %704 = vmatpush2.xpose.msra.mxu0 0.0
        %705 = vmatprep.subr.mxu0 0.0
        %706 = vmatpush2.xpose.msra.mxu0 0.0
        %707 = vmatprep.subr.mxu0 0.0
        %708 = vmatpush2.xpose.msra.mxu0 0.0
        %709 = vmatprep.subr.mxu0 0.0
        %710 = vmatpush2.xpose.msra.mxu0 0.0
        %711 = vmatprep.subr.mxu0 0.0
        %712 = vmatpush2.xpose.msra.mxu0 0.0
        %713 = vmatprep.subr.mxu0 0.0
        %714 = vmatpush2.xpose.msra.mxu0 0.0
        %715 = vmatprep.subr.mxu0 0.0
        %716 = vmatpush2.xpose.msra.mxu0 0.0
        %717 = vmatprep.mubr.f32.mxu0 0.0
        %718 = vmatmul.mubr.f32.gmra.mxu0 %v645
        %v719 = vpop.f32.mrf.mxu0
        %v720 = vadd.f32 0.0, %v719
        %v721 = vpop.f32.mrf.mxu0
        %722 = vmatprep.mubr.f32.mxu0 0.0
        %723 = vmatmul.mubr.f32.gmra.mxu0 %v647
        %v724 = vpop.f32.mrf.mxu0
        %v725 = vadd.f32 0.0, %v724
        %v726 = vpop.f32.mrf.mxu0
        %727 = vdwg.mxu0
        %730 = vrot.lane.b32.xlu0 %v625, 96
        %v731 = vpop.permute.xlu0 %730
        %732 = vrot.lane.b32.xlu0 %v630, 96
        %v733 = vpop.permute.xlu0 %732
        %v734 = vsel %vm644, %v625, 0
        %v736 = vsel %vm644, %v630, 0
        %v738 = vsel %vm644, %v731, 0
        %v740 = vsel %vm644, %v733, 0
        %742 = vmatprep.subr.mxu0 0.0
        %743 = vmatpush1.xpose.msra.mxu0 0.0
        %744 = vmatprep.subr.mxu0 0.0
        %745 = vmatpush1.xpose.msra.mxu0 0.0
        %746 = vmatprep.subr.mxu0 0.0
        %747 = vmatpush1.xpose.msra.mxu0 0.0
        %748 = vmatprep.subr.mxu0 0.0
        %749 = vmatpush1.xpose.msra.mxu0 0.0
        %750 = vmatprep.subr.mxu0 0.0
        %751 = vmatpush1.xpose.msra.mxu0 0.0
        %752 = vmatprep.subr.mxu0 0.0
        %753 = vmatpush1.xpose.msra.mxu0 0.0
        %754 = vmatprep.subr.mxu0 0.0
        %755 = vmatpush1.xpose.msra.mxu0 0.0
        %756 = vmatprep.subr.mxu0 0.0
        %757 = vmatpush1.xpose.msra.mxu0 0.0
        %758 = vmatprep.subr.mxu0 0.0
        %759 = vmatpush1.xpose.msra.mxu0 0.0
        %760 = vmatprep.subr.mxu0 0.0
        %761 = vmatpush1.xpose.msra.mxu0 0.0
        %762 = vmatprep.subr.mxu0 0.0
        %763 = vmatpush1.xpose.msra.mxu0 0.0
        %764 = vmatprep.subr.mxu0 0.0
        %765 = vmatpush1.xpose.msra.mxu0 0.0
        %766 = vmatprep.subr.mxu0 0.0
        %767 = vmatpush1.xpose.msra.mxu0 0.0
        %768 = vmatprep.subr.mxu0 0.0
        %769 = vmatpush1.xpose.msra.mxu0 0.0
        %770 = vmatprep.subr.mxu0 0.0
        %771 = vmatpush1.xpose.msra.mxu0 %v740
        %772 = vmatprep.subr.mxu0 0.0
        %773 = vmatpush1.xpose.msra.mxu0 %v738
        %774 = vmatprep.subr.mxu0 0.0
        %775 = vmatpush2.xpose.msra.mxu0 0.0
        %776 = vmatprep.subr.mxu0 0.0
        %777 = vmatpush2.xpose.msra.mxu0 0.0
        %778 = vmatprep.subr.mxu0 0.0
        %779 = vmatpush2.xpose.msra.mxu0 0.0
        %780 = vmatprep.subr.mxu0 0.0
        %781 = vmatpush2.xpose.msra.mxu0 0.0
        %782 = vmatprep.subr.mxu0 0.0
        %783 = vmatpush2.xpose.msra.mxu0 0.0
        %784 = vmatprep.subr.mxu0 0.0
        %785 = vmatpush2.xpose.msra.mxu0 0.0
        %786 = vmatprep.subr.mxu0 0.0
        %787 = vmatpush2.xpose.msra.mxu0 0.0
        %788 = vmatprep.subr.mxu0 0.0
        %789 = vmatpush2.xpose.msra.mxu0 0.0
        %790 = vmatprep.subr.mxu0 0.0
        %791 = vmatpush2.xpose.msra.mxu0 0.0
        %792 = vmatprep.subr.mxu0 0.0
        %793 = vmatpush2.xpose.msra.mxu0 0.0
        %794 = vmatprep.subr.mxu0 0.0
        %795 = vmatpush2.xpose.msra.mxu0 0.0
        %796 = vmatprep.subr.mxu0 0.0
        %797 = vmatpush2.xpose.msra.mxu0 0.0
        %798 = vmatprep.subr.mxu0 0.0
        %799 = vmatpush2.xpose.msra.mxu0 0.0
        %800 = vmatprep.subr.mxu0 0.0
        %801 = vmatpush2.xpose.msra.mxu0 0.0
        %802 = vmatprep.subr.mxu0 0.0
        %803 = vmatpush2.xpose.msra.mxu0 0.0
        %804 = vmatprep.subr.mxu0 0.0
        %805 = vmatpush2.xpose.msra.mxu0 0.0
        %806 = vmatprep.mubr.f32.mxu0 0.0
        %807 = vmatmul.mubr.f32.gmra.mxu0 %v734
        %v808 = vpop.f32.mrf.mxu0
        %v809 = vadd.f32 0.0, %v808
        %v810 = vpop.f32.mrf.mxu0
        %811 = vmatprep.mubr.f32.mxu0 0.0
        %812 = vmatmul.mubr.f32.gmra.mxu0 %v736
        %v813 = vpop.f32.mrf.mxu0
        %v814 = vadd.f32 0.0, %v813
        %v815 = vpop.f32.mrf.mxu0
        %816 = vdwg.mxu0
        %v817 = vsel %vm637, %v720, -1e+30
        %v818 = vsel %vm637, %v725, -1e+30
        %v819 = vsel %vm637, %v809, -1e+30
        %v820 = vsel %vm637, %v814, -1e+30
        %vm821 = vcmask 130048
        %v822 = vsel %vm821, %v817, -inf
        %823 = vmax.xlane.f32.xlu0 %v822
        %v824 = vpop.xlane.xlu0 %823
        %v825 = vsel %vm821, %v818, -inf
        %826 = vmax.xlane.f32.xlu0 %v825
        %v827 = vpop.xlane.xlu0 %826
        %v828 = vsel %vm821, %v819, -inf
        %829 = vmax.xlane.f32.xlu0 %v828
        %v830 = vpop.xlane.xlu0 %829
        %v831 = vsel %vm821, %v820, -inf
        %832 = vmax.xlane.f32.xlu0 %v831
        %v833 = vpop.xlane.xlu0 %832
        %v834 = vsub.f32 %v817, %v824
        %v835 = vsub.f32 %v818, %v827
        %v836 = vsub.f32 %v819, %v830
        %v837 = vsub.f32 %v820, %v833
        %v838 = vmul.f32 %v834, 1.442695
        %v839 = vpow.pop %v838
        %v840 = vmul.f32 %v835, 1.442695
        %v841 = vpow.pop %v840
        %v842 = vmul.f32 %v836, 1.442695
        %v843 = vpow.pop %v842
        %v844 = vmul.f32 %v837, 1.442695
        %v845 = vpow.pop %v844
        %v846 = vsel %vm821, %v839, 0.0
        %847 = vadd.xlane.f32.xlu0 %v846
        %v848 = vpop.xlane.xlu0 %847
        %v849 = vsel %vm821, %v841, 0.0
        %850 = vadd.xlane.f32.xlu0 %v849
        %v851 = vpop.xlane.xlu0 %850
        %v852 = vsel %vm821, %v843, 0.0
        %853 = vadd.xlane.f32.xlu0 %v852
        %v854 = vpop.xlane.xlu0 %853
        %v855 = vsel %vm821, %v845, 0.0
        %856 = vadd.xlane.f32.xlu0 %v855
        %v857 = vpop.xlane.xlu0 %856
        %v858 = vrcp.pop %v848
        %v859 = vrcp.pop %v851
        %v860 = vrcp.pop %v854
        %v861 = vrcp.pop %v857
        %v862 = vmul.f32 %v839, %v858
        %v863 = vmul.f32 %v841, %v859
        %v864 = vmul.f32 %v843, %v860
        %v865 = vmul.f32 %v845, %v861
        %866 = vrot.lane.b32.xlu0 %v615, 64
        %v867 = vpop.permute.xlu0 %866
        %868 = vrot.lane.b32.xlu0 %v620, 64
        %v869 = vpop.permute.xlu0 %868
        %v873 = vsel %vm821, %v862, 0
        %v876 = vsel %vm821, %v863, 0
        %878 = vmatprep.subr.mxu0 0.0
        %879 = vmatpush1.msra.mxu0 0.0
        %880 = vmatprep.subr.mxu0 0.0
        %881 = vmatpush1.msra.mxu0 0.0
        %882 = vmatprep.subr.mxu0 0.0
        %883 = vmatpush1.msra.mxu0 0.0
        %884 = vmatprep.subr.mxu0 0.0
        %885 = vmatpush1.msra.mxu0 0.0
        %886 = vmatprep.subr.mxu0 0.0
        %887 = vmatpush1.msra.mxu0 0.0
        %888 = vmatprep.subr.mxu0 0.0
        %889 = vmatpush1.msra.mxu0 0.0
        %890 = vmatprep.subr.mxu0 0.0
        %891 = vmatpush1.msra.mxu0 0.0
        %892 = vmatprep.subr.mxu0 0.0
        %893 = vmatpush1.msra.mxu0 0.0
        %894 = vmatprep.subr.mxu0 0.0
        %895 = vmatpush1.msra.mxu0 0.0
        %896 = vmatprep.subr.mxu0 0.0
        %897 = vmatpush1.msra.mxu0 0.0
        %898 = vmatprep.subr.mxu0 0.0
        %899 = vmatpush1.msra.mxu0 0.0
        %900 = vmatprep.subr.mxu0 0.0
        %901 = vmatpush1.msra.mxu0 0.0
        %902 = vmatprep.subr.mxu0 0.0
        %903 = vmatpush1.msra.mxu0 0.0
        %904 = vmatprep.subr.mxu0 0.0
        %905 = vmatpush1.msra.mxu0 0.0
        %906 = vmatprep.subr.mxu0 0.0
        %907 = vmatpush1.msra.mxu0 %v869
        %908 = vmatprep.subr.mxu0 0.0
        %909 = vmatpush1.msra.mxu0 %v867
        %910 = vmatprep.subr.mxu0 0.0
        %911 = vmatpush2.msra.mxu0 0.0
        %912 = vmatprep.subr.mxu0 0.0
        %913 = vmatpush2.msra.mxu0 0.0
        %914 = vmatprep.subr.mxu0 0.0
        %915 = vmatpush2.msra.mxu0 0.0
        %916 = vmatprep.subr.mxu0 0.0
        %917 = vmatpush2.msra.mxu0 0.0
        %918 = vmatprep.subr.mxu0 0.0
        %919 = vmatpush2.msra.mxu0 0.0
        %920 = vmatprep.subr.mxu0 0.0
        %921 = vmatpush2.msra.mxu0 0.0
        %922 = vmatprep.subr.mxu0 0.0
        %923 = vmatpush2.msra.mxu0 0.0
        %924 = vmatprep.subr.mxu0 0.0
        %925 = vmatpush2.msra.mxu0 0.0
        %926 = vmatprep.subr.mxu0 0.0
        %927 = vmatpush2.msra.mxu0 0.0
        %928 = vmatprep.subr.mxu0 0.0
        %929 = vmatpush2.msra.mxu0 0.0
        %930 = vmatprep.subr.mxu0 0.0
        %931 = vmatpush2.msra.mxu0 0.0
        %932 = vmatprep.subr.mxu0 0.0
        %933 = vmatpush2.msra.mxu0 0.0
        %934 = vmatprep.subr.mxu0 0.0
        %935 = vmatpush2.msra.mxu0 0.0
        %936 = vmatprep.subr.mxu0 0.0
        %937 = vmatpush2.msra.mxu0 0.0
        %938 = vmatprep.subr.mxu0 0.0
        %939 = vmatpush2.msra.mxu0 0.0
        %940 = vmatprep.subr.mxu0 0.0
        %941 = vmatpush2.msra.mxu0 0.0
        %942 = vmatprep.mubr.f32.mxu0 0.0
        %943 = vmatmul.mubr.f32.gmra.mxu0 %v873
        %v944 = vpop.f32.mrf.mxu0
        %v945 = vadd.f32 0.0, %v944
        %v946 = vpop.f32.mrf.mxu0
        %947 = vmatprep.mubr.f32.mxu0 0.0
        %948 = vmatmul.mubr.f32.gmra.mxu0 %v876
        %v949 = vpop.f32.mrf.mxu0
        %v950 = vadd.f32 0.0, %v949
        %v951 = vpop.f32.mrf.mxu0
        %952 = vdwg.mxu0
        %953 = vrot.lane.b32.xlu0 %v625, 64
        %v954 = vpop.permute.xlu0 %953
        %955 = vrot.lane.b32.xlu0 %v630, 64
        %v956 = vpop.permute.xlu0 %955
        %v960 = vsel %vm821, %v864, 0
        %v963 = vsel %vm821, %v865, 0
        %965 = vmatprep.subr.mxu0 0.0
        %966 = vmatpush1.msra.mxu0 0.0
        %967 = vmatprep.subr.mxu0 0.0
        %968 = vmatpush1.msra.mxu0 0.0
        %969 = vmatprep.subr.mxu0 0.0
        %970 = vmatpush1.msra.mxu0 0.0
        %971 = vmatprep.subr.mxu0 0.0
        %972 = vmatpush1.msra.mxu0 0.0
        %973 = vmatprep.subr.mxu0 0.0
        %974 = vmatpush1.msra.mxu0 0.0
        %975 = vmatprep.subr.mxu0 0.0
        %976 = vmatpush1.msra.mxu0 0.0
        %977 = vmatprep.subr.mxu0 0.0
        %978 = vmatpush1.msra.mxu0 0.0
        %979 = vmatprep.subr.mxu0 0.0
        %980 = vmatpush1.msra.mxu0 0.0
        %981 = vmatprep.subr.mxu0 0.0
        %982 = vmatpush1.msra.mxu0 0.0
        %983 = vmatprep.subr.mxu0 0.0
        %984 = vmatpush1.msra.mxu0 0.0
        %985 = vmatprep.subr.mxu0 0.0
        %986 = vmatpush1.msra.mxu0 0.0
        %987 = vmatprep.subr.mxu0 0.0
        %988 = vmatpush1.msra.mxu0 0.0
        %989 = vmatprep.subr.mxu0 0.0
        %990 = vmatpush1.msra.mxu0 0.0
        %991 = vmatprep.subr.mxu0 0.0
        %992 = vmatpush1.msra.mxu0 0.0
        %993 = vmatprep.subr.mxu0 0.0
        %994 = vmatpush1.msra.mxu0 %v956
        %995 = vmatprep.subr.mxu0 0.0
        %996 = vmatpush1.msra.mxu0 %v954
        %997 = vmatprep.subr.mxu0 0.0
        %998 = vmatpush2.msra.mxu0 0.0
        %999 = vmatprep.subr.mxu0 0.0
        %1000 = vmatpush2.msra.mxu0 0.0
        %1001 = vmatprep.subr.mxu0 0.0
        %1002 = vmatpush2.msra.mxu0 0.0
        %1003 = vmatprep.subr.mxu0 0.0
        %1004 = vmatpush2.msra.mxu0 0.0
        %1005 = vmatprep.subr.mxu0 0.0
        %1006 = vmatpush2.msra.mxu0 0.0
        %1007 = vmatprep.subr.mxu0 0.0
        %1008 = vmatpush2.msra.mxu0 0.0
        %1009 = vmatprep.subr.mxu0 0.0
        %1010 = vmatpush2.msra.mxu0 0.0
        %1011 = vmatprep.subr.mxu0 0.0
        %1012 = vmatpush2.msra.mxu0 0.0
        %1013 = vmatprep.subr.mxu0 0.0
        %1014 = vmatpush2.msra.mxu0 0.0
        %1015 = vmatprep.subr.mxu0 0.0
        %1016 = vmatpush2.msra.mxu0 0.0
        %1017 = vmatprep.subr.mxu0 0.0
        %1018 = vmatpush2.msra.mxu0 0.0
        %1019 = vmatprep.subr.mxu0 0.0
        %1020 = vmatpush2.msra.mxu0 0.0
        %1021 = vmatprep.subr.mxu0 0.0
        %1022 = vmatpush2.msra.mxu0 0.0
        %1023 = vmatprep.subr.mxu0 0.0
        %1024 = vmatpush2.msra.mxu0 0.0
        %1025 = vmatprep.subr.mxu0 0.0
        %1026 = vmatpush2.msra.mxu0 0.0
        %1027 = vmatprep.subr.mxu0 0.0
        %1028 = vmatpush2.msra.mxu0 0.0
        %1029 = vmatprep.mubr.f32.mxu0 0.0
        %1030 = vmatmul.mubr.f32.gmra.mxu0 %v960
        %v1031 = vpop.f32.mrf.mxu0
        %v1032 = vadd.f32 0.0, %v1031
        %v1033 = vpop.f32.mrf.mxu0
        %1034 = vmatprep.mubr.f32.mxu0 0.0
        %1035 = vmatmul.mubr.f32.gmra.mxu0 %v963
        %v1036 = vpop.f32.mrf.mxu0
        %v1037 = vadd.f32 0.0, %v1036
        %v1038 = vpop.f32.mrf.mxu0
        %1039 = vdwg.mxu0
        %1040 = vst.msk [vmem:[#allocation2] sm:$0xff] %vm644, %v945
        %1041 = vst.msk [vmem:[#allocation2 + $0x8] sm:$0xff] %vm644, %v950
        %1042 = vst.msk [vmem:[#allocation2 + $0x10] sm:$0xff] %vm644, %v1032
        %1043 = vst.msk [vmem:[#allocation2 + $0x18] sm:$0xff] %vm644, %v1037
        %1044 = vrot.lane.b32.xlu0 %v615, 120
        %v1045 = vpop.permute.xlu0 %1044
        %1046 = vrot.lane.b32.xlu0 %v620, 120
        %v1047 = vpop.permute.xlu0 %1046
        %1048 = vrot.lane.b32.xlu0 %v615, 88
        %v1049 = vpop.permute.xlu0 %1048
        %1050 = vrot.lane.b32.xlu0 %v620, 88
        %v1051 = vpop.permute.xlu0 %1050
        %v1052 = vsel %vm644, %v1045, 0
        %v1054 = vsel %vm644, %v1047, 0
        %v1056 = vsel %vm644, %v1049, 0
        %v1058 = vsel %vm644, %v1051, 0
        %1060 = vmatprep.subr.mxu0 0.0
        %1061 = vmatpush1.xpose.msra.mxu0 0.0
        %1062 = vmatprep.subr.mxu0 0.0
        %1063 = vmatpush1.xpose.msra.mxu0 0.0
        %1064 = vmatprep.subr.mxu0 0.0
        %1065 = vmatpush1.xpose.msra.mxu0 0.0
        %1066 = vmatprep.subr.mxu0 0.0
        %1067 = vmatpush1.xpose.msra.mxu0 0.0
        %1068 = vmatprep.subr.mxu0 0.0
        %1069 = vmatpush1.xpose.msra.mxu0 0.0
        %1070 = vmatprep.subr.mxu0 0.0
        %1071 = vmatpush1.xpose.msra.mxu0 0.0
        %1072 = vmatprep.subr.mxu0 0.0
        %1073 = vmatpush1.xpose.msra.mxu0 0.0
        %1074 = vmatprep.subr.mxu0 0.0
        %1075 = vmatpush1.xpose.msra.mxu0 0.0
        %1076 = vmatprep.subr.mxu0 0.0
        %1077 = vmatpush1.xpose.msra.mxu0 0.0
        %1078 = vmatprep.subr.mxu0 0.0
        %1079 = vmatpush1.xpose.msra.mxu0 0.0
        %1080 = vmatprep.subr.mxu0 0.0
        %1081 = vmatpush1.xpose.msra.mxu0 0.0
        %1082 = vmatprep.subr.mxu0 0.0
        %1083 = vmatpush1.xpose.msra.mxu0 0.0
        %1084 = vmatprep.subr.mxu0 0.0
        %1085 = vmatpush1.xpose.msra.mxu0 0.0
        %1086 = vmatprep.subr.mxu0 0.0
        %1087 = vmatpush1.xpose.msra.mxu0 0.0
        %1088 = vmatprep.subr.mxu0 0.0
        %1089 = vmatpush1.xpose.msra.mxu0 %v1058
        %1090 = vmatprep.subr.mxu0 0.0
        %1091 = vmatpush1.xpose.msra.mxu0 %v1056
        %1092 = vmatprep.subr.mxu0 0.0
        %1093 = vmatpush2.xpose.msra.mxu0 0.0
        %1094 = vmatprep.subr.mxu0 0.0
        %1095 = vmatpush2.xpose.msra.mxu0 0.0
        %1096 = vmatprep.subr.mxu0 0.0
        %1097 = vmatpush2.xpose.msra.mxu0 0.0
        %1098 = vmatprep.subr.mxu0 0.0
        %1099 = vmatpush2.xpose.msra.mxu0 0.0
        %1100 = vmatprep.subr.mxu0 0.0
        %1101 = vmatpush2.xpose.msra.mxu0 0.0
        %1102 = vmatprep.subr.mxu0 0.0
        %1103 = vmatpush2.xpose.msra.mxu0 0.0
        %1104 = vmatprep.subr.mxu0 0.0
        %1105 = vmatpush2.xpose.msra.mxu0 0.0
        %1106 = vmatprep.subr.mxu0 0.0
        %1107 = vmatpush2.xpose.msra.mxu0 0.0
        %1108 = vmatprep.subr.mxu0 0.0
        %1109 = vmatpush2.xpose.msra.mxu0 0.0
        %1110 = vmatprep.subr.mxu0 0.0
        %1111 = vmatpush2.xpose.msra.mxu0 0.0
        %1112 = vmatprep.subr.mxu0 0.0
        %1113 = vmatpush2.xpose.msra.mxu0 0.0
        %1114 = vmatprep.subr.mxu0 0.0
        %1115 = vmatpush2.xpose.msra.mxu0 0.0
        %1116 = vmatprep.subr.mxu0 0.0
        %1117 = vmatpush2.xpose.msra.mxu0 0.0
        %1118 = vmatprep.subr.mxu0 0.0
        %1119 = vmatpush2.xpose.msra.mxu0 0.0
        %1120 = vmatprep.subr.mxu0 0.0
        %1121 = vmatpush2.xpose.msra.mxu0 0.0
        %1122 = vmatprep.subr.mxu0 0.0
        %1123 = vmatpush2.xpose.msra.mxu0 0.0
        %1124 = vmatprep.mubr.f32.mxu0 0.0
        %1125 = vmatmul.mubr.f32.gmra.mxu0 %v1052
        %v1126 = vpop.f32.mrf.mxu0
        %v1127 = vadd.f32 0.0, %v1126
        %v1128 = vpop.f32.mrf.mxu0
        %1129 = vmatprep.mubr.f32.mxu0 0.0
        %1130 = vmatmul.mubr.f32.gmra.mxu0 %v1054
        %v1131 = vpop.f32.mrf.mxu0
        %v1132 = vadd.f32 0.0, %v1131
        %v1133 = vpop.f32.mrf.mxu0
        %1134 = vdwg.mxu0
        %1135 = vrot.lane.b32.xlu0 %v625, 120
        %v1136 = vpop.permute.xlu0 %1135
        %1137 = vrot.lane.b32.xlu0 %v630, 120
        %v1138 = vpop.permute.xlu0 %1137
        %1139 = vrot.lane.b32.xlu0 %v625, 88
        %v1140 = vpop.permute.xlu0 %1139
        %1141 = vrot.lane.b32.xlu0 %v630, 88
        %v1142 = vpop.permute.xlu0 %1141
        %v1143 = vsel %vm644, %v1136, 0
        %v1145 = vsel %vm644, %v1138, 0
        %v1147 = vsel %vm644, %v1140, 0
        %v1149 = vsel %vm644, %v1142, 0
        %1151 = vmatprep.subr.mxu0 0.0
        %1152 = vmatpush1.xpose.msra.mxu0 0.0
        %1153 = vmatprep.subr.mxu0 0.0
        %1154 = vmatpush1.xpose.msra.mxu0 0.0
        %1155 = vmatprep.subr.mxu0 0.0
        %1156 = vmatpush1.xpose.msra.mxu0 0.0
        %1157 = vmatprep.subr.mxu0 0.0
        %1158 = vmatpush1.xpose.msra.mxu0 0.0
        %1159 = vmatprep.subr.mxu0 0.0
        %1160 = vmatpush1.xpose.msra.mxu0 0.0
        %1161 = vmatprep.subr.mxu0 0.0
        %1162 = vmatpush1.xpose.msra.mxu0 0.0
        %1163 = vmatprep.subr.mxu0 0.0
        %1164 = vmatpush1.xpose.msra.mxu0 0.0
        %1165 = vmatprep.subr.mxu0 0.0
        %1166 = vmatpush1.xpose.msra.mxu0 0.0
        %1167 = vmatprep.subr.mxu0 0.0
        %1168 = vmatpush1.xpose.msra.mxu0 0.0
        %1169 = vmatprep.subr.mxu0 0.0
        %1170 = vmatpush1.xpose.msra.mxu0 0.0
        %1171 = vmatprep.subr.mxu0 0.0
        %1172 = vmatpush1.xpose.msra.mxu0 0.0
        %1173 = vmatprep.subr.mxu0 0.0
        %1174 = vmatpush1.xpose.msra.mxu0 0.0
        %1175 = vmatprep.subr.mxu0 0.0
        %1176 = vmatpush1.xpose.msra.mxu0 0.0
        %1177 = vmatprep.subr.mxu0 0.0
        %1178 = vmatpush1.xpose.msra.mxu0 0.0
        %1179 = vmatprep.subr.mxu0 0.0
        %1180 = vmatpush1.xpose.msra.mxu0 %v1149
        %1181 = vmatprep.subr.mxu0 0.0
        %1182 = vmatpush1.xpose.msra.mxu0 %v1147
        %1183 = vmatprep.subr.mxu0 0.0
        %1184 = vmatpush2.xpose.msra.mxu0 0.0
        %1185 = vmatprep.subr.mxu0 0.0
        %1186 = vmatpush2.xpose.msra.mxu0 0.0
        %1187 = vmatprep.subr.mxu0 0.0
        %1188 = vmatpush2.xpose.msra.mxu0 0.0
        %1189 = vmatprep.subr.mxu0 0.0
        %1190 = vmatpush2.xpose.msra.mxu0 0.0
        %1191 = vmatprep.subr.mxu0 0.0
        %1192 = vmatpush2.xpose.msra.mxu0 0.0
        %1193 = vmatprep.subr.mxu0 0.0
        %1194 = vmatpush2.xpose.msra.mxu0 0.0
        %1195 = vmatprep.subr.mxu0 0.0
        %1196 = vmatpush2.xpose.msra.mxu0 0.0
        %1197 = vmatprep.subr.mxu0 0.0
        %1198 = vmatpush2.xpose.msra.mxu0 0.0
        %1199 = vmatprep.subr.mxu0 0.0
        %1200 = vmatpush2.xpose.msra.mxu0 0.0
        %1201 = vmatprep.subr.mxu0 0.0
        %1202 = vmatpush2.xpose.msra.mxu0 0.0
        %1203 = vmatprep.subr.mxu0 0.0
        %1204 = vmatpush2.xpose.msra.mxu0 0.0
        %1205 = vmatprep.subr.mxu0 0.0
        %1206 = vmatpush2.xpose.msra.mxu0 0.0
        %1207 = vmatprep.subr.mxu0 0.0
        %1208 = vmatpush2.xpose.msra.mxu0 0.0
        %1209 = vmatprep.subr.mxu0 0.0
        %1210 = vmatpush2.xpose.msra.mxu0 0.0
        %1211 = vmatprep.subr.mxu0 0.0
        %1212 = vmatpush2.xpose.msra.mxu0 0.0
        %1213 = vmatprep.subr.mxu0 0.0
        %1214 = vmatpush2.xpose.msra.mxu0 0.0
        %1215 = vmatprep.mubr.f32.mxu0 0.0
        %1216 = vmatmul.mubr.f32.gmra.mxu0 %v1143
        %v1217 = vpop.f32.mrf.mxu0
        %v1218 = vadd.f32 0.0, %v1217
        %v1219 = vpop.f32.mrf.mxu0
        %1220 = vmatprep.mubr.f32.mxu0 0.0
        %1221 = vmatmul.mubr.f32.gmra.mxu0 %v1145
        %v1222 = vpop.f32.mrf.mxu0
        %v1223 = vadd.f32 0.0, %v1222
        %v1224 = vpop.f32.mrf.mxu0
        %1225 = vdwg.mxu0
        %v1226 = vsel %vm637, %v1127, -1e+30
        %v1227 = vsel %vm637, %v1132, -1e+30
        %v1228 = vsel %vm637, %v1218, -1e+30
        %v1229 = vsel %vm637, %v1223, -1e+30
        %v1230 = vsel %vm821, %v1226, -inf
        %1231 = vmax.xlane.f32.xlu0 %v1230
        %v1232 = vpop.xlane.xlu0 %1231
        %v1233 = vsel %vm821, %v1227, -inf
        %1234 = vmax.xlane.f32.xlu0 %v1233
        %v1235 = vpop.xlane.xlu0 %1234
        %v1236 = vsel %vm821, %v1228, -inf
        %1237 = vmax.xlane.f32.xlu0 %v1236
        %v1238 = vpop.xlane.xlu0 %1237
        %v1239 = vsel %vm821, %v1229, -inf
        %1240 = vmax.xlane.f32.xlu0 %v1239
        %v1241 = vpop.xlane.xlu0 %1240
        %v1242 = vsub.f32 %v1226, %v1232
        %v1243 = vsub.f32 %v1227, %v1235
        %v1244 = vsub.f32 %v1228, %v1238
        %v1245 = vsub.f32 %v1229, %v1241
        %v1246 = vmul.f32 %v1242, 1.442695
        %v1247 = vpow.pop %v1246
        %v1248 = vmul.f32 %v1243, 1.442695
        %v1249 = vpow.pop %v1248
        %v1250 = vmul.f32 %v1244, 1.442695
        %v1251 = vpow.pop %v1250
        %v1252 = vmul.f32 %v1245, 1.442695
        %v1253 = vpow.pop %v1252
        %v1254 = vsel %vm821, %v1247, 0.0
        %1255 = vadd.xlane.f32.xlu0 %v1254
        %v1256 = vpop.xlane.xlu0 %1255
        %v1257 = vsel %vm821, %v1249, 0.0
        %1258 = vadd.xlane.f32.xlu0 %v1257
        %v1259 = vpop.xlane.xlu0 %1258
        %v1260 = vsel %vm821, %v1251, 0.0
        %1261 = vadd.xlane.f32.xlu0 %v1260
        %v1262 = vpop.xlane.xlu0 %1261
        %v1263 = vsel %vm821, %v1253, 0.0
        %1264 = vadd.xlane.f32.xlu0 %v1263
        %v1265 = vpop.xlane.xlu0 %1264
        %v1266 = vrcp.pop %v1256
        %v1267 = vrcp.pop %v1259
        %v1268 = vrcp.pop %v1262
        %v1269 = vrcp.pop %v1265
        %v1270 = vmul.f32 %v1247, %v1266
        %v1271 = vmul.f32 %v1249, %v1267
        %v1272 = vmul.f32 %v1251, %v1268
        %v1273 = vmul.f32 %v1253, %v1269
        %1274 = vrot.lane.b32.xlu0 %v615, 56
        %v1275 = vpop.permute.xlu0 %1274
        %1276 = vrot.lane.b32.xlu0 %v620, 56
        %v1277 = vpop.permute.xlu0 %1276
        %v1281 = vsel %vm821, %v1270, 0
        %v1284 = vsel %vm821, %v1271, 0
        %1286 = vmatprep.subr.mxu0 0.0
        %1287 = vmatpush1.msra.mxu0 0.0
        %1288 = vmatprep.subr.mxu0 0.0
        %1289 = vmatpush1.msra.mxu0 0.0
        %1290 = vmatprep.subr.mxu0 0.0
        %1291 = vmatpush1.msra.mxu0 0.0
        %1292 = vmatprep.subr.mxu0 0.0
        %1293 = vmatpush1.msra.mxu0 0.0
        %1294 = vmatprep.subr.mxu0 0.0
        %1295 = vmatpush1.msra.mxu0 0.0
        %1296 = vmatprep.subr.mxu0 0.0
        %1297 = vmatpush1.msra.mxu0 0.0
        %1298 = vmatprep.subr.mxu0 0.0
        %1299 = vmatpush1.msra.mxu0 0.0
        %1300 = vmatprep.subr.mxu0 0.0
        %1301 = vmatpush1.msra.mxu0 0.0
        %1302 = vmatprep.subr.mxu0 0.0
        %1303 = vmatpush1.msra.mxu0 0.0
        %1304 = vmatprep.subr.mxu0 0.0
        %1305 = vmatpush1.msra.mxu0 0.0
        %1306 = vmatprep.subr.mxu0 0.0
        %1307 = vmatpush1.msra.mxu0 0.0
        %1308 = vmatprep.subr.mxu0 0.0
        %1309 = vmatpush1.msra.mxu0 0.0
        %1310 = vmatprep.subr.mxu0 0.0
        %1311 = vmatpush1.msra.mxu0 0.0
        %1312 = vmatprep.subr.mxu0 0.0
        %1313 = vmatpush1.msra.mxu0 0.0
        %1314 = vmatprep.subr.mxu0 0.0
        %1315 = vmatpush1.msra.mxu0 %v1277
        %1316 = vmatprep.subr.mxu0 0.0
        %1317 = vmatpush1.msra.mxu0 %v1275
        %1318 = vmatprep.subr.mxu0 0.0
        %1319 = vmatpush2.msra.mxu0 0.0
        %1320 = vmatprep.subr.mxu0 0.0
        %1321 = vmatpush2.msra.mxu0 0.0
        %1322 = vmatprep.subr.mxu0 0.0
        %1323 = vmatpush2.msra.mxu0 0.0
        %1324 = vmatprep.subr.mxu0 0.0
        %1325 = vmatpush2.msra.mxu0 0.0
        %1326 = vmatprep.subr.mxu0 0.0
        %1327 = vmatpush2.msra.mxu0 0.0
        %1328 = vmatprep.subr.mxu0 0.0
        %1329 = vmatpush2.msra.mxu0 0.0
        %1330 = vmatprep.subr.mxu0 0.0
        %1331 = vmatpush2.msra.mxu0 0.0
        %1332 = vmatprep.subr.mxu0 0.0
        %1333 = vmatpush2.msra.mxu0 0.0
        %1334 = vmatprep.subr.mxu0 0.0
        %1335 = vmatpush2.msra.mxu0 0.0
        %1336 = vmatprep.subr.mxu0 0.0
        %1337 = vmatpush2.msra.mxu0 0.0
        %1338 = vmatprep.subr.mxu0 0.0
        %1339 = vmatpush2.msra.mxu0 0.0
        %1340 = vmatprep.subr.mxu0 0.0
        %1341 = vmatpush2.msra.mxu0 0.0
        %1342 = vmatprep.subr.mxu0 0.0
        %1343 = vmatpush2.msra.mxu0 0.0
        %1344 = vmatprep.subr.mxu0 0.0
        %1345 = vmatpush2.msra.mxu0 0.0
        %1346 = vmatprep.subr.mxu0 0.0
        %1347 = vmatpush2.msra.mxu0 0.0
        %1348 = vmatprep.subr.mxu0 0.0
        %1349 = vmatpush2.msra.mxu0 0.0
        %1350 = vmatprep.mubr.f32.mxu0 0.0
        %1351 = vmatmul.mubr.f32.gmra.mxu0 %v1281
        %v1352 = vpop.f32.mrf.mxu0
        %v1353 = vadd.f32 0.0, %v1352
        %v1354 = vpop.f32.mrf.mxu0
        %1355 = vmatprep.mubr.f32.mxu0 0.0
        %1356 = vmatmul.mubr.f32.gmra.mxu0 %v1284
        %v1357 = vpop.f32.mrf.mxu0
        %v1358 = vadd.f32 0.0, %v1357
        %v1359 = vpop.f32.mrf.mxu0
        %1360 = vdwg.mxu0
        %1361 = vrot.lane.b32.xlu0 %v625, 56
        %v1362 = vpop.permute.xlu0 %1361
        %1363 = vrot.lane.b32.xlu0 %v630, 56
        %v1364 = vpop.permute.xlu0 %1363
        %v1368 = vsel %vm821, %v1272, 0
        %v1371 = vsel %vm821, %v1273, 0
        %1373 = vmatprep.subr.mxu0 0.0
        %1374 = vmatpush1.msra.mxu0 0.0
        %1375 = vmatprep.subr.mxu0 0.0
        %1376 = vmatpush1.msra.mxu0 0.0
        %1377 = vmatprep.subr.mxu0 0.0
        %1378 = vmatpush1.msra.mxu0 0.0
        %1379 = vmatprep.subr.mxu0 0.0
        %1380 = vmatpush1.msra.mxu0 0.0
        %1381 = vmatprep.subr.mxu0 0.0
        %1382 = vmatpush1.msra.mxu0 0.0
        %1383 = vmatprep.subr.mxu0 0.0
        %1384 = vmatpush1.msra.mxu0 0.0
        %1385 = vmatprep.subr.mxu0 0.0
        %1386 = vmatpush1.msra.mxu0 0.0
        %1387 = vmatprep.subr.mxu0 0.0
        %1388 = vmatpush1.msra.mxu0 0.0
        %1389 = vmatprep.subr.mxu0 0.0
        %1390 = vmatpush1.msra.mxu0 0.0
        %1391 = vmatprep.subr.mxu0 0.0
        %1392 = vmatpush1.msra.mxu0 0.0
        %1393 = vmatprep.subr.mxu0 0.0
        %1394 = vmatpush1.msra.mxu0 0.0
        %1395 = vmatprep.subr.mxu0 0.0
        %1396 = vmatpush1.msra.mxu0 0.0
        %1397 = vmatprep.subr.mxu0 0.0
        %1398 = vmatpush1.msra.mxu0 0.0
        %1399 = vmatprep.subr.mxu0 0.0
        %1400 = vmatpush1.msra.mxu0 0.0
        %1401 = vmatprep.subr.mxu0 0.0
        %1402 = vmatpush1.msra.mxu0 %v1364
        %1403 = vmatprep.subr.mxu0 0.0
        %1404 = vmatpush1.msra.mxu0 %v1362
        %1405 = vmatprep.subr.mxu0 0.0
        %1406 = vmatpush2.msra.mxu0 0.0
        %1407 = vmatprep.subr.mxu0 0.0
        %1408 = vmatpush2.msra.mxu0 0.0
        %1409 = vmatprep.subr.mxu0 0.0
        %1410 = vmatpush2.msra.mxu0 0.0
        %1411 = vmatprep.subr.mxu0 0.0
        %1412 = vmatpush2.msra.mxu0 0.0
        %1413 = vmatprep.subr.mxu0 0.0
        %1414 = vmatpush2.msra.mxu0 0.0
        %1415 = vmatprep.subr.mxu0 0.0
        %1416 = vmatpush2.msra.mxu0 0.0
        %1417 = vmatprep.subr.mxu0 0.0
        %1418 = vmatpush2.msra.mxu0 0.0
        %1419 = vmatprep.subr.mxu0 0.0
        %1420 = vmatpush2.msra.mxu0 0.0
        %1421 = vmatprep.subr.mxu0 0.0
        %1422 = vmatpush2.msra.mxu0 0.0
        %1423 = vmatprep.subr.mxu0 0.0
        %1424 = vmatpush2.msra.mxu0 0.0
        %1425 = vmatprep.subr.mxu0 0.0
        %1426 = vmatpush2.msra.mxu0 0.0
        %1427 = vmatprep.subr.mxu0 0.0
        %1428 = vmatpush2.msra.mxu0 0.0
        %1429 = vmatprep.subr.mxu0 0.0
        %1430 = vmatpush2.msra.mxu0 0.0
        %1431 = vmatprep.subr.mxu0 0.0
        %1432 = vmatpush2.msra.mxu0 0.0
        %1433 = vmatprep.subr.mxu0 0.0
        %1434 = vmatpush2.msra.mxu0 0.0
        %1435 = vmatprep.subr.mxu0 0.0
        %1436 = vmatpush2.msra.mxu0 0.0
        %1437 = vmatprep.mubr.f32.mxu0 0.0
        %1438 = vmatmul.mubr.f32.gmra.mxu0 %v1368
        %v1439 = vpop.f32.mrf.mxu0
        %v1440 = vadd.f32 0.0, %v1439
        %v1441 = vpop.f32.mrf.mxu0
        %1442 = vmatprep.mubr.f32.mxu0 0.0
        %1443 = vmatmul.mubr.f32.gmra.mxu0 %v1371
        %v1444 = vpop.f32.mrf.mxu0
        %v1445 = vadd.f32 0.0, %v1444
        %v1446 = vpop.f32.mrf.mxu0
        %1447 = vdwg.mxu0
        %1452 = vrot.lane.b32.xlu0 %v1353, 8
        %v1453 = vpop.permute.xlu0 %1452
        %1454 = vrot.lane.b32.xlu0 %v1358, 8
        %v1455 = vpop.permute.xlu0 %1454
        %1456 = vrot.lane.b32.xlu0 %v1440, 8
        %v1457 = vpop.permute.xlu0 %1456
        %1458 = vrot.lane.b32.xlu0 %v1445, 8
        %v1459 = vpop.permute.xlu0 %1458
        %vm1464 = vcmask 130112
        %1465 = vst.msk [vmem:[#allocation2] sm:$0xff] %vm1464, %v1453
        %1466 = vst.msk [vmem:[#allocation2 + $0x8] sm:$0xff] %vm1464, %v1455
        %1467 = vst.msk [vmem:[#allocation2 + $0x10] sm:$0xff] %vm1464, %v1457
        %1468 = vst.msk [vmem:[#allocation2 + $0x18] sm:$0xff] %vm1464, %v1459
        %1469 = vrot.lane.b32.xlu0 %v615, 112
        %v1470 = vpop.permute.xlu0 %1469
        %1471 = vrot.lane.b32.xlu0 %v620, 112
        %v1472 = vpop.permute.xlu0 %1471
        %1473 = vrot.lane.b32.xlu0 %v615, 80
        %v1474 = vpop.permute.xlu0 %1473
        %1475 = vrot.lane.b32.xlu0 %v620, 80
        %v1476 = vpop.permute.xlu0 %1475
        %v1477 = vsel %vm644, %v1470, 0
        %v1479 = vsel %vm644, %v1472, 0
        %v1481 = vsel %vm644, %v1474, 0
        %v1483 = vsel %vm644, %v1476, 0
        %1485 = vmatprep.subr.mxu0 0.0
        %1486 = vmatpush1.xpose.msra.mxu0 0.0
        %1487 = vmatprep.subr.mxu0 0.0
        %1488 = vmatpush1.xpose.msra.mxu0 0.0
        %1489 = vmatprep.subr.mxu0 0.0
        %1490 = vmatpush1.xpose.msra.mxu0 0.0
        %1491 = vmatprep.subr.mxu0 0.0
        %1492 = vmatpush1.xpose.msra.mxu0 0.0
        %1493 = vmatprep.subr.mxu0 0.0
        %1494 = vmatpush1.xpose.msra.mxu0 0.0
        %1495 = vmatprep.subr.mxu0 0.0
        %1496 = vmatpush1.xpose.msra.mxu0 0.0
        %1497 = vmatprep.subr.mxu0 0.0
        %1498 = vmatpush1.xpose.msra.mxu0 0.0
        %1499 = vmatprep.subr.mxu0 0.0
        %1500 = vmatpush1.xpose.msra.mxu0 0.0
        %1501 = vmatprep.subr.mxu0 0.0
        %1502 = vmatpush1.xpose.msra.mxu0 0.0
        %1503 = vmatprep.subr.mxu0 0.0
        %1504 = vmatpush1.xpose.msra.mxu0 0.0
        %1505 = vmatprep.subr.mxu0 0.0
        %1506 = vmatpush1.xpose.msra.mxu0 0.0
        %1507 = vmatprep.subr.mxu0 0.0
        %1508 = vmatpush1.xpose.msra.mxu0 0.0
        %1509 = vmatprep.subr.mxu0 0.0
        %1510 = vmatpush1.xpose.msra.mxu0 0.0
        %1511 = vmatprep.subr.mxu0 0.0
        %1512 = vmatpush1.xpose.msra.mxu0 0.0
        %1513 = vmatprep.subr.mxu0 0.0
        %1514 = vmatpush1.xpose.msra.mxu0 %v1483
        %1515 = vmatprep.subr.mxu0 0.0
        %1516 = vmatpush1.xpose.msra.mxu0 %v1481
        %1517 = vmatprep.subr.mxu0 0.0
        %1518 = vmatpush2.xpose.msra.mxu0 0.0
        %1519 = vmatprep.subr.mxu0 0.0
        %1520 = vmatpush2.xpose.msra.mxu0 0.0
        %1521 = vmatprep.subr.mxu0 0.0
        %1522 = vmatpush2.xpose.msra.mxu0 0.0
        %1523 = vmatprep.subr.mxu0 0.0
        %1524 = vmatpush2.xpose.msra.mxu0 0.0
        %1525 = vmatprep.subr.mxu0 0.0
        %1526 = vmatpush2.xpose.msra.mxu0 0.0
        %1527 = vmatprep.subr.mxu0 0.0
        %1528 = vmatpush2.xpose.msra.mxu0 0.0
        %1529 = vmatprep.subr.mxu0 0.0
        %1530 = vmatpush2.xpose.msra.mxu0 0.0
        %1531 = vmatprep.subr.mxu0 0.0
        %1532 = vmatpush2.xpose.msra.mxu0 0.0
        %1533 = vmatprep.subr.mxu0 0.0
        %1534 = vmatpush2.xpose.msra.mxu0 0.0
        %1535 = vmatprep.subr.mxu0 0.0
        %1536 = vmatpush2.xpose.msra.mxu0 0.0
        %1537 = vmatprep.subr.mxu0 0.0
        %1538 = vmatpush2.xpose.msra.mxu0 0.0
        %1539 = vmatprep.subr.mxu0 0.0
        %1540 = vmatpush2.xpose.msra.mxu0 0.0
        %1541 = vmatprep.subr.mxu0 0.0
        %1542 = vmatpush2.xpose.msra.mxu0 0.0
        %1543 = vmatprep.subr.mxu0 0.0
        %1544 = vmatpush2.xpose.msra.mxu0 0.0
        %1545 = vmatprep.subr.mxu0 0.0
        %1546 = vmatpush2.xpose.msra.mxu0 0.0
        %1547 = vmatprep.subr.mxu0 0.0
        %1548 = vmatpush2.xpose.msra.mxu0 0.0
        %1549 = vmatprep.mubr.f32.mxu0 0.0
        %1550 = vmatmul.mubr.f32.gmra.mxu0 %v1477
        %v1551 = vpop.f32.mrf.mxu0
        %v1552 = vadd.f32 0.0, %v1551
        %v1553 = vpop.f32.mrf.mxu0
        %1554 = vmatprep.mubr.f32.mxu0 0.0
        %1555 = vmatmul.mubr.f32.gmra.mxu0 %v1479
        %v1556 = vpop.f32.mrf.mxu0
        %v1557 = vadd.f32 0.0, %v1556
        %v1558 = vpop.f32.mrf.mxu0
        %1559 = vdwg.mxu0
        %1560 = vrot.lane.b32.xlu0 %v625, 112
        %v1561 = vpop.permute.xlu0 %1560
        %1562 = vrot.lane.b32.xlu0 %v630, 112
        %v1563 = vpop.permute.xlu0 %1562
        %1564 = vrot.lane.b32.xlu0 %v625, 80
        %v1565 = vpop.permute.xlu0 %1564
        %1566 = vrot.lane.b32.xlu0 %v630, 80
        %v1567 = vpop.permute.xlu0 %1566
        %v1568 = vsel %vm644, %v1561, 0
        %v1570 = vsel %vm644, %v1563, 0
        %v1572 = vsel %vm644, %v1565, 0
        %v1574 = vsel %vm644, %v1567, 0
        %1576 = vmatprep.subr.mxu0 0.0
        %1577 = vmatpush1.xpose.msra.mxu0 0.0
        %1578 = vmatprep.subr.mxu0 0.0
        %1579 = vmatpush1.xpose.msra.mxu0 0.0
        %1580 = vmatprep.subr.mxu0 0.0
        %1581 = vmatpush1.xpose.msra.mxu0 0.0
        %1582 = vmatprep.subr.mxu0 0.0
        %1583 = vmatpush1.xpose.msra.mxu0 0.0
        %1584 = vmatprep.subr.mxu0 0.0
        %1585 = vmatpush1.xpose.msra.mxu0 0.0
        %1586 = vmatprep.subr.mxu0 0.0
        %1587 = vmatpush1.xpose.msra.mxu0 0.0
        %1588 = vmatprep.subr.mxu0 0.0
        %1589 = vmatpush1.xpose.msra.mxu0 0.0
        %1590 = vmatprep.subr.mxu0 0.0
        %1591 = vmatpush1.xpose.msra.mxu0 0.0
        %1592 = vmatprep.subr.mxu0 0.0
        %1593 = vmatpush1.xpose.msra.mxu0 0.0
        %1594 = vmatprep.subr.mxu0 0.0
        %1595 = vmatpush1.xpose.msra.mxu0 0.0
        %1596 = vmatprep.subr.mxu0 0.0
        %1597 = vmatpush1.xpose.msra.mxu0 0.0
        %1598 = vmatprep.subr.mxu0 0.0
        %1599 = vmatpush1.xpose.msra.mxu0 0.0
        %1600 = vmatprep.subr.mxu0 0.0
        %1601 = vmatpush1.xpose.msra.mxu0 0.0
        %1602 = vmatprep.subr.mxu0 0.0
        %1603 = vmatpush1.xpose.msra.mxu0 0.0
        %1604 = vmatprep.subr.mxu0 0.0
        %1605 = vmatpush1.xpose.msra.mxu0 %v1574
        %1606 = vmatprep.subr.mxu0 0.0
        %1607 = vmatpush1.xpose.msra.mxu0 %v1572
        %1608 = vmatprep.subr.mxu0 0.0
        %1609 = vmatpush2.xpose.msra.mxu0 0.0
        %1610 = vmatprep.subr.mxu0 0.0
        %1611 = vmatpush2.xpose.msra.mxu0 0.0
        %1612 = vmatprep.subr.mxu0 0.0
        %1613 = vmatpush2.xpose.msra.mxu0 0.0
        %1614 = vmatprep.subr.mxu0 0.0
        %1615 = vmatpush2.xpose.msra.mxu0 0.0
        %1616 = vmatprep.subr.mxu0 0.0
        %1617 = vmatpush2.xpose.msra.mxu0 0.0
        %1618 = vmatprep.subr.mxu0 0.0
        %1619 = vmatpush2.xpose.msra.mxu0 0.0
        %1620 = vmatprep.subr.mxu0 0.0
        %1621 = vmatpush2.xpose.msra.mxu0 0.0
        %1622 = vmatprep.subr.mxu0 0.0
        %1623 = vmatpush2.xpose.msra.mxu0 0.0
        %1624 = vmatprep.subr.mxu0 0.0
        %1625 = vmatpush2.xpose.msra.mxu0 0.0
        %1626 = vmatprep.subr.mxu0 0.0
        %1627 = vmatpush2.xpose.msra.mxu0 0.0
        %1628 = vmatprep.subr.mxu0 0.0
        %1629 = vmatpush2.xpose.msra.mxu0 0.0
        %1630 = vmatprep.subr.mxu0 0.0
        %1631 = vmatpush2.xpose.msra.mxu0 0.0
        %1632 = vmatprep.subr.mxu0 0.0
        %1633 = vmatpush2.xpose.msra.mxu0 0.0
        %1634 = vmatprep.subr.mxu0 0.0
        %1635 = vmatpush2.xpose.msra.mxu0 0.0
        %1636 = vmatprep.subr.mxu0 0.0
        %1637 = vmatpush2.xpose.msra.mxu0 0.0
        %1638 = vmatprep.subr.mxu0 0.0
        %1639 = vmatpush2.xpose.msra.mxu0 0.0
        %1640 = vmatprep.mubr.f32.mxu0 0.0
        %1641 = vmatmul.mubr.f32.gmra.mxu0 %v1568
        %v1642 = vpop.f32.mrf.mxu0
        %v1643 = vadd.f32 0.0, %v1642
        %v1644 = vpop.f32.mrf.mxu0
        %1645 = vmatprep.mubr.f32.mxu0 0.0
        %1646 = vmatmul.mubr.f32.gmra.mxu0 %v1570
        %v1647 = vpop.f32.mrf.mxu0
        %v1648 = vadd.f32 0.0, %v1647
        %v1649 = vpop.f32.mrf.mxu0
        %1650 = vdwg.mxu0
        %v1651 = vsel %vm637, %v1552, -1e+30
        %v1652 = vsel %vm637, %v1557, -1e+30
        %v1653 = vsel %vm637, %v1643, -1e+30
        %v1654 = vsel %vm637, %v1648, -1e+30
        %v1655 = vsel %vm821, %v1651, -inf
        %1656 = vmax.xlane.f32.xlu0 %v1655
        %v1657 = vpop.xlane.xlu0 %1656
        %v1658 = vsel %vm821, %v1652, -inf
        %1659 = vmax.xlane.f32.xlu0 %v1658
        %v1660 = vpop.xlane.xlu0 %1659
        %v1661 = vsel %vm821, %v1653, -inf
        %1662 = vmax.xlane.f32.xlu0 %v1661
        %v1663 = vpop.xlane.xlu0 %1662
        %v1664 = vsel %vm821, %v1654, -inf
        %1665 = vmax.xlane.f32.xlu0 %v1664
        %v1666 = vpop.xlane.xlu0 %1665
        %v1667 = vsub.f32 %v1651, %v1657
        %v1668 = vsub.f32 %v1652, %v1660
        %v1669 = vsub.f32 %v1653, %v1663
        %v1670 = vsub.f32 %v1654, %v1666
        %v1671 = vmul.f32 %v1667, 1.442695
        %v1672 = vpow.pop %v1671
        %v1673 = vmul.f32 %v1668, 1.442695
        %v1674 = vpow.pop %v1673
        %v1675 = vmul.f32 %v1669, 1.442695
        %v1676 = vpow.pop %v1675
        %v1677 = vmul.f32 %v1670, 1.442695
        %v1678 = vpow.pop %v1677
        %v1679 = vsel %vm821, %v1672, 0.0
        %1680 = vadd.xlane.f32.xlu0 %v1679
        %v1681 = vpop.xlane.xlu0 %1680
        %v1682 = vsel %vm821, %v1674, 0.0
        %1683 = vadd.xlane.f32.xlu0 %v1682
        %v1684 = vpop.xlane.xlu0 %1683
        %v1685 = vsel %vm821, %v1676, 0.0
        %1686 = vadd.xlane.f32.xlu0 %v1685
        %v1687 = vpop.xlane.xlu0 %1686
        %v1688 = vsel %vm821, %v1678, 0.0
        %1689 = vadd.xlane.f32.xlu0 %v1688
        %v1690 = vpop.xlane.xlu0 %1689
        %v1691 = vrcp.pop %v1681
        %v1692 = vrcp.pop %v1684
        %v1693 = vrcp.pop %v1687
        %v1694 = vrcp.pop %v1690
        %v1695 = vmul.f32 %v1672, %v1691
        %v1696 = vmul.f32 %v1674, %v1692
        %v1697 = vmul.f32 %v1676, %v1693
        %v1698 = vmul.f32 %v1678, %v1694
        %1699 = vrot.lane.b32.xlu0 %v615, 48
        %v1700 = vpop.permute.xlu0 %1699
        %1701 = vrot.lane.b32.xlu0 %v620, 48
        %v1702 = vpop.permute.xlu0 %1701
        %v1706 = vsel %vm821, %v1695, 0
        %v1709 = vsel %vm821, %v1696, 0
        %1711 = vmatprep.subr.mxu0 0.0
        %1712 = vmatpush1.msra.mxu0 0.0
        %1713 = vmatprep.subr.mxu0 0.0
        %1714 = vmatpush1.msra.mxu0 0.0
        %1715 = vmatprep.subr.mxu0 0.0
        %1716 = vmatpush1.msra.mxu0 0.0
        %1717 = vmatprep.subr.mxu0 0.0
        %1718 = vmatpush1.msra.mxu0 0.0
        %1719 = vmatprep.subr.mxu0 0.0
        %1720 = vmatpush1.msra.mxu0 0.0
        %1721 = vmatprep.subr.mxu0 0.0
        %1722 = vmatpush1.msra.mxu0 0.0
        %1723 = vmatprep.subr.mxu0 0.0
        %1724 = vmatpush1.msra.mxu0 0.0
        %1725 = vmatprep.subr.mxu0 0.0
        %1726 = vmatpush1.msra.mxu0 0.0
        %1727 = vmatprep.subr.mxu0 0.0
        %1728 = vmatpush1.msra.mxu0 0.0
        %1729 = vmatprep.subr.mxu0 0.0
        %1730 = vmatpush1.msra.mxu0 0.0
        %1731 = vmatprep.subr.mxu0 0.0
        %1732 = vmatpush1.msra.mxu0 0.0
        %1733 = vmatprep.subr.mxu0 0.0
        %1734 = vmatpush1.msra.mxu0 0.0
        %1735 = vmatprep.subr.mxu0 0.0
        %1736 = vmatpush1.msra.mxu0 0.0
        %1737 = vmatprep.subr.mxu0 0.0
        %1738 = vmatpush1.msra.mxu0 0.0
        %1739 = vmatprep.subr.mxu0 0.0
        %1740 = vmatpush1.msra.mxu0 %v1702
        %1741 = vmatprep.subr.mxu0 0.0
        %1742 = vmatpush1.msra.mxu0 %v1700
        %1743 = vmatprep.subr.mxu0 0.0
        %1744 = vmatpush2.msra.mxu0 0.0
        %1745 = vmatprep.subr.mxu0 0.0
        %1746 = vmatpush2.msra.mxu0 0.0
        %1747 = vmatprep.subr.mxu0 0.0
        %1748 = vmatpush2.msra.mxu0 0.0
        %1749 = vmatprep.subr.mxu0 0.0
        %1750 = vmatpush2.msra.mxu0 0.0
        %1751 = vmatprep.subr.mxu0 0.0
        %1752 = vmatpush2.msra.mxu0 0.0
        %1753 = vmatprep.subr.mxu0 0.0
        %1754 = vmatpush2.msra.mxu0 0.0
        %1755 = vmatprep.subr.mxu0 0.0
        %1756 = vmatpush2.msra.mxu0 0.0
        %1757 = vmatprep.subr.mxu0 0.0
        %1758 = vmatpush2.msra.mxu0 0.0
        %1759 = vmatprep.subr.mxu0 0.0
        %1760 = vmatpush2.msra.mxu0 0.0
        %1761 = vmatprep.subr.mxu0 0.0
        %1762 = vmatpush2.msra.mxu0 0.0
        %1763 = vmatprep.subr.mxu0 0.0
        %1764 = vmatpush2.msra.mxu0 0.0
        %1765 = vmatprep.subr.mxu0 0.0
        %1766 = vmatpush2.msra.mxu0 0.0
        %1767 = vmatprep.subr.mxu0 0.0
        %1768 = vmatpush2.msra.mxu0 0.0
        %1769 = vmatprep.subr.mxu0 0.0
        %1770 = vmatpush2.msra.mxu0 0.0
        %1771 = vmatprep.subr.mxu0 0.0
        %1772 = vmatpush2.msra.mxu0 0.0
        %1773 = vmatprep.subr.mxu0 0.0
        %1774 = vmatpush2.msra.mxu0 0.0
        %1775 = vmatprep.mubr.f32.mxu0 0.0
        %1776 = vmatmul.mubr.f32.gmra.mxu0 %v1706
        %v1777 = vpop.f32.mrf.mxu0
        %v1778 = vadd.f32 0.0, %v1777
        %v1779 = vpop.f32.mrf.mxu0
        %1780 = vmatprep.mubr.f32.mxu0 0.0
        %1781 = vmatmul.mubr.f32.gmra.mxu0 %v1709
        %v1782 = vpop.f32.mrf.mxu0
        %v1783 = vadd.f32 0.0, %v1782
        %v1784 = vpop.f32.mrf.mxu0
        %1785 = vdwg.mxu0
        %1786 = vrot.lane.b32.xlu0 %v625, 48
        %v1787 = vpop.permute.xlu0 %1786
        %1788 = vrot.lane.b32.xlu0 %v630, 48
        %v1789 = vpop.permute.xlu0 %1788
        %v1793 = vsel %vm821, %v1697, 0
        %v1796 = vsel %vm821, %v1698, 0
        %1798 = vmatprep.subr.mxu0 0.0
        %1799 = vmatpush1.msra.mxu0 0.0
        %1800 = vmatprep.subr.mxu0 0.0
        %1801 = vmatpush1.msra.mxu0 0.0
        %1802 = vmatprep.subr.mxu0 0.0
        %1803 = vmatpush1.msra.mxu0 0.0
        %1804 = vmatprep.subr.mxu0 0.0
        %1805 = vmatpush1.msra.mxu0 0.0
        %1806 = vmatprep.subr.mxu0 0.0
        %1807 = vmatpush1.msra.mxu0 0.0
        %1808 = vmatprep.subr.mxu0 0.0
        %1809 = vmatpush1.msra.mxu0 0.0
        %1810 = vmatprep.subr.mxu0 0.0
        %1811 = vmatpush1.msra.mxu0 0.0
        %1812 = vmatprep.subr.mxu0 0.0
        %1813 = vmatpush1.msra.mxu0 0.0
        %1814 = vmatprep.subr.mxu0 0.0
        %1815 = vmatpush1.msra.mxu0 0.0
        %1816 = vmatprep.subr.mxu0 0.0
        %1817 = vmatpush1.msra.mxu0 0.0
        %1818 = vmatprep.subr.mxu0 0.0
        %1819 = vmatpush1.msra.mxu0 0.0
        %1820 = vmatprep.subr.mxu0 0.0
        %1821 = vmatpush1.msra.mxu0 0.0
        %1822 = vmatprep.subr.mxu0 0.0
        %1823 = vmatpush1.msra.mxu0 0.0
        %1824 = vmatprep.subr.mxu0 0.0
        %1825 = vmatpush1.msra.mxu0 0.0
        %1826 = vmatprep.subr.mxu0 0.0
        %1827 = vmatpush1.msra.mxu0 %v1789
        %1828 = vmatprep.subr.mxu0 0.0
        %1829 = vmatpush1.msra.mxu0 %v1787
        %1830 = vmatprep.subr.mxu0 0.0
        %1831 = vmatpush2.msra.mxu0 0.0
        %1832 = vmatprep.subr.mxu0 0.0
        %1833 = vmatpush2.msra.mxu0 0.0
        %1834 = vmatprep.subr.mxu0 0.0
        %1835 = vmatpush2.msra.mxu0 0.0
        %1836 = vmatprep.subr.mxu0 0.0
        %1837 = vmatpush2.msra.mxu0 0.0
        %1838 = vmatprep.subr.mxu0 0.0
        %1839 = vmatpush2.msra.mxu0 0.0
        %1840 = vmatprep.subr.mxu0 0.0
        %1841 = vmatpush2.msra.mxu0 0.0
        %1842 = vmatprep.subr.mxu0 0.0
        %1843 = vmatpush2.msra.mxu0 0.0
        %1844 = vmatprep.subr.mxu0 0.0
        %1845 = vmatpush2.msra.mxu0 0.0
        %1846 = vmatprep.subr.mxu0 0.0
        %1847 = vmatpush2.msra.mxu0 0.0
        %1848 = vmatprep.subr.mxu0 0.0
        %1849 = vmatpush2.msra.mxu0 0.0
        %1850 = vmatprep.subr.mxu0 0.0
        %1851 = vmatpush2.msra.mxu0 0.0
        %1852 = vmatprep.subr.mxu0 0.0
        %1853 = vmatpush2.msra.mxu0 0.0
        %1854 = vmatprep.subr.mxu0 0.0
        %1855 = vmatpush2.msra.mxu0 0.0
        %1856 = vmatprep.subr.mxu0 0.0
        %1857 = vmatpush2.msra.mxu0 0.0
        %1858 = vmatprep.subr.mxu0 0.0
        %1859 = vmatpush2.msra.mxu0 0.0
        %1860 = vmatprep.subr.mxu0 0.0
        %1861 = vmatpush2.msra.mxu0 0.0
        %1862 = vmatprep.mubr.f32.mxu0 0.0
        %1863 = vmatmul.mubr.f32.gmra.mxu0 %v1793
        %v1864 = vpop.f32.mrf.mxu0
        %v1865 = vadd.f32 0.0, %v1864
        %v1866 = vpop.f32.mrf.mxu0
        %1867 = vmatprep.mubr.f32.mxu0 0.0
        %1868 = vmatmul.mubr.f32.gmra.mxu0 %v1796
        %v1869 = vpop.f32.mrf.mxu0
        %v1870 = vadd.f32 0.0, %v1869
        %v1871 = vpop.f32.mrf.mxu0
        %1872 = vdwg.mxu0
        %1877 = vrot.lane.b32.xlu0 %v1778, 16
        %v1878 = vpop.permute.xlu0 %1877
        %1879 = vrot.lane.b32.xlu0 %v1783, 16
        %v1880 = vpop.permute.xlu0 %1879
        %1881 = vrot.lane.b32.xlu0 %v1865, 16
        %v1882 = vpop.permute.xlu0 %1881
        %1883 = vrot.lane.b32.xlu0 %v1870, 16
        %v1884 = vpop.permute.xlu0 %1883
        %vm1889 = vcmask 195712
        %1890 = vst.msk [vmem:[#allocation2] sm:$0xff] %vm1889, %v1878
        %1891 = vst.msk [vmem:[#allocation2 + $0x8] sm:$0xff] %vm1889, %v1880
        %1892 = vst.msk [vmem:[#allocation2 + $0x10] sm:$0xff] %vm1889, %v1882
        %1893 = vst.msk [vmem:[#allocation2 + $0x18] sm:$0xff] %vm1889, %v1884
        %1894 = vrot.lane.b32.xlu0 %v615, 104
        %v1895 = vpop.permute.xlu0 %1894
        %1896 = vrot.lane.b32.xlu0 %v620, 104
        %v1897 = vpop.permute.xlu0 %1896
        %1898 = vrot.lane.b32.xlu0 %v615, 72
        %v1899 = vpop.permute.xlu0 %1898
        %1900 = vrot.lane.b32.xlu0 %v620, 72
        %v1901 = vpop.permute.xlu0 %1900
        %v1902 = vsel %vm644, %v1895, 0
        %v1904 = vsel %vm644, %v1897, 0
        %v1906 = vsel %vm644, %v1899, 0
        %v1908 = vsel %vm644, %v1901, 0
        %1910 = vmatprep.subr.mxu0 0.0
        %1911 = vmatpush1.xpose.msra.mxu0 0.0
        %1912 = vmatprep.subr.mxu0 0.0
        %1913 = vmatpush1.xpose.msra.mxu0 0.0
        %1914 = vmatprep.subr.mxu0 0.0
        %1915 = vmatpush1.xpose.msra.mxu0 0.0
        %1916 = vmatprep.subr.mxu0 0.0
        %1917 = vmatpush1.xpose.msra.mxu0 0.0
        %1918 = vmatprep.subr.mxu0 0.0
        %1919 = vmatpush1.xpose.msra.mxu0 0.0
        %1920 = vmatprep.subr.mxu0 0.0
        %1921 = vmatpush1.xpose.msra.mxu0 0.0
        %1922 = vmatprep.subr.mxu0 0.0
        %1923 = vmatpush1.xpose.msra.mxu0 0.0
        %1924 = vmatprep.subr.mxu0 0.0
        %1925 = vmatpush1.xpose.msra.mxu0 0.0
        %1926 = vmatprep.subr.mxu0 0.0
        %1927 = vmatpush1.xpose.msra.mxu0 0.0
        %1928 = vmatprep.subr.mxu0 0.0
        %1929 = vmatpush1.xpose.msra.mxu0 0.0
        %1930 = vmatprep.subr.mxu0 0.0
        %1931 = vmatpush1.xpose.msra.mxu0 0.0
        %1932 = vmatprep.subr.mxu0 0.0
        %1933 = vmatpush1.xpose.msra.mxu0 0.0
        %1934 = vmatprep.subr.mxu0 0.0
        %1935 = vmatpush1.xpose.msra.mxu0 0.0
        %1936 = vmatprep.subr.mxu0 0.0
        %1937 = vmatpush1.xpose.msra.mxu0 0.0
        %1938 = vmatprep.subr.mxu0 0.0
        %1939 = vmatpush1.xpose.msra.mxu0 %v1908
        %1940 = vmatprep.subr.mxu0 0.0
        %1941 = vmatpush1.xpose.msra.mxu0 %v1906
        %1942 = vmatprep.subr.mxu0 0.0
        %1943 = vmatpush2.xpose.msra.mxu0 0.0
        %1944 = vmatprep.subr.mxu0 0.0
        %1945 = vmatpush2.xpose.msra.mxu0 0.0
        %1946 = vmatprep.subr.mxu0 0.0
        %1947 = vmatpush2.xpose.msra.mxu0 0.0
        %1948 = vmatprep.subr.mxu0 0.0
        %1949 = vmatpush2.xpose.msra.mxu0 0.0
        %1950 = vmatprep.subr.mxu0 0.0
        %1951 = vmatpush2.xpose.msra.mxu0 0.0
        %1952 = vmatprep.subr.mxu0 0.0
        %1953 = vmatpush2.xpose.msra.mxu0 0.0
        %1954 = vmatprep.subr.mxu0 0.0
        %1955 = vmatpush2.xpose.msra.mxu0 0.0
        %1956 = vmatprep.subr.mxu0 0.0
        %1957 = vmatpush2.xpose.msra.mxu0 0.0
        %1958 = vmatprep.subr.mxu0 0.0
        %1959 = vmatpush2.xpose.msra.mxu0 0.0
        %1960 = vmatprep.subr.mxu0 0.0
        %1961 = vmatpush2.xpose.msra.mxu0 0.0
        %1962 = vmatprep.subr.mxu0 0.0
        %1963 = vmatpush2.xpose.msra.mxu0 0.0
        %1964 = vmatprep.subr.mxu0 0.0
        %1965 = vmatpush2.xpose.msra.mxu0 0.0
        %1966 = vmatprep.subr.mxu0 0.0
        %1967 = vmatpush2.xpose.msra.mxu0 0.0
        %1968 = vmatprep.subr.mxu0 0.0
        %1969 = vmatpush2.xpose.msra.mxu0 0.0
        %1970 = vmatprep.subr.mxu0 0.0
        %1971 = vmatpush2.xpose.msra.mxu0 0.0
        %1972 = vmatprep.subr.mxu0 0.0
        %1973 = vmatpush2.xpose.msra.mxu0 0.0
        %1974 = vmatprep.mubr.f32.mxu0 0.0
        %1975 = vmatmul.mubr.f32.gmra.mxu0 %v1902
        %v1976 = vpop.f32.mrf.mxu0
        %v1977 = vadd.f32 0.0, %v1976
        %v1978 = vpop.f32.mrf.mxu0
        %1979 = vmatprep.mubr.f32.mxu0 0.0
        %1980 = vmatmul.mubr.f32.gmra.mxu0 %v1904
        %v1981 = vpop.f32.mrf.mxu0
        %v1982 = vadd.f32 0.0, %v1981
        %v1983 = vpop.f32.mrf.mxu0
        %1984 = vdwg.mxu0
        %1985 = vrot.lane.b32.xlu0 %v625, 104
        %v1986 = vpop.permute.xlu0 %1985
        %1987 = vrot.lane.b32.xlu0 %v630, 104
        %v1988 = vpop.permute.xlu0 %1987
        %1989 = vrot.lane.b32.xlu0 %v625, 72
        %v1990 = vpop.permute.xlu0 %1989
        %1991 = vrot.lane.b32.xlu0 %v630, 72
        %v1992 = vpop.permute.xlu0 %1991
        %v1993 = vsel %vm644, %v1986, 0
        %v1995 = vsel %vm644, %v1988, 0
        %v1997 = vsel %vm644, %v1990, 0
        %v1999 = vsel %vm644, %v1992, 0
        %2001 = vmatprep.subr.mxu0 0.0
        %2002 = vmatpush1.xpose.msra.mxu0 0.0
        %2003 = vmatprep.subr.mxu0 0.0
        %2004 = vmatpush1.xpose.msra.mxu0 0.0
        %2005 = vmatprep.subr.mxu0 0.0
        %2006 = vmatpush1.xpose.msra.mxu0 0.0
        %2007 = vmatprep.subr.mxu0 0.0
        %2008 = vmatpush1.xpose.msra.mxu0 0.0
        %2009 = vmatprep.subr.mxu0 0.0
        %2010 = vmatpush1.xpose.msra.mxu0 0.0
        %2011 = vmatprep.subr.mxu0 0.0
        %2012 = vmatpush1.xpose.msra.mxu0 0.0
        %2013 = vmatprep.subr.mxu0 0.0
        %2014 = vmatpush1.xpose.msra.mxu0 0.0
        %2015 = vmatprep.subr.mxu0 0.0
        %2016 = vmatpush1.xpose.msra.mxu0 0.0
        %2017 = vmatprep.subr.mxu0 0.0
        %2018 = vmatpush1.xpose.msra.mxu0 0.0
        %2019 = vmatprep.subr.mxu0 0.0
        %2020 = vmatpush1.xpose.msra.mxu0 0.0
        %2021 = vmatprep.subr.mxu0 0.0
        %2022 = vmatpush1.xpose.msra.mxu0 0.0
        %2023 = vmatprep.subr.mxu0 0.0
        %2024 = vmatpush1.xpose.msra.mxu0 0.0
        %2025 = vmatprep.subr.mxu0 0.0
        %2026 = vmatpush1.xpose.msra.mxu0 0.0
        %2027 = vmatprep.subr.mxu0 0.0
        %2028 = vmatpush1.xpose.msra.mxu0 0.0
        %2029 = vmatprep.subr.mxu0 0.0
        %2030 = vmatpush1.xpose.msra.mxu0 %v1999
        %2031 = vmatprep.subr.mxu0 0.0
        %2032 = vmatpush1.xpose.msra.mxu0 %v1997
        %2033 = vmatprep.subr.mxu0 0.0
        %2034 = vmatpush2.xpose.msra.mxu0 0.0
        %2035 = vmatprep.subr.mxu0 0.0
        %2036 = vmatpush2.xpose.msra.mxu0 0.0
        %2037 = vmatprep.subr.mxu0 0.0
        %2038 = vmatpush2.xpose.msra.mxu0 0.0
        %2039 = vmatprep.subr.mxu0 0.0
        %2040 = vmatpush2.xpose.msra.mxu0 0.0
        %2041 = vmatprep.subr.mxu0 0.0
        %2042 = vmatpush2.xpose.msra.mxu0 0.0
        %2043 = vmatprep.subr.mxu0 0.0
        %2044 = vmatpush2.xpose.msra.mxu0 0.0
        %2045 = vmatprep.subr.mxu0 0.0
        %2046 = vmatpush2.xpose.msra.mxu0 0.0
        %2047 = vmatprep.subr.mxu0 0.0
        %2048 = vmatpush2.xpose.msra.mxu0 0.0
        %2049 = vmatprep.subr.mxu0 0.0
        %2050 = vmatpush2.xpose.msra.mxu0 0.0
        %2051 = vmatprep.subr.mxu0 0.0
        %2052 = vmatpush2.xpose.msra.mxu0 0.0
        %2053 = vmatprep.subr.mxu0 0.0
        %2054 = vmatpush2.xpose.msra.mxu0 0.0
        %2055 = vmatprep.subr.mxu0 0.0
        %2056 = vmatpush2.xpose.msra.mxu0 0.0
        %2057 = vmatprep.subr.mxu0 0.0
        %2058 = vmatpush2.xpose.msra.mxu0 0.0
        %2059 = vmatprep.subr.mxu0 0.0
        %2060 = vmatpush2.xpose.msra.mxu0 0.0
        %2061 = vmatprep.subr.mxu0 0.0
        %2062 = vmatpush2.xpose.msra.mxu0 0.0
        %2063 = vmatprep.subr.mxu0 0.0
        %2064 = vmatpush2.xpose.msra.mxu0 0.0
        %2065 = vmatprep.mubr.f32.mxu0 0.0
        %2066 = vmatmul.mubr.f32.gmra.mxu0 %v1993
        %v2067 = vpop.f32.mrf.mxu0
        %v2068 = vadd.f32 0.0, %v2067
        %v2069 = vpop.f32.mrf.mxu0
        %2070 = vmatprep.mubr.f32.mxu0 0.0
        %2071 = vmatmul.mubr.f32.gmra.mxu0 %v1995
        %v2072 = vpop.f32.mrf.mxu0
        %v2073 = vadd.f32 0.0, %v2072
        %v2074 = vpop.f32.mrf.mxu0
        %2075 = vdwg.mxu0
        %v2076 = vsel %vm637, %v1977, -1e+30
        %v2077 = vsel %vm637, %v1982, -1e+30
        %v2078 = vsel %vm637, %v2068, -1e+30
        %v2079 = vsel %vm637, %v2073, -1e+30
        %v2080 = vsel %vm821, %v2076, -inf
        %2081 = vmax.xlane.f32.xlu0 %v2080
        %v2082 = vpop.xlane.xlu0 %2081
        %v2083 = vsel %vm821, %v2077, -inf
        %2084 = vmax.xlane.f32.xlu0 %v2083
        %v2085 = vpop.xlane.xlu0 %2084
        %v2086 = vsel %vm821, %v2078, -inf
        %2087 = vmax.xlane.f32.xlu0 %v2086
        %v2088 = vpop.xlane.xlu0 %2087
        %v2089 = vsel %vm821, %v2079, -inf
        %2090 = vmax.xlane.f32.xlu0 %v2089
        %v2091 = vpop.xlane.xlu0 %2090
        %v2092 = vsub.f32 %v2076, %v2082
        %v2093 = vsub.f32 %v2077, %v2085
        %v2094 = vsub.f32 %v2078, %v2088
        %v2095 = vsub.f32 %v2079, %v2091
        %v2096 = vmul.f32 %v2092, 1.442695
        %v2097 = vpow.pop %v2096
        %v2098 = vmul.f32 %v2093, 1.442695
        %v2099 = vpow.pop %v2098
        %v2100 = vmul.f32 %v2094, 1.442695
        %v2101 = vpow.pop %v2100
        %v2102 = vmul.f32 %v2095, 1.442695
        %v2103 = vpow.pop %v2102
        %v2104 = vsel %vm821, %v2097, 0.0
        %2105 = vadd.xlane.f32.xlu0 %v2104
        %v2106 = vpop.xlane.xlu0 %2105
        %v2107 = vsel %vm821, %v2099, 0.0
        %2108 = vadd.xlane.f32.xlu0 %v2107
        %v2109 = vpop.xlane.xlu0 %2108
        %v2110 = vsel %vm821, %v2101, 0.0
        %2111 = vadd.xlane.f32.xlu0 %v2110
        %v2112 = vpop.xlane.xlu0 %2111
        %v2113 = vsel %vm821, %v2103, 0.0
        %2114 = vadd.xlane.f32.xlu0 %v2113
        %v2115 = vpop.xlane.xlu0 %2114
        %v2116 = vrcp.pop %v2106
        %v2117 = vrcp.pop %v2109
        %v2118 = vrcp.pop %v2112
        %v2119 = vrcp.pop %v2115
        %v2120 = vmul.f32 %v2097, %v2116
        %v2121 = vmul.f32 %v2099, %v2117
        %v2122 = vmul.f32 %v2101, %v2118
        %v2123 = vmul.f32 %v2103, %v2119
        %2124 = vrot.lane.b32.xlu0 %v615, 40
        %v2125 = vpop.permute.xlu0 %2124
        %2126 = vrot.lane.b32.xlu0 %v620, 40
        %v2127 = vpop.permute.xlu0 %2126
        %v2131 = vsel %vm821, %v2120, 0
        %v2134 = vsel %vm821, %v2121, 0
        %2136 = vmatprep.subr.mxu0 0.0
        %2137 = vmatpush1.msra.mxu0 0.0
        %2138 = vmatprep.subr.mxu0 0.0
        %2139 = vmatpush1.msra.mxu0 0.0
        %2140 = vmatprep.subr.mxu0 0.0
        %2141 = vmatpush1.msra.mxu0 0.0
        %2142 = vmatprep.subr.mxu0 0.0
        %2143 = vmatpush1.msra.mxu0 0.0
        %2144 = vmatprep.subr.mxu0 0.0
        %2145 = vmatpush1.msra.mxu0 0.0
        %2146 = vmatprep.subr.mxu0 0.0
        %2147 = vmatpush1.msra.mxu0 0.0
        %2148 = vmatprep.subr.mxu0 0.0
        %2149 = vmatpush1.msra.mxu0 0.0
        %2150 = vmatprep.subr.mxu0 0.0
        %2151 = vmatpush1.msra.mxu0 0.0
        %2152 = vmatprep.subr.mxu0 0.0
        %2153 = vmatpush1.msra.mxu0 0.0
        %2154 = vmatprep.subr.mxu0 0.0
        %2155 = vmatpush1.msra.mxu0 0.0
        %2156 = vmatprep.subr.mxu0 0.0
        %2157 = vmatpush1.msra.mxu0 0.0
        %2158 = vmatprep.subr.mxu0 0.0
        %2159 = vmatpush1.msra.mxu0 0.0
        %2160 = vmatprep.subr.mxu0 0.0
        %2161 = vmatpush1.msra.mxu0 0.0
        %2162 = vmatprep.subr.mxu0 0.0
        %2163 = vmatpush1.msra.mxu0 0.0
        %2164 = vmatprep.subr.mxu0 0.0
        %2165 = vmatpush1.msra.mxu0 %v2127
        %2166 = vmatprep.subr.mxu0 0.0
        %2167 = vmatpush1.msra.mxu0 %v2125
        %2168 = vmatprep.subr.mxu0 0.0
        %2169 = vmatpush2.msra.mxu0 0.0
        %2170 = vmatprep.subr.mxu0 0.0
        %2171 = vmatpush2.msra.mxu0 0.0
        %2172 = vmatprep.subr.mxu0 0.0
        %2173 = vmatpush2.msra.mxu0 0.0
        %2174 = vmatprep.subr.mxu0 0.0
        %2175 = vmatpush2.msra.mxu0 0.0
        %2176 = vmatprep.subr.mxu0 0.0
        %2177 = vmatpush2.msra.mxu0 0.0
        %2178 = vmatprep.subr.mxu0 0.0
        %2179 = vmatpush2.msra.mxu0 0.0
        %2180 = vmatprep.subr.mxu0 0.0
        %2181 = vmatpush2.msra.mxu0 0.0
        %2182 = vmatprep.subr.mxu0 0.0
        %2183 = vmatpush2.msra.mxu0 0.0
        %2184 = vmatprep.subr.mxu0 0.0
        %2185 = vmatpush2.msra.mxu0 0.0
        %2186 = vmatprep.subr.mxu0 0.0
        %2187 = vmatpush2.msra.mxu0 0.0
        %2188 = vmatprep.subr.mxu0 0.0
        %2189 = vmatpush2.msra.mxu0 0.0
        %2190 = vmatprep.subr.mxu0 0.0
        %2191 = vmatpush2.msra.mxu0 0.0
        %2192 = vmatprep.subr.mxu0 0.0
        %2193 = vmatpush2.msra.mxu0 0.0
        %2194 = vmatprep.subr.mxu0 0.0
        %2195 = vmatpush2.msra.mxu0 0.0
        %2196 = vmatprep.subr.mxu0 0.0
        %2197 = vmatpush2.msra.mxu0 0.0
        %2198 = vmatprep.subr.mxu0 0.0
        %2199 = vmatpush2.msra.mxu0 0.0
        %2200 = vmatprep.mubr.f32.mxu0 0.0
        %2201 = vmatmul.mubr.f32.gmra.mxu0 %v2131
        %v2202 = vpop.f32.mrf.mxu0
        %v2203 = vadd.f32 0.0, %v2202
        %v2204 = vpop.f32.mrf.mxu0
        %2205 = vmatprep.mubr.f32.mxu0 0.0
        %2206 = vmatmul.mubr.f32.gmra.mxu0 %v2134
        %v2207 = vpop.f32.mrf.mxu0
        %v2208 = vadd.f32 0.0, %v2207
        %v2209 = vpop.f32.mrf.mxu0
        %2210 = vdwg.mxu0
        %2211 = vrot.lane.b32.xlu0 %v625, 40
        %v2212 = vpop.permute.xlu0 %2211
        %2213 = vrot.lane.b32.xlu0 %v630, 40
        %v2214 = vpop.permute.xlu0 %2213
        %v2218 = vsel %vm821, %v2122, 0
        %v2221 = vsel %vm821, %v2123, 0
        %2223 = vmatprep.subr.mxu0 0.0
        %2224 = vmatpush1.msra.mxu0 0.0
        %2225 = vmatprep.subr.mxu0 0.0
        %2226 = vmatpush1.msra.mxu0 0.0
        %2227 = vmatprep.subr.mxu0 0.0
        %2228 = vmatpush1.msra.mxu0 0.0
        %2229 = vmatprep.subr.mxu0 0.0
        %2230 = vmatpush1.msra.mxu0 0.0
        %2231 = vmatprep.subr.mxu0 0.0
        %2232 = vmatpush1.msra.mxu0 0.0
        %2233 = vmatprep.subr.mxu0 0.0
        %2234 = vmatpush1.msra.mxu0 0.0
        %2235 = vmatprep.subr.mxu0 0.0
        %2236 = vmatpush1.msra.mxu0 0.0
        %2237 = vmatprep.subr.mxu0 0.0
        %2238 = vmatpush1.msra.mxu0 0.0
        %2239 = vmatprep.subr.mxu0 0.0
        %2240 = vmatpush1.msra.mxu0 0.0
        %2241 = vmatprep.subr.mxu0 0.0
        %2242 = vmatpush1.msra.mxu0 0.0
        %2243 = vmatprep.subr.mxu0 0.0
        %2244 = vmatpush1.msra.mxu0 0.0
        %2245 = vmatprep.subr.mxu0 0.0
        %2246 = vmatpush1.msra.mxu0 0.0
        %2247 = vmatprep.subr.mxu0 0.0
        %2248 = vmatpush1.msra.mxu0 0.0
        %2249 = vmatprep.subr.mxu0 0.0
        %2250 = vmatpush1.msra.mxu0 0.0
        %2251 = vmatprep.subr.mxu0 0.0
        %2252 = vmatpush1.msra.mxu0 %v2214
        %2253 = vmatprep.subr.mxu0 0.0
        %2254 = vmatpush1.msra.mxu0 %v2212
        %2255 = vmatprep.subr.mxu0 0.0
        %2256 = vmatpush2.msra.mxu0 0.0
        %2257 = vmatprep.subr.mxu0 0.0
        %2258 = vmatpush2.msra.mxu0 0.0
        %2259 = vmatprep.subr.mxu0 0.0
        %2260 = vmatpush2.msra.mxu0 0.0
        %2261 = vmatprep.subr.mxu0 0.0
        %2262 = vmatpush2.msra.mxu0 0.0
        %2263 = vmatprep.subr.mxu0 0.0
        %2264 = vmatpush2.msra.mxu0 0.0
        %2265 = vmatprep.subr.mxu0 0.0
        %2266 = vmatpush2.msra.mxu0 0.0
        %2267 = vmatprep.subr.mxu0 0.0
        %2268 = vmatpush2.msra.mxu0 0.0
        %2269 = vmatprep.subr.mxu0 0.0
        %2270 = vmatpush2.msra.mxu0 0.0
        %2271 = vmatprep.subr.mxu0 0.0
        %2272 = vmatpush2.msra.mxu0 0.0
        %2273 = vmatprep.subr.mxu0 0.0
        %2274 = vmatpush2.msra.mxu0 0.0
        %2275 = vmatprep.subr.mxu0 0.0
        %2276 = vmatpush2.msra.mxu0 0.0
        %2277 = vmatprep.subr.mxu0 0.0
        %2278 = vmatpush2.msra.mxu0 0.0
        %2279 = vmatprep.subr.mxu0 0.0
        %2280 = vmatpush2.msra.mxu0 0.0
        %2281 = vmatprep.subr.mxu0 0.0
        %2282 = vmatpush2.msra.mxu0 0.0
        %2283 = vmatprep.subr.mxu0 0.0
        %2284 = vmatpush2.msra.mxu0 0.0
        %2285 = vmatprep.subr.mxu0 0.0
        %2286 = vmatpush2.msra.mxu0 0.0
        %2287 = vmatprep.mubr.f32.mxu0 0.0
        %2288 = vmatmul.mubr.f32.gmra.mxu0 %v2218
        %v2289 = vpop.f32.mrf.mxu0
        %v2290 = vadd.f32 0.0, %v2289
        %v2291 = vpop.f32.mrf.mxu0
        %2292 = vmatprep.mubr.f32.mxu0 0.0
        %2293 = vmatmul.mubr.f32.gmra.mxu0 %v2221
        %v2294 = vpop.f32.mrf.mxu0
        %v2295 = vadd.f32 0.0, %v2294
        %v2296 = vpop.f32.mrf.mxu0
        %2297 = vdwg.mxu0
        %2302 = vrot.lane.b32.xlu0 %v2203, 24
        %v2303 = vpop.permute.xlu0 %2302
        %2304 = vrot.lane.b32.xlu0 %v2208, 24
        %v2305 = vpop.permute.xlu0 %2304
        %2306 = vrot.lane.b32.xlu0 %v2290, 24
        %v2307 = vpop.permute.xlu0 %2306
        %2308 = vrot.lane.b32.xlu0 %v2295, 24
        %v2309 = vpop.permute.xlu0 %2308
        %vm2314 = vcmask 261312
        %2315 = vst.msk [vmem:[#allocation2] sm:$0xff] %vm2314, %v2303
        %2316 = vst.msk [vmem:[#allocation2 + $0x8] sm:$0xff] %vm2314, %v2305
        %2317 = vst.msk [vmem:[#allocation2 + $0x10] sm:$0xff] %vm2314, %v2307
        %2318 = vst.msk [vmem:[#allocation2 + $0x18] sm:$0xff] %vm2314, %v2309
        %v2319 = vld [vmem:[#allocation2] sm:$0xff]
        %v2320 = vld [vmem:[#allocation2 + $0x8] sm:$0xff]
        %v2321 = vld [vmem:[#allocation2 + $0x10] sm:$0xff]
        %v2322 = vld [vmem:[#allocation2 + $0x18] sm:$0xff]
        %v2323 = vld [vmem:[%s5] sm:$0xff]
        %v2324 = vld [vmem:[%s5 + $0x8] sm:$0xff]
        %v2325 = vld [vmem:[%s5 + $0x10] sm:$0xff]
        %v2326 = vld [vmem:[%s5 + $0x18] sm:$0xff]
        %v2327 = vld [vmem:[%s6] sm:$0x1]
        %v2329 = vlaneseq
        %v2330 = vshrl.u32 %v2329, 7
        %v2331 = vsub.s32 0, %v2330
        %v2332 = vrot.slane %v2327, %v2331
        %v2335 = vsel %vm449, %v2319, 0
        %v2338 = vsel %vm449, %v2320, 0
        %v2341 = vsel %vm449, %v2321, 0
        %v2344 = vsel %vm449, %v2322, 0
        %2346 = vmatprep.subr.mxu0 0.0
        %2347 = vmatpush1.msra.mxu0 0.0
        %2348 = vmatprep.subr.mxu0 0.0
        %2349 = vmatpush1.msra.mxu0 0.0
        %2350 = vmatprep.subr.mxu0 0.0
        %2351 = vmatpush1.msra.mxu0 0.0
        %2352 = vmatprep.subr.mxu0 0.0
        %2353 = vmatpush1.msra.mxu0 0.0
        %2354 = vmatprep.subr.mxu0 0.0
        %2355 = vmatpush1.msra.mxu0 0.0
        %2356 = vmatprep.subr.mxu0 0.0
        %2357 = vmatpush1.msra.mxu0 0.0
        %2358 = vmatprep.subr.mxu0 0.0
        %2359 = vmatpush1.msra.mxu0 0.0
        %2360 = vmatprep.subr.mxu0 0.0
        %2361 = vmatpush1.msra.mxu0 0.0
        %2362 = vmatprep.subr.mxu0 0.0
        %2363 = vmatpush1.msra.mxu0 0.0
        %2364 = vmatprep.subr.mxu0 0.0
        %2365 = vmatpush1.msra.mxu0 0.0
        %2366 = vmatprep.subr.mxu0 0.0
        %2367 = vmatpush1.msra.mxu0 0.0
        %2368 = vmatprep.subr.mxu0 0.0
        %2369 = vmatpush1.msra.mxu0 0.0
        %2370 = vmatprep.subr.mxu0 0.0
        %2371 = vmatpush1.msra.mxu0 %v2326
        %2372 = vmatprep.subr.mxu0 0.0
        %2373 = vmatpush1.msra.mxu0 %v2325
        %2374 = vmatprep.subr.mxu0 0.0
        %2375 = vmatpush1.msra.mxu0 %v2324
        %2376 = vmatprep.subr.mxu0 0.0
        %2377 = vmatpush1.msra.mxu0 %v2323
        %2378 = vmatprep.subr.mxu0 0.0
        %2379 = vmatpush2.msra.mxu0 0.0
        %2380 = vmatprep.subr.mxu0 0.0
        %2381 = vmatpush2.msra.mxu0 0.0
        %2382 = vmatprep.subr.mxu0 0.0
        %2383 = vmatpush2.msra.mxu0 0.0
        %2384 = vmatprep.subr.mxu0 0.0
        %2385 = vmatpush2.msra.mxu0 0.0
        %2386 = vmatprep.subr.mxu0 0.0
        %2387 = vmatpush2.msra.mxu0 0.0
        %2388 = vmatprep.subr.mxu0 0.0
        %2389 = vmatpush2.msra.mxu0 0.0
        %2390 = vmatprep.subr.mxu0 0.0
        %2391 = vmatpush2.msra.mxu0 0.0
        %2392 = vmatprep.subr.mxu0 0.0
        %2393 = vmatpush2.msra.mxu0 0.0
        %2394 = vmatprep.subr.mxu0 0.0
        %2395 = vmatpush2.msra.mxu0 0.0
        %2396 = vmatprep.subr.mxu0 0.0
        %2397 = vmatpush2.msra.mxu0 0.0
        %2398 = vmatprep.subr.mxu0 0.0
        %2399 = vmatpush2.msra.mxu0 0.0
        %2400 = vmatprep.subr.mxu0 0.0
        %2401 = vmatpush2.msra.mxu0 0.0
        %2402 = vmatprep.subr.mxu0 0.0
        %2403 = vmatpush2.msra.mxu0 0.0
        %2404 = vmatprep.subr.mxu0 0.0
        %2405 = vmatpush2.msra.mxu0 0.0
        %2406 = vmatprep.subr.mxu0 0.0
        %2407 = vmatpush2.msra.mxu0 0.0
        %2408 = vmatprep.subr.mxu0 0.0
        %2409 = vmatpush2.msra.mxu0 0.0
        %2410 = vmatprep.mubr.f32.mxu0 0.0
        %2411 = vmatmul.mubr.f32.gmra.mxu0 %v2335
        %v2412 = vpop.f32.mrf.mxu0
        %v2413 = vadd.f32 %v2332, %v2412
        %v2414 = vpop.f32.mrf.mxu0
        %2415 = vmatprep.mubr.f32.mxu0 0.0
        %2416 = vmatmul.mubr.f32.gmra.mxu0 %v2338
        %v2417 = vpop.f32.mrf.mxu0
        %v2418 = vadd.f32 %v2332, %v2417
        %v2419 = vpop.f32.mrf.mxu0
        %2420 = vmatprep.mubr.f32.mxu0 0.0
        %2421 = vmatmul.mubr.f32.gmra.mxu0 %v2341
        %v2422 = vpop.f32.mrf.mxu0
        %v2423 = vadd.f32 %v2332, %v2422
        %v2424 = vpop.f32.mrf.mxu0
        %2425 = vmatprep.mubr.f32.mxu0 0.0
        %2426 = vmatmul.mubr.f32.gmra.mxu0 %v2344
        %v2427 = vpop.f32.mrf.mxu0
        %v2428 = vadd.f32 %v2332, %v2427
        %v2429 = vpop.f32.mrf.mxu0
        %2430 = vdwg.mxu0
        %v2431 = vadd.f32 %v445, %v2413
        %v2432 = vadd.f32 %v446, %v2418
        %v2433 = vadd.f32 %v447, %v2423
        %v2434 = vadd.f32 %v448, %v2428
        %v2435 = vsel %vm449, %v2431, 0.0
        %2436 = vadd.xlane.f32.xlu0 %v2435
        %v2437 = vpop.xlane.xlu0 %2436
        %v2438 = vsel %vm449, %v2432, 0.0
        %2439 = vadd.xlane.f32.xlu0 %v2438
        %v2440 = vpop.xlane.xlu0 %2439
        %v2441 = vsel %vm449, %v2433, 0.0
        %2442 = vadd.xlane.f32.xlu0 %v2441
        %v2443 = vpop.xlane.xlu0 %2442
        %v2444 = vsel %vm449, %v2434, 0.0
        %2445 = vadd.xlane.f32.xlu0 %v2444
        %v2446 = vpop.xlane.xlu0 %2445
        %v2447 = vmul.f32 %v2437, %v462
        %v2448 = vmul.f32 %v2440, %v462
        %v2449 = vmul.f32 %v2443, %v462
        %v2450 = vmul.f32 %v2446, %v462
        %v2451 = vsub.f32 %v2431, %v2447
        %v2452 = vsub.f32 %v2432, %v2448
        %v2453 = vsub.f32 %v2433, %v2449
        %v2454 = vsub.f32 %v2434, %v2450
        %v2455 = vmul.f32 %v2451, %v2451
        %v2456 = vmul.f32 %v2452, %v2452
        %v2457 = vmul.f32 %v2453, %v2453
        %v2458 = vmul.f32 %v2454, %v2454
        %v2459 = vsel %vm449, %v2455, 0.0
        %2460 = vadd.xlane.f32.xlu0 %v2459
        %v2461 = vpop.xlane.xlu0 %2460
        %v2462 = vsel %vm449, %v2456, 0.0
        %2463 = vadd.xlane.f32.xlu0 %v2462
        %v2464 = vpop.xlane.xlu0 %2463
        %v2465 = vsel %vm449, %v2457, 0.0
        %2466 = vadd.xlane.f32.xlu0 %v2465
        %v2467 = vpop.xlane.xlu0 %2466
        %v2468 = vsel %vm449, %v2458, 0.0
        %2469 = vadd.xlane.f32.xlu0 %v2468
        %v2470 = vpop.xlane.xlu0 %2469
        %v2471 = vmul.f32 %v2461, %v462
        %v2472 = vmul.f32 %v2464, %v462
        %v2473 = vmul.f32 %v2467, %v462
        %v2474 = vmul.f32 %v2470, %v462
        %v2475 = vadd.f32 %v2471, 1e-05
        %v2476 = vadd.f32 %v2472, 1e-05
        %v2477 = vadd.f32 %v2473, 1e-05
        %v2478 = vadd.f32 %v2474, 1e-05
        %v2479 = vrsqrt.pop %v2475
        %v2480 = vrsqrt.pop %v2476
        %v2481 = vrsqrt.pop %v2477
        %v2482 = vrsqrt.pop %v2478
        %v2483 = vmul.f32 %v2451, %v2479
        %v2484 = vmul.f32 %v2452, %v2480
        %v2485 = vmul.f32 %v2453, %v2481
        %v2486 = vmul.f32 %v2454, %v2482
        %v2487 = vld [vmem:[%s7] sm:$0x1]
        %v2489 = vlaneseq
        %v2490 = vshrl.u32 %v2489, 7
        %v2491 = vsub.s32 0, %v2490
        %v2492 = vrot.slane %v2487, %v2491
        %v2494 = vmul.f32 %v2483, %v2492
        %v2495 = vmul.f32 %v2484, %v2492
        %v2496 = vmul.f32 %v2485, %v2492
        %v2497 = vmul.f32 %v2486, %v2492
        %v2498 = vld [vmem:[%s8] sm:$0x1]
        %v2500 = vlaneseq
        %v2501 = vshrl.u32 %v2500, 7
        %v2502 = vsub.s32 0, %v2501
        %v2503 = vrot.slane %v2498, %v2502
        %v2505 = vadd.f32 %v2494, %v2503
        %v2506 = vadd.f32 %v2495, %v2503
        %v2507 = vadd.f32 %v2496, %v2503
        %v2508 = vadd.f32 %v2497, %v2503
        %v2509 = vld [vmem:[%s9] sm:$0xff]
        %v2510 = vld [vmem:[%s9 + $0x8] sm:$0xff]
        %v2511 = vld [vmem:[%s9 + $0x10] sm:$0xff]
        %v2512 = vld [vmem:[%s9 + $0x18] sm:$0xff]
        %v2513 = vld [vmem:[%s10] sm:$0x1]
        %v2515 = vlaneseq
        %v2516 = vshrl.u32 %v2515, 7
        %v2517 = vsub.s32 0, %v2516
        %v2518 = vrot.slane %v2513, %v2517
        %v2521 = vsel %vm449, %v2505, 0
        %v2524 = vsel %vm449, %v2506, 0
        %v2527 = vsel %vm449, %v2507, 0
        %v2530 = vsel %vm449, %v2508, 0
        %2532 = vmatprep.subr.mxu0 0.0
        %2533 = vmatpush1.msra.mxu0 0.0
        %2534 = vmatprep.subr.mxu0 0.0
        %2535 = vmatpush1.msra.mxu0 0.0
        %2536 = vmatprep.subr.mxu0 0.0
        %2537 = vmatpush1.msra.mxu0 0.0
        %2538 = vmatprep.subr.mxu0 0.0
        %2539 = vmatpush1.msra.mxu0 0.0
        %2540 = vmatprep.subr.mxu0 0.0
        %2541 = vmatpush1.msra.mxu0 0.0
        %2542 = vmatprep.subr.mxu0 0.0
        %2543 = vmatpush1.msra.mxu0 0.0
        %2544 = vmatprep.subr.mxu0 0.0
        %2545 = vmatpush1.msra.mxu0 0.0
        %2546 = vmatprep.subr.mxu0 0.0
        %2547 = vmatpush1.msra.mxu0 0.0
        %2548 = vmatprep.subr.mxu0 0.0
        %2549 = vmatpush1.msra.mxu0 0.0
        %2550 = vmatprep.subr.mxu0 0.0
        %2551 = vmatpush1.msra.mxu0 0.0
        %2552 = vmatprep.subr.mxu0 0.0
        %2553 = vmatpush1.msra.mxu0 0.0
        %2554 = vmatprep.subr.mxu0 0.0
        %2555 = vmatpush1.msra.mxu0 0.0
        %2556 = vmatprep.subr.mxu0 0.0
        %2557 = vmatpush1.msra.mxu0 %v2512
        %2558 = vmatprep.subr.mxu0 0.0
        %2559 = vmatpush1.msra.mxu0 %v2511
        %2560 = vmatprep.subr.mxu0 0.0
        %2561 = vmatpush1.msra.mxu0 %v2510
        %2562 = vmatprep.subr.mxu0 0.0
        %2563 = vmatpush1.msra.mxu0 %v2509
        %2564 = vmatprep.subr.mxu0 0.0
        %2565 = vmatpush2.msra.mxu0 0.0
        %2566 = vmatprep.subr.mxu0 0.0
        %2567 = vmatpush2.msra.mxu0 0.0
        %2568 = vmatprep.subr.mxu0 0.0
        %2569 = vmatpush2.msra.mxu0 0.0
        %2570 = vmatprep.subr.mxu0 0.0
        %2571 = vmatpush2.msra.mxu0 0.0
        %2572 = vmatprep.subr.mxu0 0.0
        %2573 = vmatpush2.msra.mxu0 0.0
        %2574 = vmatprep.subr.mxu0 0.0
        %2575 = vmatpush2.msra.mxu0 0.0
        %2576 = vmatprep.subr.mxu0 0.0
        %2577 = vmatpush2.msra.mxu0 0.0
        %2578 = vmatprep.subr.mxu0 0.0
        %2579 = vmatpush2.msra.mxu0 0.0
        %2580 = vmatprep.subr.mxu0 0.0
        %2581 = vmatpush2.msra.mxu0 0.0
        %2582 = vmatprep.subr.mxu0 0.0
        %2583 = vmatpush2.msra.mxu0 0.0
        %2584 = vmatprep.subr.mxu0 0.0
        %2585 = vmatpush2.msra.mxu0 0.0
        %2586 = vmatprep.subr.mxu0 0.0
        %2587 = vmatpush2.msra.mxu0 0.0
        %2588 = vmatprep.subr.mxu0 0.0
        %2589 = vmatpush2.msra.mxu0 0.0
        %2590 = vmatprep.subr.mxu0 0.0
        %2591 = vmatpush2.msra.mxu0 0.0
        %2592 = vmatprep.subr.mxu0 0.0
        %2593 = vmatpush2.msra.mxu0 0.0
        %2594 = vmatprep.subr.mxu0 0.0
        %2595 = vmatpush2.msra.mxu0 0.0
        %2596 = vmatprep.mubr.f32.mxu0 0.0
        %2597 = vmatmul.mubr.f32.gmra.mxu0 %v2521
        %v2598 = vpop.f32.mrf.mxu0
        %v2599 = vadd.f32 %v2518, %v2598
        %v2600 = vpop.f32.mrf.mxu0
        %2601 = vmatprep.mubr.f32.mxu0 0.0
        %2602 = vmatmul.mubr.f32.gmra.mxu0 %v2524
        %v2603 = vpop.f32.mrf.mxu0
        %v2604 = vadd.f32 %v2518, %v2603
        %v2605 = vpop.f32.mrf.mxu0
        %2606 = vmatprep.mubr.f32.mxu0 0.0
        %2607 = vmatmul.mubr.f32.gmra.mxu0 %v2527
        %v2608 = vpop.f32.mrf.mxu0
        %v2609 = vadd.f32 %v2518, %v2608
        %v2610 = vpop.f32.mrf.mxu0
        %2611 = vmatprep.mubr.f32.mxu0 0.0
        %2612 = vmatmul.mubr.f32.gmra.mxu0 %v2530
        %v2613 = vpop.f32.mrf.mxu0
        %v2614 = vadd.f32 %v2518, %v2613
        %v2615 = vpop.f32.mrf.mxu0
        %2616 = vdwg.mxu0
        %v2617 = vmul.f32 %v2599, -1.702
        %v2618 = vmul.f32 %v2604, -1.702
        %v2619 = vmul.f32 %v2609, -1.702
        %v2620 = vmul.f32 %v2614, -1.702
        %v2621 = vmul.f32 %v2617, 1.442695
        %v2622 = vpow.pop %v2621
        %v2623 = vmul.f32 %v2618, 1.442695
        %v2624 = vpow.pop %v2623
        %v2625 = vmul.f32 %v2619, 1.442695
        %v2626 = vpow.pop %v2625
        %v2627 = vmul.f32 %v2620, 1.442695
        %v2628 = vpow.pop %v2627
        %v2629 = vadd.f32 %v2622, 1.0
        %v2630 = vadd.f32 %v2624, 1.0
        %v2631 = vadd.f32 %v2626, 1.0
        %v2632 = vadd.f32 %v2628, 1.0
        %v2633 = vrcp.pop %v2629
        %v2634 = vrcp.pop %v2630
        %v2635 = vrcp.pop %v2631
        %v2636 = vrcp.pop %v2632
        %v2637 = vmul.f32 %v2599, %v2633
        %v2638 = vmul.f32 %v2604, %v2634
        %v2639 = vmul.f32 %v2609, %v2635
        %v2640 = vmul.f32 %v2614, %v2636
        %v2641 = vld [vmem:[%s11] sm:$0xff]
        %v2642 = vld [vmem:[%s11 + $0x8] sm:$0xff]
        %v2643 = vld [vmem:[%s11 + $0x10] sm:$0xff]
        %v2644 = vld [vmem:[%s11 + $0x18] sm:$0xff]
        %v2645 = vld [vmem:[%s11 + $0x20] sm:$0xff]
        %v2646 = vld [vmem:[%s11 + $0x28] sm:$0xff]
        %v2647 = vld [vmem:[%s11 + $0x30] sm:$0xff]
        %v2648 = vld [vmem:[%s11 + $0x38] sm:$0xff]
        %v2649 = vld [vmem:[%s11 + $0x40] sm:$0xff]
        %v2650 = vld [vmem:[%s11 + $0x48] sm:$0xff]
        %v2651 = vld [vmem:[%s11 + $0x50] sm:$0xff]
        %v2652 = vld [vmem:[%s11 + $0x58] sm:$0xff]
        %v2653 = vld [vmem:[%s11 + $0x60] sm:$0xff]
        %v2654 = vld [vmem:[%s11 + $0x68] sm:$0xff]
        %v2655 = vld [vmem:[%s11 + $0x70] sm:$0xff]
        %v2656 = vld [vmem:[%s11 + $0x78] sm:$0xff]
        %v2657 = vld [vmem:[%s12] sm:$0x1]
        %v2659 = vlaneseq
        %v2660 = vshrl.u32 %v2659, 7
        %v2661 = vsub.s32 0, %v2660
        %v2662 = vrot.slane %v2657, %v2661
        %2664 = vmatprep.subr.mxu0 0.0
        %2665 = vmatpush1.msra.mxu0 %v2656
        %2666 = vmatprep.subr.mxu0 0.0
        %2667 = vmatpush1.msra.mxu0 %v2655
        %2668 = vmatprep.subr.mxu0 0.0
        %2669 = vmatpush1.msra.mxu0 %v2654
        %2670 = vmatprep.subr.mxu0 0.0
        %2671 = vmatpush1.msra.mxu0 %v2653
        %2672 = vmatprep.subr.mxu0 0.0
        %2673 = vmatpush1.msra.mxu0 %v2652
        %2674 = vmatprep.subr.mxu0 0.0
        %2675 = vmatpush1.msra.mxu0 %v2651
        %2676 = vmatprep.subr.mxu0 0.0
        %2677 = vmatpush1.msra.mxu0 %v2650
        %2678 = vmatprep.subr.mxu0 0.0
        %2679 = vmatpush1.msra.mxu0 %v2649
        %2680 = vmatprep.subr.mxu0 0.0
        %2681 = vmatpush1.msra.mxu0 %v2648
        %2682 = vmatprep.subr.mxu0 0.0
        %2683 = vmatpush1.msra.mxu0 %v2647
        %2684 = vmatprep.subr.mxu0 0.0
        %2685 = vmatpush1.msra.mxu0 %v2646
        %2686 = vmatprep.subr.mxu0 0.0
        %2687 = vmatpush1.msra.mxu0 %v2645
        %2688 = vmatprep.subr.mxu0 0.0
        %2689 = vmatpush1.msra.mxu0 %v2644
        %2690 = vmatprep.subr.mxu0 0.0
        %2691 = vmatpush1.msra.mxu0 %v2643
        %2692 = vmatprep.subr.mxu0 0.0
        %2693 = vmatpush1.msra.mxu0 %v2642
        %2694 = vmatprep.subr.mxu0 0.0
        %2695 = vmatpush1.msra.mxu0 %v2641
        %2696 = vmatprep.subr.mxu0 0.0
        %2697 = vmatpush2.msra.mxu0 0.0
        %2698 = vmatprep.subr.mxu0 0.0
        %2699 = vmatpush2.msra.mxu0 0.0
        %2700 = vmatprep.subr.mxu0 0.0
        %2701 = vmatpush2.msra.mxu0 0.0
        %2702 = vmatprep.subr.mxu0 0.0
        %2703 = vmatpush2.msra.mxu0 0.0
        %2704 = vmatprep.subr.mxu0 0.0
        %2705 = vmatpush2.msra.mxu0 0.0
        %2706 = vmatprep.subr.mxu0 0.0
        %2707 = vmatpush2.msra.mxu0 0.0
        %2708 = vmatprep.subr.mxu0 0.0
        %2709 = vmatpush2.msra.mxu0 0.0
        %2710 = vmatprep.subr.mxu0 0.0
        %2711 = vmatpush2.msra.mxu0 0.0
        %2712 = vmatprep.subr.mxu0 0.0
        %2713 = vmatpush2.msra.mxu0 0.0
        %2714 = vmatprep.subr.mxu0 0.0
        %2715 = vmatpush2.msra.mxu0 0.0
        %2716 = vmatprep.subr.mxu0 0.0
        %2717 = vmatpush2.msra.mxu0 0.0
        %2718 = vmatprep.subr.mxu0 0.0
        %2719 = vmatpush2.msra.mxu0 0.0
        %2720 = vmatprep.subr.mxu0 0.0
        %2721 = vmatpush2.msra.mxu0 0.0
        %2722 = vmatprep.subr.mxu0 0.0
        %2723 = vmatpush2.msra.mxu0 0.0
        %2724 = vmatprep.subr.mxu0 0.0
        %2725 = vmatpush2.msra.mxu0 0.0
        %2726 = vmatprep.subr.mxu0 0.0
        %2727 = vmatpush2.msra.mxu0 0.0
        %2728 = vmatprep.mubr.f32.mxu0 0.0
        %2729 = vmatmul.mubr.f32.gmra.mxu0 %v2637
        %v2730 = vpop.f32.mrf.mxu0
        %v2731 = vadd.f32 %v2662, %v2730
        %v2732 = vpop.f32.mrf.mxu0
        %2733 = vmatprep.mubr.f32.mxu0 0.0
        %2734 = vmatmul.mubr.f32.gmra.mxu0 %v2638
        %v2735 = vpop.f32.mrf.mxu0
        %v2736 = vadd.f32 %v2662, %v2735
        %v2737 = vpop.f32.mrf.mxu0
        %2738 = vmatprep.mubr.f32.mxu0 0.0
        %2739 = vmatmul.mubr.f32.gmra.mxu0 %v2639
        %v2740 = vpop.f32.mrf.mxu0
        %v2741 = vadd.f32 %v2662, %v2740
        %v2742 = vpop.f32.mrf.mxu0
        %2743 = vmatprep.mubr.f32.mxu0 0.0
        %2744 = vmatmul.mubr.f32.gmra.mxu0 %v2640
        %v2745 = vpop.f32.mrf.mxu0
        %v2746 = vadd.f32 %v2662, %v2745
        %v2747 = vpop.f32.mrf.mxu0
        %2748 = vdwg.mxu0
        %v2749 = vadd.f32 %v2431, %v2731
        %v2750 = vadd.f32 %v2432, %v2736
        %v2751 = vadd.f32 %v2433, %v2741
        %v2752 = vadd.f32 %v2434, %v2746
        %2753 = vst.msk [vmem:[%s436] sm:$0xff] %vm449, %v2749
        %2754 = vst.msk [vmem:[%s436 + $0x8] sm:$0xff] %vm449, %v2750
        %2755 = vst.msk [vmem:[%s436 + $0x10] sm:$0xff] %vm449, %v2751
        %2756 = vst.msk [vmem:[%s436 + $0x18] sm:$0xff] %vm449, %v2752
        %s2757 = sand.u32 %s313, 1
        %s2758 = scalar_lea.sflag [#allocation4], %s2757
        %s2759 = sand.u32 %s313, 1
        %s2760 = smul.addr %s2759, 32
        %s2761 = scalar_lea.vmem [#allocation3], %s2760
        // Predicated region
        $region73: #{tpu_custom_call.1} parent=71 // pred_check
          %p2762 = pneg %p323
        $region74: #{tpu_custom_call.1} parent=71 // pred_check_branch
          %2764 = sbr.rel (%p2762) target = $region76
        $region75: #{tpu_custom_call.1} parent=71 // pred_region
          %s2765 = smul.u32 2, %s27
          %s2767 = ssub.s32 512, 512
          %2768 = vsyncadd %s2758, %s2767
          %s2769 = smul.addr %s2765, 2
          %s2770 = smul.addr %s2769, 128
          %s2771 = scalar_lea.hbm %s13, %s2770
          %s2772 = sshll.u32 %s2761, 4
          %s2773 = int_to_ptr.vmem [resolvable:$true] %s2772
          %2778 = dma.vmem_to_hbm [thread:$0]  %s2773, 512, %s2771, %s2758, 128, 128, 8
        $region76: #{tpu_custom_call.1} parent=71 // pred_fallthru
          _
      $region72: #{tpu_custom_call.1} parent=5 // pred_fallthru
        _
      %p2779 = scmp.le.s32.totalorder 2, %s22
      // Predicated region
      $region77: #{tpu_custom_call.1} parent=5 // pred_check
        %p2780 = pneg %p2779
      $region78: #{tpu_custom_call.1} parent=5 // pred_check_branch
        %2782 = sbr.rel (%p2780) target = $region80
      $region79: #{tpu_custom_call.1} parent=5 // pred_region
        %s2783 = ssub.s32 %s22, 2
        // Predicated region
        $region81: #{tpu_custom_call.1} parent=79 // pred_check
          %p2784 = pneg %p329
        $region82: #{tpu_custom_call.1} parent=79 // pred_check_branch
          %2786 = sbr.rel (%p2784) target = $region84
        $region83: #{tpu_custom_call.1} parent=79 // pred_region
          %s2787 = sand.u32 %s314, 1
          %s2788 = scalar_lea.sflag [#allocation4], %s2787
          %s2789 = sand.u32 %s314, 1
          %s2790 = smul.addr %s2789, 32
          %s2791 = scalar_lea.vmem [#allocation3], %s2790
          %2792 = dma.done %s2788, 512
        $region84: #{tpu_custom_call.1} parent=79 // pred_fallthru
          _
      $region80: #{tpu_custom_call.1} parent=5 // pred_fallthru
        _
    $region6: #{tpu_custom_call.1} parent=1 // loop_footer
      %s26 = sadd.s32 1, %s22
    $region7: #{tpu_custom_call.1} parent=1 // loop_footer_branch
      %21 = sbr.rel target = $region3
    $region8: #{tpu_custom_call.1} parent=1 // loop_exit
      _
    %2793 = vsyncpa [#allocation4], 1
    %s2794 = scalar_lea.sflag [#allocation4], 1
    %2795 = vsyncpa %s2794, 1

</llo_original>
